<compile_context>
chip_gen: v7x
topology: tpu7x:2x2x1
jax: 0.10.0
libtpu: 0.0.40
codegen_flags: <defaults>
</compile_context>

<pallas_src>
import functools

import jax
import jax.numpy as jnp
import numpy as np
from jax.experimental import pallas as pl
from jax.experimental.pallas import tpu as pltpu


# ----------------------------------------------------------------------------
# Deterministic parameter construction (matches torchaudio defaults).
# ----------------------------------------------------------------------------
def _hann_window(n_fft):
    n = np.arange(n_fft, dtype=np.float64)
    return 0.5 - 0.5 * np.cos(2.0 * np.pi * n / n_fft)          # periodic Hann


def _windowed_dft_matrix(n_fft, n_half):
    """[win*cos | win*sin] real-DFT matrix over bins 0..n_half-1, (n_fft, 2*n_half)."""
    win = _hann_window(n_fft)                                    # (n_fft,)
    k = np.arange(n_fft, dtype=np.float64)[:, None]              # time index
    f = np.arange(n_half, dtype=np.float64)[None, :]             # freq bin
    ang = 2.0 * np.pi * k * f / n_fft
    cos = np.cos(ang)
    sin = -np.sin(ang)                                           # sign irrelevant for |X|^2
    wcs = np.concatenate([cos, sin], axis=1) * win[:, None]      # window folded in
    return wcs.astype(np.float32)


def _mel_filterbank_full(n_fft, n_mels, sample_rate):
    """HTK mel filterbank, norm=None (torchaudio.functional.melscale_fbanks), (n_freqs, n_mels)."""
    n_freqs = n_fft // 2 + 1
    f_min, f_max = 0.0, sample_rate / 2.0
    all_freqs = np.linspace(0.0, sample_rate / 2.0, n_freqs)

    def hz_to_mel(hz):
        return 2595.0 * np.log10(1.0 + hz / 700.0)

    def mel_to_hz(mel):
        return 700.0 * (10.0 ** (mel / 2595.0) - 1.0)

    m_pts = np.linspace(hz_to_mel(f_min), hz_to_mel(f_max), n_mels + 2)
    f_pts = mel_to_hz(m_pts)
    f_diff = f_pts[1:] - f_pts[:-1]                              # (n_mels+1,)
    slopes = f_pts[None, :] - all_freqs[:, None]                 # (n_freqs, n_mels+2)
    down = -slopes[:, :-2] / f_diff[:-1]
    up = slopes[:, 2:] / f_diff[1:]
    fb = np.maximum(0.0, np.minimum(down, up))
    return fb.astype(np.float32)                                 # (n_freqs, n_mels)


# ----------------------------------------------------------------------------
# Pallas kernel: one MXU matmul (windowed real DFT, bf16 operands / f32 acc)
# -> power spectrum (VPU, f32) -> mel matmul (MXU, f32) -> log(x + eps) (EUP).
# ----------------------------------------------------------------------------
def _mel_kernel(frames_ref, wcs_ref, fb_ref, out_ref, *, eps, n_half):
    y = jnp.dot(frames_ref[...], wcs_ref[...],
                preferred_element_type=jnp.float32)              # (tile_m, 2*n_half)
    re = y[:, :n_half]                                           # clean 128-lane split
    im = y[:, n_half:]
    power = re * re + im * im                                    # (tile_m, n_half) f32
    mel = jnp.dot(power, fb_ref[...],
                  preferred_element_type=jnp.float32)            # (tile_m, n_mels)
    out_ref[...] = jnp.log(mel + eps)


def spectrogram_encoder(wav, *, n_fft=1024, n_mels=128, eps=1e-8,
                        sample_rate=16000):
    """wav: (B, T) float32  ->  (B, n_mels, n_frames) float32 (log-mel)."""
    wav = wav.astype(jnp.float32)
    B, T = wav.shape
    hop = n_fft // 2
    n_frames = T // hop + 1
    n_half = n_fft // 2          # 512 kept bins; Nyquist row of fb is zero-weight

    # ---- glue: center reflect-pad + gather-free framing (hop == n_fft/2) ----
    padded = jnp.pad(wav, ((0, 0), (hop, hop)), mode="reflect")  # (B, T + n_fft)
    pad_tail = (-padded.shape[1]) % hop
    if pad_tail:
        padded = jnp.pad(padded, ((0, 0), (0, pad_tail)))
    halves = padded.reshape(B, -1, hop)                          # (B, n_halves, hop)
    frames = jnp.concatenate(
        [halves[:, :n_frames], halves[:, 1:n_frames + 1]], axis=2)  # (B, n_frames, n_fft)

    # ---- collapse (B, n_frames) into MXU-sized M tiles ----
    M = B * n_frames
    tile_m = 256 if M > 128 else 128
    m_pad = pl.cdiv(M, tile_m) * tile_m
    frames_flat = frames.reshape(M, n_fft)
    if m_pad > M:
        frames_flat = jnp.pad(frames_flat, ((0, m_pad - M), (0, 0)))
    frames_flat = frames_flat.astype(jnp.bfloat16)               # bf16 MXU operands

    # ---- parameters (deterministic, synthetic) ----
    wcs = jnp.asarray(_windowed_dft_matrix(n_fft, n_half), dtype=jnp.bfloat16)
    fb = jnp.asarray(_mel_filterbank_full(n_fft, n_mels, sample_rate)[:n_half])

    kernel = functools.partial(_mel_kernel, eps=eps, n_half=n_half)

    out = pl.pallas_call(
        kernel,
        out_shape=jax.ShapeDtypeStruct((m_pad, n_mels), jnp.float32),
        grid_spec=pltpu.PrefetchScalarGridSpec(
            num_scalar_prefetch=0,
            grid=(m_pad // tile_m,),
            in_specs=[
                pl.BlockSpec((tile_m, n_fft), lambda i: (i, 0)),
                pl.BlockSpec((n_fft, 2 * n_half), lambda i: (0, 0)),
                pl.BlockSpec((n_half, n_mels), lambda i: (0, 0)),
            ],
            out_specs=pl.BlockSpec((tile_m, n_mels), lambda i: (i, 0)),
        ),
        compiler_params=pltpu.CompilerParams(
            dimension_semantics=("parallel",)),
    )(frames_flat, wcs, fb)

    # strip M padding and match torch convention: (B, n_mels, n_frames)
    out = out[:M].reshape(B, n_frames, n_mels)
    return jnp.transpose(out, (0, 2, 1))


# ----------------------------------------------------------------------------
# Pure-JAX f32 reference (rfft-based, full 513 bins) for a sanity check.
# ----------------------------------------------------------------------------
def _reference(wav, *, n_fft=1024, n_mels=128, eps=1e-8, sample_rate=16000):
    wav = wav.astype(jnp.float32)
    hop = n_fft // 2
    B, T = wav.shape
    n_frames = T // hop + 1
    padded = jnp.pad(wav, ((0, 0), (hop, hop)), mode="reflect")
    idx = jnp.arange(n_frames)[:, None] * hop + jnp.arange(n_fft)[None, :]
    win = jnp.asarray(_hann_window(n_fft).astype(np.float32))
    frames = padded[:, idx] * win[None, None, :]
    spec = jnp.abs(jnp.fft.rfft(frames, axis=-1)) ** 2           # (B, n_frames, 513)
    fb = jnp.asarray(_mel_filterbank_full(n_fft, n_mels, sample_rate))
    mel = jnp.einsum("bfk,km->bfm", spec, fb)
    return jnp.transpose(jnp.log(mel + eps), (0, 2, 1))


if __name__ == "__main__":
    key = jax.random.PRNGKey(0)
    B, T = 2, 4096                       # small: n_frames = 4096//512 + 1 = 9
    wav = jax.random.normal(key, (B, T), dtype=jnp.float32)

    out = jax.block_until_ready(spectrogram_encoder(wav))
    ref = jax.block_until_ready(_reference(wav))

    assert out.shape == (B, 128, T // 512 + 1), out.shape
    # bf16 matmul operands with f32 accumulation -> loosened tolerance vs f32 ref.
    np.testing.assert_allclose(np.asarray(out), np.asarray(ref),
                               rtol=5e-2, atol=5e-2)
    print("KERNEL_OK")
</pallas_src>

<mosaic_0001>
module attributes {stable_mosaic.version = 11 : i64} {
  func.func @_mel_kernel(%arg0: i32, %arg1: memref<128x1024xbf16, #tpu.memory_space<vmem>>, %arg2: memref<1024x1024xbf16, #tpu.memory_space<vmem>>, %arg3: memref<512x128xf32, #tpu.memory_space<vmem>>, %arg4: memref<128x128xf32, #tpu.memory_space<vmem>>) attributes {dimension_semantics = [#tpu.dimension_semantics<parallel>], iteration_bounds = array<i64: 1>, scalar_prefetch = 0 : i64, scratch_operands = 0 : i64, tpu.core_type = #tpu.core_type<tc>, window_params = [{transform_indices = @transform_0, window_bounds = array<i64: 128, 1024>}, {pipeline_mode = #tpu.pipeline_mode<synchronous>, transform_indices = @transform_1, window_bounds = array<i64: 1024, 1024>}, {pipeline_mode = #tpu.pipeline_mode<synchronous>, transform_indices = @transform_2, window_bounds = array<i64: 512, 128>}, {transform_indices = @transform_3, window_bounds = array<i64: 128, 128>}]} {
    %c0 = arith.constant 0 : index
    %c0_0 = arith.constant 0 : index
    %0 = vector.load %arg1[%c0, %c0_0] : memref<128x1024xbf16, #tpu.memory_space<vmem>>, vector<128x1024xbf16>
    %c0_1 = arith.constant 0 : index
    %c0_2 = arith.constant 0 : index
    %1 = vector.load %arg2[%c0_1, %c0_2] : memref<1024x1024xbf16, #tpu.memory_space<vmem>>, vector<1024x1024xbf16>
    %cst = arith.constant dense<0.000000e+00> : vector<128x1024xf32>
    %2 = tpu.matmul %0, %1, %cst {dimension_numbers = #tpu.dot_dimension_numbers<[1], [0], [0], [1], [0, 0, 1, 1], [], []>} : vector<128x1024xbf16>, vector<1024x1024xbf16>, vector<128x1024xf32> -> vector<128x1024xf32>
    %3 = vector.extract_strided_slice %2 {offsets = [0, 0], sizes = [128, 512], strides = [1, 1]} : vector<128x1024xf32> to vector<128x512xf32>
    %4 = vector.extract_strided_slice %2 {offsets = [0, 512], sizes = [128, 512], strides = [1, 1]} : vector<128x1024xf32> to vector<128x512xf32>
    %5 = arith.mulf %3, %3 : vector<128x512xf32>
    %6 = arith.mulf %4, %4 : vector<128x512xf32>
    %7 = arith.addf %5, %6 : vector<128x512xf32>
    %c0_3 = arith.constant 0 : index
    %c0_4 = arith.constant 0 : index
    %8 = vector.load %arg3[%c0_3, %c0_4] : memref<512x128xf32, #tpu.memory_space<vmem>>, vector<512x128xf32>
    %cst_5 = arith.constant dense<0.000000e+00> : vector<128x128xf32>
    %9 = tpu.matmul %7, %8, %cst_5 {dimension_numbers = #tpu.dot_dimension_numbers<[1], [0], [0], [1], [0, 0, 1, 1], [], []>} : vector<128x512xf32>, vector<512x128xf32>, vector<128x128xf32> -> vector<128x128xf32>
    %cst_6 = arith.constant 9.99999993E-9 : f32
    %10 = vector.broadcast %cst_6 : f32 to vector<128x128xf32>
    %11 = arith.addf %9, %10 : vector<128x128xf32>
    %12 = math.log %11 : vector<128x128xf32>
    %c0_7 = arith.constant 0 : index
    %c0_8 = arith.constant 0 : index
    %13 = vector.load %arg4[%c0_7, %c0_8] : memref<128x128xf32, #tpu.memory_space<vmem>>, vector<128x128xf32>
    tpu.vector_store %arg4[%c0_7, %c0_8], %12 {strides = array<i32>} : memref<128x128xf32, #tpu.memory_space<vmem>>, vector<128x128xf32>,
    return
  }
  func.func @transform_0(%arg0: i32) -> (i32, i32) {
    %c0_i32 = arith.constant 0 : i32
    %c0_i32_0 = arith.constant 0 : i32
    return %arg0, %c0_i32 : i32, i32
  }
  func.func @transform_1(%arg0: i32) -> (i32, i32) {
    %c0_i32 = arith.constant 0 : i32
    %c0_i32_0 = arith.constant 0 : i32
    %c0_i32_1 = arith.constant 0 : i32
    return %c0_i32, %c0_i32_0 : i32, i32
  }
  func.func @transform_2(%arg0: i32) -> (i32, i32) {
    %c0_i32 = arith.constant 0 : i32
    %c0_i32_0 = arith.constant 0 : i32
    %c0_i32_1 = arith.constant 0 : i32
    return %c0_i32, %c0_i32_0 : i32, i32
  }
  func.func @transform_3(%arg0: i32) -> (i32, i32) {
    %c0_i32 = arith.constant 0 : i32
    %c0_i32_0 = arith.constant 0 : i32
    return %arg0, %c0_i32 : i32, i32
  }
}

</mosaic_0001>

<llo_original>
// kernel: tpu_custom_call.1
$region0: #{tpu_custom_call.1}
  #allocation0 [shape = 'u32[]', space=smem, size = 0x4, offset = 0x4, fixed_abs, tag = 'smem constant byte address 0x4 - core index']
  #allocation1 [shape = 'u32[144,128]{1,0:T(1,128)}', space=vmem, size = 0x12000, scoped, tag = 'internal scratch']
  %s0 = inlined_call_operand.hbm [shape: bf16[128,1024], index: 0, kind: input, shape index: {}]
  %s1 = inlined_call_operand.hbm [shape: bf16[1024,1024], index: 1, kind: input, shape index: {}]
  %s2 = inlined_call_operand.hbm [shape: f32[512,128], index: 2, kind: input, shape index: {}]
  %s3 = inlined_call_operand.hbm [shape: f32[128,128], index: 3, kind: output, shape index: {}]
  %s4 = sld [smem:[#allocation0]]
  $region34: #{tpu_custom_call.1} parent=0
    _
  %s6 = ssub.s32 1, %s4
  %s7 = scalar_select 0, %s6, %s4
  $region1: #{tpu_custom_call.1} parent=0
    #allocation2 [shape = 'u8[262144]{0}', space=vmem, size = 0x40000, scoped, tag = 'input window, operand 0, single buffered']
    #allocation3 [shape = 's32[1]{0}', space=sflag, size = 0x4, scoped, tag = 'scoped memory for tpu_custom_call.1']
    #allocation4 [shape = 's32[1]{0}', space=sflag, size = 0x4, scoped, tag = 'scoped memory for tpu_custom_call.1']
    #allocation5 [shape = 'u8[2097152]{0}', space=vmem, size = 0x200000, scoped, tag = 'input window, operand 1, single buffered']
    #allocation6 [shape = 's32[1]{0}', space=sflag, size = 0x4, scoped, tag = 'scoped memory for tpu_custom_call.1']
    #allocation7 [shape = 'u8[262144]{0}', space=vmem, size = 0x40000, scoped, tag = 'input window, operand 2, single buffered']
    #allocation8 [shape = 'u8[65536]{0}', space=vmem, size = 0x10000, scoped, tag = 'output window, operand 0, single buffered']
    %8 = vsyncpa [#allocation3], 0
    %9 = vsyncpa [#allocation6], 0
    %10 = vsyncpa [#allocation4], 0
    // Predicated region
    $region2: #{tpu_custom_call.1} parent=1 // pred_check
      _
    $region3: #{tpu_custom_call.1} parent=1 // pred_check_branch
      %12 = sbr.rel (0) target = $region5
    $region4: #{tpu_custom_call.1} parent=1 // pred_region
      %s14 = ssub.s32 8192, 8192
      %15 = vsyncadd [#allocation3], %s14
      %s16 = sshll.u32 [#allocation2], 4
      %s17 = int_to_ptr.vmem [resolvable:$true] %s16
      %22 = dma.hbm_to_vmem [thread:$0]  %s0, 8192, %s17, [#allocation3], 512, 512, 32
    $region5: #{tpu_custom_call.1} parent=1 // pred_fallthru
      _
    // Predicated region
    $region6: #{tpu_custom_call.1} parent=1 // pred_check
      _
    $region7: #{tpu_custom_call.1} parent=1 // pred_check_branch
      %24 = sbr.rel (0) target = $region9
    $region8: #{tpu_custom_call.1} parent=1 // pred_region
      %s26 = ssub.s32 65536, 65536
      %27 = vsyncadd [#allocation6], %s26
      %s28 = sshll.u32 [#allocation5], 4
      %s29 = int_to_ptr.vmem [resolvable:$true] %s28
      %34 = dma.hbm_to_vmem [thread:$0]  %s1, 65536, %s29, [#allocation6], 512, 512, 32
    $region9: #{tpu_custom_call.1} parent=1 // pred_fallthru
      _
    // Predicated region
    $region10: #{tpu_custom_call.1} parent=1 // pred_check
      _
    $region11: #{tpu_custom_call.1} parent=1 // pred_check_branch
      %36 = sbr.rel (0) target = $region13
    $region12: #{tpu_custom_call.1} parent=1 // pred_region
      %s38 = ssub.s32 8192, 8192
      %39 = vsyncadd [#allocation6], %s38
      %s40 = sshll.u32 [#allocation7], 4
      %s41 = int_to_ptr.vmem [resolvable:$true] %s40
      %46 = dma.hbm_to_vmem [thread:$0]  %s2, 8192, %s41, [#allocation6], 128, 128, 8
    $region13: #{tpu_custom_call.1} parent=1 // pred_fallthru
      _
    // Predicated region
    $region14: #{tpu_custom_call.1} parent=1 // pred_check
      _
    $region15: #{tpu_custom_call.1} parent=1 // pred_check_branch
      %48 = sbr.rel (0) target = $region17
    $region16: #{tpu_custom_call.1} parent=1 // pred_region
      %49 = dma.done [#allocation3], 8192
    $region17: #{tpu_custom_call.1} parent=1 // pred_fallthru
      _
    // Predicated region
    $region18: #{tpu_custom_call.1} parent=1 // pred_check
      _
    $region19: #{tpu_custom_call.1} parent=1 // pred_check_branch
      %51 = sbr.rel (0) target = $region21
    $region20: #{tpu_custom_call.1} parent=1 // pred_region
      %52 = dma.done [#allocation6], 65536
    $region21: #{tpu_custom_call.1} parent=1 // pred_fallthru
      _
    // Predicated region
    $region22: #{tpu_custom_call.1} parent=1 // pred_check
      _
    $region23: #{tpu_custom_call.1} parent=1 // pred_check_branch
      %54 = sbr.rel (0) target = $region25
    $region24: #{tpu_custom_call.1} parent=1 // pred_region
      %55 = dma.done [#allocation6], 8192
    $region25: #{tpu_custom_call.1} parent=1 // pred_fallthru
      _
    %v56 = vld [vmem:[#allocation2] sm:$0xff]
    %v57 = vld [vmem:[#allocation2 + $0x8] sm:$0xff]
    %v58 = vld [vmem:[#allocation2 + $0x10] sm:$0xff]
    %v59 = vld [vmem:[#allocation2 + $0x18] sm:$0xff]
    %v60 = vld [vmem:[#allocation2 + $0x20] sm:$0xff]
    %v61 = vld [vmem:[#allocation2 + $0x28] sm:$0xff]
    %v62 = vld [vmem:[#allocation2 + $0x30] sm:$0xff]
    %v63 = vld [vmem:[#allocation2 + $0x38] sm:$0xff]
    %v64 = vld [vmem:[#allocation2 + $0x40] sm:$0xff]
    %v65 = vld [vmem:[#allocation2 + $0x48] sm:$0xff]
    %v66 = vld [vmem:[#allocation2 + $0x50] sm:$0xff]
    %v67 = vld [vmem:[#allocation2 + $0x58] sm:$0xff]
    %v68 = vld [vmem:[#allocation2 + $0x60] sm:$0xff]
    %v69 = vld [vmem:[#allocation2 + $0x68] sm:$0xff]
    %v70 = vld [vmem:[#allocation2 + $0x70] sm:$0xff]
    %v71 = vld [vmem:[#allocation2 + $0x78] sm:$0xff]
    %v72 = vld [vmem:[#allocation2 + $0x80] sm:$0xff]
    %v73 = vld [vmem:[#allocation2 + $0x88] sm:$0xff]
    %v74 = vld [vmem:[#allocation2 + $0x90] sm:$0xff]
    %v75 = vld [vmem:[#allocation2 + $0x98] sm:$0xff]
    %v76 = vld [vmem:[#allocation2 + $0xa0] sm:$0xff]
    %v77 = vld [vmem:[#allocation2 + $0xa8] sm:$0xff]
    %v78 = vld [vmem:[#allocation2 + $0xb0] sm:$0xff]
    %v79 = vld [vmem:[#allocation2 + $0xb8] sm:$0xff]
    %v80 = vld [vmem:[#allocation2 + $0xc0] sm:$0xff]
    %v81 = vld [vmem:[#allocation2 + $0xc8] sm:$0xff]
    %v82 = vld [vmem:[#allocation2 + $0xd0] sm:$0xff]
    %v83 = vld [vmem:[#allocation2 + $0xd8] sm:$0xff]
    %v84 = vld [vmem:[#allocation2 + $0xe0] sm:$0xff]
    %v85 = vld [vmem:[#allocation2 + $0xe8] sm:$0xff]
    %v86 = vld [vmem:[#allocation2 + $0xf0] sm:$0xff]
    %v87 = vld [vmem:[#allocation2 + $0xf8] sm:$0xff]
    %v88 = vld [vmem:[#allocation2 + $0x100] sm:$0xff]
    %v89 = vld [vmem:[#allocation2 + $0x108] sm:$0xff]
    %v90 = vld [vmem:[#allocation2 + $0x110] sm:$0xff]
    %v91 = vld [vmem:[#allocation2 + $0x118] sm:$0xff]
    %v92 = vld [vmem:[#allocation2 + $0x120] sm:$0xff]
    %v93 = vld [vmem:[#allocation2 + $0x128] sm:$0xff]
    %v94 = vld [vmem:[#allocation2 + $0x130] sm:$0xff]
    %v95 = vld [vmem:[#allocation2 + $0x138] sm:$0xff]
    %v96 = vld [vmem:[#allocation2 + $0x140] sm:$0xff]
    %v97 = vld [vmem:[#allocation2 + $0x148] sm:$0xff]
    %v98 = vld [vmem:[#allocation2 + $0x150] sm:$0xff]
    %v99 = vld [vmem:[#allocation2 + $0x158] sm:$0xff]
    %v100 = vld [vmem:[#allocation2 + $0x160] sm:$0xff]
    %v101 = vld [vmem:[#allocation2 + $0x168] sm:$0xff]
    %v102 = vld [vmem:[#allocation2 + $0x170] sm:$0xff]
    %v103 = vld [vmem:[#allocation2 + $0x178] sm:$0xff]
    %v104 = vld [vmem:[#allocation2 + $0x180] sm:$0xff]
    %v105 = vld [vmem:[#allocation2 + $0x188] sm:$0xff]
    %v106 = vld [vmem:[#allocation2 + $0x190] sm:$0xff]
    %v107 = vld [vmem:[#allocation2 + $0x198] sm:$0xff]
    %v108 = vld [vmem:[#allocation2 + $0x1a0] sm:$0xff]
    %v109 = vld [vmem:[#allocation2 + $0x1a8] sm:$0xff]
    %v110 = vld [vmem:[#allocation2 + $0x1b0] sm:$0xff]
    %v111 = vld [vmem:[#allocation2 + $0x1b8] sm:$0xff]
    %v112 = vld [vmem:[#allocation2 + $0x1c0] sm:$0xff]
    %v113 = vld [vmem:[#allocation2 + $0x1c8] sm:$0xff]
    %v114 = vld [vmem:[#allocation2 + $0x1d0] sm:$0xff]
    %v115 = vld [vmem:[#allocation2 + $0x1d8] sm:$0xff]
    %v116 = vld [vmem:[#allocation2 + $0x1e0] sm:$0xff]
    %v117 = vld [vmem:[#allocation2 + $0x1e8] sm:$0xff]
    %v118 = vld [vmem:[#allocation2 + $0x1f0] sm:$0xff]
    %v119 = vld [vmem:[#allocation2 + $0x1f8] sm:$0xff]
    %v120 = vld [vmem:[#allocation5] sm:$0xff]
    %v121 = vld [vmem:[#allocation5 + $0x8] sm:$0xff]
    %v122 = vld [vmem:[#allocation5 + $0x10] sm:$0xff]
    %v123 = vld [vmem:[#allocation5 + $0x18] sm:$0xff]
    %v124 = vld [vmem:[#allocation5 + $0x20] sm:$0xff]
    %v125 = vld [vmem:[#allocation5 + $0x28] sm:$0xff]
    %v126 = vld [vmem:[#allocation5 + $0x30] sm:$0xff]
    %v127 = vld [vmem:[#allocation5 + $0x38] sm:$0xff]
    %v128 = vld [vmem:[#allocation5 + $0x40] sm:$0xff]
    %v129 = vld [vmem:[#allocation5 + $0x48] sm:$0xff]
    %v130 = vld [vmem:[#allocation5 + $0x50] sm:$0xff]
    %v131 = vld [vmem:[#allocation5 + $0x58] sm:$0xff]
    %v132 = vld [vmem:[#allocation5 + $0x60] sm:$0xff]
    %v133 = vld [vmem:[#allocation5 + $0x68] sm:$0xff]
    %v134 = vld [vmem:[#allocation5 + $0x70] sm:$0xff]
    %v135 = vld [vmem:[#allocation5 + $0x78] sm:$0xff]
    %v136 = vld [vmem:[#allocation5 + $0x80] sm:$0xff]
    %v137 = vld [vmem:[#allocation5 + $0x88] sm:$0xff]
    %v138 = vld [vmem:[#allocation5 + $0x90] sm:$0xff]
    %v139 = vld [vmem:[#allocation5 + $0x98] sm:$0xff]
    %v140 = vld [vmem:[#allocation5 + $0xa0] sm:$0xff]
    %v141 = vld [vmem:[#allocation5 + $0xa8] sm:$0xff]
    %v142 = vld [vmem:[#allocation5 + $0xb0] sm:$0xff]
    %v143 = vld [vmem:[#allocation5 + $0xb8] sm:$0xff]
    %v144 = vld [vmem:[#allocation5 + $0xc0] sm:$0xff]
    %v145 = vld [vmem:[#allocation5 + $0xc8] sm:$0xff]
    %v146 = vld [vmem:[#allocation5 + $0xd0] sm:$0xff]
    %v147 = vld [vmem:[#allocation5 + $0xd8] sm:$0xff]
    %v148 = vld [vmem:[#allocation5 + $0xe0] sm:$0xff]
    %v149 = vld [vmem:[#allocation5 + $0xe8] sm:$0xff]
    %v150 = vld [vmem:[#allocation5 + $0xf0] sm:$0xff]
    %v151 = vld [vmem:[#allocation5 + $0xf8] sm:$0xff]
    %v152 = vld [vmem:[#allocation5 + $0x100] sm:$0xff]
    %v153 = vld [vmem:[#allocation5 + $0x108] sm:$0xff]
    %v154 = vld [vmem:[#allocation5 + $0x110] sm:$0xff]
    %v155 = vld [vmem:[#allocation5 + $0x118] sm:$0xff]
    %v156 = vld [vmem:[#allocation5 + $0x120] sm:$0xff]
    %v157 = vld [vmem:[#allocation5 + $0x128] sm:$0xff]
    %v158 = vld [vmem:[#allocation5 + $0x130] sm:$0xff]
    %v159 = vld [vmem:[#allocation5 + $0x138] sm:$0xff]
    %v160 = vld [vmem:[#allocation5 + $0x140] sm:$0xff]
    %v161 = vld [vmem:[#allocation5 + $0x148] sm:$0xff]
    %v162 = vld [vmem:[#allocation5 + $0x150] sm:$0xff]
    %v163 = vld [vmem:[#allocation5 + $0x158] sm:$0xff]
    %v164 = vld [vmem:[#allocation5 + $0x160] sm:$0xff]
    %v165 = vld [vmem:[#allocation5 + $0x168] sm:$0xff]
    %v166 = vld [vmem:[#allocation5 + $0x170] sm:$0xff]
    %v167 = vld [vmem:[#allocation5 + $0x178] sm:$0xff]
    %v168 = vld [vmem:[#allocation5 + $0x180] sm:$0xff]
    %v169 = vld [vmem:[#allocation5 + $0x188] sm:$0xff]
    %v170 = vld [vmem:[#allocation5 + $0x190] sm:$0xff]
    %v171 = vld [vmem:[#allocation5 + $0x198] sm:$0xff]
    %v172 = vld [vmem:[#allocation5 + $0x1a0] sm:$0xff]
    %v173 = vld [vmem:[#allocation5 + $0x1a8] sm:$0xff]
    %v174 = vld [vmem:[#allocation5 + $0x1b0] sm:$0xff]
    %v175 = vld [vmem:[#allocation5 + $0x1b8] sm:$0xff]
    %v176 = vld [vmem:[#allocation5 + $0x1c0] sm:$0xff]
    %v177 = vld [vmem:[#allocation5 + $0x1c8] sm:$0xff]
    %v178 = vld [vmem:[#allocation5 + $0x1d0] sm:$0xff]
    %v179 = vld [vmem:[#allocation5 + $0x1d8] sm:$0xff]
    %v180 = vld [vmem:[#allocation5 + $0x1e0] sm:$0xff]
    %v181 = vld [vmem:[#allocation5 + $0x1e8] sm:$0xff]
    %v182 = vld [vmem:[#allocation5 + $0x1f0] sm:$0xff]
    %v183 = vld [vmem:[#allocation5 + $0x1f8] sm:$0xff]
    %v184 = vld [vmem:[#allocation5 + $0x200] sm:$0xff]
    %v185 = vld [vmem:[#allocation5 + $0x208] sm:$0xff]
    %v186 = vld [vmem:[#allocation5 + $0x210] sm:$0xff]
    %v187 = vld [vmem:[#allocation5 + $0x218] sm:$0xff]
    %v188 = vld [vmem:[#allocation5 + $0x220] sm:$0xff]
    %v189 = vld [vmem:[#allocation5 + $0x228] sm:$0xff]
    %v190 = vld [vmem:[#allocation5 + $0x230] sm:$0xff]
    %v191 = vld [vmem:[#allocation5 + $0x238] sm:$0xff]
    %v192 = vld [vmem:[#allocation5 + $0x240] sm:$0xff]
    %v193 = vld [vmem:[#allocation5 + $0x248] sm:$0xff]
    %v194 = vld [vmem:[#allocation5 + $0x250] sm:$0xff]
    %v195 = vld [vmem:[#allocation5 + $0x258] sm:$0xff]
    %v196 = vld [vmem:[#allocation5 + $0x260] sm:$0xff]
    %v197 = vld [vmem:[#allocation5 + $0x268] sm:$0xff]
    %v198 = vld [vmem:[#allocation5 + $0x270] sm:$0xff]
    %v199 = vld [vmem:[#allocation5 + $0x278] sm:$0xff]
    %v200 = vld [vmem:[#allocation5 + $0x280] sm:$0xff]
    %v201 = vld [vmem:[#allocation5 + $0x288] sm:$0xff]
    %v202 = vld [vmem:[#allocation5 + $0x290] sm:$0xff]
    %v203 = vld [vmem:[#allocation5 + $0x298] sm:$0xff]
    %v204 = vld [vmem:[#allocation5 + $0x2a0] sm:$0xff]
    %v205 = vld [vmem:[#allocation5 + $0x2a8] sm:$0xff]
    %v206 = vld [vmem:[#allocation5 + $0x2b0] sm:$0xff]
    %v207 = vld [vmem:[#allocation5 + $0x2b8] sm:$0xff]
    %v208 = vld [vmem:[#allocation5 + $0x2c0] sm:$0xff]
    %v209 = vld [vmem:[#allocation5 + $0x2c8] sm:$0xff]
    %v210 = vld [vmem:[#allocation5 + $0x2d0] sm:$0xff]
    %v211 = vld [vmem:[#allocation5 + $0x2d8] sm:$0xff]
    %v212 = vld [vmem:[#allocation5 + $0x2e0] sm:$0xff]
    %v213 = vld [vmem:[#allocation5 + $0x2e8] sm:$0xff]
    %v214 = vld [vmem:[#allocation5 + $0x2f0] sm:$0xff]
    %v215 = vld [vmem:[#allocation5 + $0x2f8] sm:$0xff]
    %v216 = vld [vmem:[#allocation5 + $0x300] sm:$0xff]
    %v217 = vld [vmem:[#allocation5 + $0x308] sm:$0xff]
    %v218 = vld [vmem:[#allocation5 + $0x310] sm:$0xff]
    %v219 = vld [vmem:[#allocation5 + $0x318] sm:$0xff]
    %v220 = vld [vmem:[#allocation5 + $0x320] sm:$0xff]
    %v221 = vld [vmem:[#allocation5 + $0x328] sm:$0xff]
    %v222 = vld [vmem:[#allocation5 + $0x330] sm:$0xff]
    %v223 = vld [vmem:[#allocation5 + $0x338] sm:$0xff]
    %v224 = vld [vmem:[#allocation5 + $0x340] sm:$0xff]
    %v225 = vld [vmem:[#allocation5 + $0x348] sm:$0xff]
    %v226 = vld [vmem:[#allocation5 + $0x350] sm:$0xff]
    %v227 = vld [vmem:[#allocation5 + $0x358] sm:$0xff]
    %v228 = vld [vmem:[#allocation5 + $0x360] sm:$0xff]
    %v229 = vld [vmem:[#allocation5 + $0x368] sm:$0xff]
    %v230 = vld [vmem:[#allocation5 + $0x370] sm:$0xff]
    %v231 = vld [vmem:[#allocation5 + $0x378] sm:$0xff]
    %v232 = vld [vmem:[#allocation5 + $0x380] sm:$0xff]
    %v233 = vld [vmem:[#allocation5 + $0x388] sm:$0xff]
    %v234 = vld [vmem:[#allocation5 + $0x390] sm:$0xff]
    %v235 = vld [vmem:[#allocation5 + $0x398] sm:$0xff]
    %v236 = vld [vmem:[#allocation5 + $0x3a0] sm:$0xff]
    %v237 = vld [vmem:[#allocation5 + $0x3a8] sm:$0xff]
    %v238 = vld [vmem:[#allocation5 + $0x3b0] sm:$0xff]
    %v239 = vld [vmem:[#allocation5 + $0x3b8] sm:$0xff]
    %v240 = vld [vmem:[#allocation5 + $0x3c0] sm:$0xff]
    %v241 = vld [vmem:[#allocation5 + $0x3c8] sm:$0xff]
    %v242 = vld [vmem:[#allocation5 + $0x3d0] sm:$0xff]
    %v243 = vld [vmem:[#allocation5 + $0x3d8] sm:$0xff]
    %v244 = vld [vmem:[#allocation5 + $0x3e0] sm:$0xff]
    %v245 = vld [vmem:[#allocation5 + $0x3e8] sm:$0xff]
    %v246 = vld [vmem:[#allocation5 + $0x3f0] sm:$0xff]
    %v247 = vld [vmem:[#allocation5 + $0x3f8] sm:$0xff]
    %v248 = vld [vmem:[#allocation5 + $0x400] sm:$0xff]
    %v249 = vld [vmem:[#allocation5 + $0x408] sm:$0xff]
    %v250 = vld [vmem:[#allocation5 + $0x410] sm:$0xff]
    %v251 = vld [vmem:[#allocation5 + $0x418] sm:$0xff]
    %v252 = vld [vmem:[#allocation5 + $0x420] sm:$0xff]
    %v253 = vld [vmem:[#allocation5 + $0x428] sm:$0xff]
    %v254 = vld [vmem:[#allocation5 + $0x430] sm:$0xff]
    %v255 = vld [vmem:[#allocation5 + $0x438] sm:$0xff]
    %v256 = vld [vmem:[#allocation5 + $0x440] sm:$0xff]
    %v257 = vld [vmem:[#allocation5 + $0x448] sm:$0xff]
    %v258 = vld [vmem:[#allocation5 + $0x450] sm:$0xff]
    %v259 = vld [vmem:[#allocation5 + $0x458] sm:$0xff]
    %v260 = vld [vmem:[#allocation5 + $0x460] sm:$0xff]
    %v261 = vld [vmem:[#allocation5 + $0x468] sm:$0xff]
    %v262 = vld [vmem:[#allocation5 + $0x470] sm:$0xff]
    %v263 = vld [vmem:[#allocation5 + $0x478] sm:$0xff]
    %v264 = vld [vmem:[#allocation5 + $0x480] sm:$0xff]
    %v265 = vld [vmem:[#allocation5 + $0x488] sm:$0xff]
    %v266 = vld [vmem:[#allocation5 + $0x490] sm:$0xff]
    %v267 = vld [vmem:[#allocation5 + $0x498] sm:$0xff]
    %v268 = vld [vmem:[#allocation5 + $0x4a0] sm:$0xff]
    %v269 = vld [vmem:[#allocation5 + $0x4a8] sm:$0xff]
    %v270 = vld [vmem:[#allocation5 + $0x4b0] sm:$0xff]
    %v271 = vld [vmem:[#allocation5 + $0x4b8] sm:$0xff]
    %v272 = vld [vmem:[#allocation5 + $0x4c0] sm:$0xff]
    %v273 = vld [vmem:[#allocation5 + $0x4c8] sm:$0xff]
    %v274 = vld [vmem:[#allocation5 + $0x4d0] sm:$0xff]
    %v275 = vld [vmem:[#allocation5 + $0x4d8] sm:$0xff]
    %v276 = vld [vmem:[#allocation5 + $0x4e0] sm:$0xff]
    %v277 = vld [vmem:[#allocation5 + $0x4e8] sm:$0xff]
    %v278 = vld [vmem:[#allocation5 + $0x4f0] sm:$0xff]
    %v279 = vld [vmem:[#allocation5 + $0x4f8] sm:$0xff]
    %v280 = vld [vmem:[#allocation5 + $0x500] sm:$0xff]
    %v281 = vld [vmem:[#allocation5 + $0x508] sm:$0xff]
    %v282 = vld [vmem:[#allocation5 + $0x510] sm:$0xff]
    %v283 = vld [vmem:[#allocation5 + $0x518] sm:$0xff]
    %v284 = vld [vmem:[#allocation5 + $0x520] sm:$0xff]
    %v285 = vld [vmem:[#allocation5 + $0x528] sm:$0xff]
    %v286 = vld [vmem:[#allocation5 + $0x530] sm:$0xff]
    %v287 = vld [vmem:[#allocation5 + $0x538] sm:$0xff]
    %v288 = vld [vmem:[#allocation5 + $0x540] sm:$0xff]
    %v289 = vld [vmem:[#allocation5 + $0x548] sm:$0xff]
    %v290 = vld [vmem:[#allocation5 + $0x550] sm:$0xff]
    %v291 = vld [vmem:[#allocation5 + $0x558] sm:$0xff]
    %v292 = vld [vmem:[#allocation5 + $0x560] sm:$0xff]
    %v293 = vld [vmem:[#allocation5 + $0x568] sm:$0xff]
    %v294 = vld [vmem:[#allocation5 + $0x570] sm:$0xff]
    %v295 = vld [vmem:[#allocation5 + $0x578] sm:$0xff]
    %v296 = vld [vmem:[#allocation5 + $0x580] sm:$0xff]
    %v297 = vld [vmem:[#allocation5 + $0x588] sm:$0xff]
    %v298 = vld [vmem:[#allocation5 + $0x590] sm:$0xff]
    %v299 = vld [vmem:[#allocation5 + $0x598] sm:$0xff]
    %v300 = vld [vmem:[#allocation5 + $0x5a0] sm:$0xff]
    %v301 = vld [vmem:[#allocation5 + $0x5a8] sm:$0xff]
    %v302 = vld [vmem:[#allocation5 + $0x5b0] sm:$0xff]
    %v303 = vld [vmem:[#allocation5 + $0x5b8] sm:$0xff]
    %v304 = vld [vmem:[#allocation5 + $0x5c0] sm:$0xff]
    %v305 = vld [vmem:[#allocation5 + $0x5c8] sm:$0xff]
    %v306 = vld [vmem:[#allocation5 + $0x5d0] sm:$0xff]
    %v307 = vld [vmem:[#allocation5 + $0x5d8] sm:$0xff]
    %v308 = vld [vmem:[#allocation5 + $0x5e0] sm:$0xff]
    %v309 = vld [vmem:[#allocation5 + $0x5e8] sm:$0xff]
    %v310 = vld [vmem:[#allocation5 + $0x5f0] sm:$0xff]
    %v311 = vld [vmem:[#allocation5 + $0x5f8] sm:$0xff]
    %v312 = vld [vmem:[#allocation5 + $0x600] sm:$0xff]
    %v313 = vld [vmem:[#allocation5 + $0x608] sm:$0xff]
    %v314 = vld [vmem:[#allocation5 + $0x610] sm:$0xff]
    %v315 = vld [vmem:[#allocation5 + $0x618] sm:$0xff]
    %v316 = vld [vmem:[#allocation5 + $0x620] sm:$0xff]
    %v317 = vld [vmem:[#allocation5 + $0x628] sm:$0xff]
    %v318 = vld [vmem:[#allocation5 + $0x630] sm:$0xff]
    %v319 = vld [vmem:[#allocation5 + $0x638] sm:$0xff]
    %v320 = vld [vmem:[#allocation5 + $0x640] sm:$0xff]
    %v321 = vld [vmem:[#allocation5 + $0x648] sm:$0xff]
    %v322 = vld [vmem:[#allocation5 + $0x650] sm:$0xff]
    %v323 = vld [vmem:[#allocation5 + $0x658] sm:$0xff]
    %v324 = vld [vmem:[#allocation5 + $0x660] sm:$0xff]
    %v325 = vld [vmem:[#allocation5 + $0x668] sm:$0xff]
    %v326 = vld [vmem:[#allocation5 + $0x670] sm:$0xff]
    %v327 = vld [vmem:[#allocation5 + $0x678] sm:$0xff]
    %v328 = vld [vmem:[#allocation5 + $0x680] sm:$0xff]
    %v329 = vld [vmem:[#allocation5 + $0x688] sm:$0xff]
    %v330 = vld [vmem:[#allocation5 + $0x690] sm:$0xff]
    %v331 = vld [vmem:[#allocation5 + $0x698] sm:$0xff]
    %v332 = vld [vmem:[#allocation5 + $0x6a0] sm:$0xff]
    %v333 = vld [vmem:[#allocation5 + $0x6a8] sm:$0xff]
    %v334 = vld [vmem:[#allocation5 + $0x6b0] sm:$0xff]
    %v335 = vld [vmem:[#allocation5 + $0x6b8] sm:$0xff]
    %v336 = vld [vmem:[#allocation5 + $0x6c0] sm:$0xff]
    %v337 = vld [vmem:[#allocation5 + $0x6c8] sm:$0xff]
    %v338 = vld [vmem:[#allocation5 + $0x6d0] sm:$0xff]
    %v339 = vld [vmem:[#allocation5 + $0x6d8] sm:$0xff]
    %v340 = vld [vmem:[#allocation5 + $0x6e0] sm:$0xff]
    %v341 = vld [vmem:[#allocation5 + $0x6e8] sm:$0xff]
    %v342 = vld [vmem:[#allocation5 + $0x6f0] sm:$0xff]
    %v343 = vld [vmem:[#allocation5 + $0x6f8] sm:$0xff]
    %v344 = vld [vmem:[#allocation5 + $0x700] sm:$0xff]
    %v345 = vld [vmem:[#allocation5 + $0x708] sm:$0xff]
    %v346 = vld [vmem:[#allocation5 + $0x710] sm:$0xff]
    %v347 = vld [vmem:[#allocation5 + $0x718] sm:$0xff]
    %v348 = vld [vmem:[#allocation5 + $0x720] sm:$0xff]
    %v349 = vld [vmem:[#allocation5 + $0x728] sm:$0xff]
    %v350 = vld [vmem:[#allocation5 + $0x730] sm:$0xff]
    %v351 = vld [vmem:[#allocation5 + $0x738] sm:$0xff]
    %v352 = vld [vmem:[#allocation5 + $0x740] sm:$0xff]
    %v353 = vld [vmem:[#allocation5 + $0x748] sm:$0xff]
    %v354 = vld [vmem:[#allocation5 + $0x750] sm:$0xff]
    %v355 = vld [vmem:[#allocation5 + $0x758] sm:$0xff]
    %v356 = vld [vmem:[#allocation5 + $0x760] sm:$0xff]
    %v357 = vld [vmem:[#allocation5 + $0x768] sm:$0xff]
    %v358 = vld [vmem:[#allocation5 + $0x770] sm:$0xff]
    %v359 = vld [vmem:[#allocation5 + $0x778] sm:$0xff]
    %v360 = vld [vmem:[#allocation5 + $0x780] sm:$0xff]
    %v361 = vld [vmem:[#allocation5 + $0x788] sm:$0xff]
    %v362 = vld [vmem:[#allocation5 + $0x790] sm:$0xff]
    %v363 = vld [vmem:[#allocation5 + $0x798] sm:$0xff]
    %v364 = vld [vmem:[#allocation5 + $0x7a0] sm:$0xff]
    %v365 = vld [vmem:[#allocation5 + $0x7a8] sm:$0xff]
    %v366 = vld [vmem:[#allocation5 + $0x7b0] sm:$0xff]
    %v367 = vld [vmem:[#allocation5 + $0x7b8] sm:$0xff]
    %v368 = vld [vmem:[#allocation5 + $0x7c0] sm:$0xff]
    %v369 = vld [vmem:[#allocation5 + $0x7c8] sm:$0xff]
    %v370 = vld [vmem:[#allocation5 + $0x7d0] sm:$0xff]
    %v371 = vld [vmem:[#allocation5 + $0x7d8] sm:$0xff]
    %v372 = vld [vmem:[#allocation5 + $0x7e0] sm:$0xff]
    %v373 = vld [vmem:[#allocation5 + $0x7e8] sm:$0xff]
    %v374 = vld [vmem:[#allocation5 + $0x7f0] sm:$0xff]
    %v375 = vld [vmem:[#allocation5 + $0x7f8] sm:$0xff]
    %v376 = vld [vmem:[#allocation5 + $0x800] sm:$0xff]
    %v377 = vld [vmem:[#allocation5 + $0x808] sm:$0xff]
    %v378 = vld [vmem:[#allocation5 + $0x810] sm:$0xff]
    %v379 = vld [vmem:[#allocation5 + $0x818] sm:$0xff]
    %v380 = vld [vmem:[#allocation5 + $0x820] sm:$0xff]
    %v381 = vld [vmem:[#allocation5 + $0x828] sm:$0xff]
    %v382 = vld [vmem:[#allocation5 + $0x830] sm:$0xff]
    %v383 = vld [vmem:[#allocation5 + $0x838] sm:$0xff]
    %v384 = vld [vmem:[#allocation5 + $0x840] sm:$0xff]
    %v385 = vld [vmem:[#allocation5 + $0x848] sm:$0xff]
    %v386 = vld [vmem:[#allocation5 + $0x850] sm:$0xff]
    %v387 = vld [vmem:[#allocation5 + $0x858] sm:$0xff]
    %v388 = vld [vmem:[#allocation5 + $0x860] sm:$0xff]
    %v389 = vld [vmem:[#allocation5 + $0x868] sm:$0xff]
    %v390 = vld [vmem:[#allocation5 + $0x870] sm:$0xff]
    %v391 = vld [vmem:[#allocation5 + $0x878] sm:$0xff]
    %v392 = vld [vmem:[#allocation5 + $0x880] sm:$0xff]
    %v393 = vld [vmem:[#allocation5 + $0x888] sm:$0xff]
    %v394 = vld [vmem:[#allocation5 + $0x890] sm:$0xff]
    %v395 = vld [vmem:[#allocation5 + $0x898] sm:$0xff]
    %v396 = vld [vmem:[#allocation5 + $0x8a0] sm:$0xff]
    %v397 = vld [vmem:[#allocation5 + $0x8a8] sm:$0xff]
    %v398 = vld [vmem:[#allocation5 + $0x8b0] sm:$0xff]
    %v399 = vld [vmem:[#allocation5 + $0x8b8] sm:$0xff]
    %v400 = vld [vmem:[#allocation5 + $0x8c0] sm:$0xff]
    %v401 = vld [vmem:[#allocation5 + $0x8c8] sm:$0xff]
    %v402 = vld [vmem:[#allocation5 + $0x8d0] sm:$0xff]
    %v403 = vld [vmem:[#allocation5 + $0x8d8] sm:$0xff]
    %v404 = vld [vmem:[#allocation5 + $0x8e0] sm:$0xff]
    %v405 = vld [vmem:[#allocation5 + $0x8e8] sm:$0xff]
    %v406 = vld [vmem:[#allocation5 + $0x8f0] sm:$0xff]
    %v407 = vld [vmem:[#allocation5 + $0x8f8] sm:$0xff]
    %v408 = vld [vmem:[#allocation5 + $0x900] sm:$0xff]
    %v409 = vld [vmem:[#allocation5 + $0x908] sm:$0xff]
    %v410 = vld [vmem:[#allocation5 + $0x910] sm:$0xff]
    %v411 = vld [vmem:[#allocation5 + $0x918] sm:$0xff]
    %v412 = vld [vmem:[#allocation5 + $0x920] sm:$0xff]
    %v413 = vld [vmem:[#allocation5 + $0x928] sm:$0xff]
    %v414 = vld [vmem:[#allocation5 + $0x930] sm:$0xff]
    %v415 = vld [vmem:[#allocation5 + $0x938] sm:$0xff]
    %v416 = vld [vmem:[#allocation5 + $0x940] sm:$0xff]
    %v417 = vld [vmem:[#allocation5 + $0x948] sm:$0xff]
    %v418 = vld [vmem:[#allocation5 + $0x950] sm:$0xff]
    %v419 = vld [vmem:[#allocation5 + $0x958] sm:$0xff]
    %v420 = vld [vmem:[#allocation5 + $0x960] sm:$0xff]
    %v421 = vld [vmem:[#allocation5 + $0x968] sm:$0xff]
    %v422 = vld [vmem:[#allocation5 + $0x970] sm:$0xff]
    %v423 = vld [vmem:[#allocation5 + $0x978] sm:$0xff]
    %v424 = vld [vmem:[#allocation5 + $0x980] sm:$0xff]
    %v425 = vld [vmem:[#allocation5 + $0x988] sm:$0xff]
    %v426 = vld [vmem:[#allocation5 + $0x990] sm:$0xff]
    %v427 = vld [vmem:[#allocation5 + $0x998] sm:$0xff]
    %v428 = vld [vmem:[#allocation5 + $0x9a0] sm:$0xff]
    %v429 = vld [vmem:[#allocation5 + $0x9a8] sm:$0xff]
    %v430 = vld [vmem:[#allocation5 + $0x9b0] sm:$0xff]
    %v431 = vld [vmem:[#allocation5 + $0x9b8] sm:$0xff]
    %v432 = vld [vmem:[#allocation5 + $0x9c0] sm:$0xff]
    %v433 = vld [vmem:[#allocation5 + $0x9c8] sm:$0xff]
    %v434 = vld [vmem:[#allocation5 + $0x9d0] sm:$0xff]
    %v435 = vld [vmem:[#allocation5 + $0x9d8] sm:$0xff]
    %v436 = vld [vmem:[#allocation5 + $0x9e0] sm:$0xff]
    %v437 = vld [vmem:[#allocation5 + $0x9e8] sm:$0xff]
    %v438 = vld [vmem:[#allocation5 + $0x9f0] sm:$0xff]
    %v439 = vld [vmem:[#allocation5 + $0x9f8] sm:$0xff]
    %v440 = vld [vmem:[#allocation5 + $0xa00] sm:$0xff]
    %v441 = vld [vmem:[#allocation5 + $0xa08] sm:$0xff]
    %v442 = vld [vmem:[#allocation5 + $0xa10] sm:$0xff]
    %v443 = vld [vmem:[#allocation5 + $0xa18] sm:$0xff]
    %v444 = vld [vmem:[#allocation5 + $0xa20] sm:$0xff]
    %v445 = vld [vmem:[#allocation5 + $0xa28] sm:$0xff]
    %v446 = vld [vmem:[#allocation5 + $0xa30] sm:$0xff]
    %v447 = vld [vmem:[#allocation5 + $0xa38] sm:$0xff]
    %v448 = vld [vmem:[#allocation5 + $0xa40] sm:$0xff]
    %v449 = vld [vmem:[#allocation5 + $0xa48] sm:$0xff]
    %v450 = vld [vmem:[#allocation5 + $0xa50] sm:$0xff]
    %v451 = vld [vmem:[#allocation5 + $0xa58] sm:$0xff]
    %v452 = vld [vmem:[#allocation5 + $0xa60] sm:$0xff]
    %v453 = vld [vmem:[#allocation5 + $0xa68] sm:$0xff]
    %v454 = vld [vmem:[#allocation5 + $0xa70] sm:$0xff]
    %v455 = vld [vmem:[#allocation5 + $0xa78] sm:$0xff]
    %v456 = vld [vmem:[#allocation5 + $0xa80] sm:$0xff]
    %v457 = vld [vmem:[#allocation5 + $0xa88] sm:$0xff]
    %v458 = vld [vmem:[#allocation5 + $0xa90] sm:$0xff]
    %v459 = vld [vmem:[#allocation5 + $0xa98] sm:$0xff]
    %v460 = vld [vmem:[#allocation5 + $0xaa0] sm:$0xff]
    %v461 = vld [vmem:[#allocation5 + $0xaa8] sm:$0xff]
    %v462 = vld [vmem:[#allocation5 + $0xab0] sm:$0xff]
    %v463 = vld [vmem:[#allocation5 + $0xab8] sm:$0xff]
    %v464 = vld [vmem:[#allocation5 + $0xac0] sm:$0xff]
    %v465 = vld [vmem:[#allocation5 + $0xac8] sm:$0xff]
    %v466 = vld [vmem:[#allocation5 + $0xad0] sm:$0xff]
    %v467 = vld [vmem:[#allocation5 + $0xad8] sm:$0xff]
    %v468 = vld [vmem:[#allocation5 + $0xae0] sm:$0xff]
    %v469 = vld [vmem:[#allocation5 + $0xae8] sm:$0xff]
    %v470 = vld [vmem:[#allocation5 + $0xaf0] sm:$0xff]
    %v471 = vld [vmem:[#allocation5 + $0xaf8] sm:$0xff]
    %v472 = vld [vmem:[#allocation5 + $0xb00] sm:$0xff]
    %v473 = vld [vmem:[#allocation5 + $0xb08] sm:$0xff]
    %v474 = vld [vmem:[#allocation5 + $0xb10] sm:$0xff]
    %v475 = vld [vmem:[#allocation5 + $0xb18] sm:$0xff]
    %v476 = vld [vmem:[#allocation5 + $0xb20] sm:$0xff]
    %v477 = vld [vmem:[#allocation5 + $0xb28] sm:$0xff]
    %v478 = vld [vmem:[#allocation5 + $0xb30] sm:$0xff]
    %v479 = vld [vmem:[#allocation5 + $0xb38] sm:$0xff]
    %v480 = vld [vmem:[#allocation5 + $0xb40] sm:$0xff]
    %v481 = vld [vmem:[#allocation5 + $0xb48] sm:$0xff]
    %v482 = vld [vmem:[#allocation5 + $0xb50] sm:$0xff]
    %v483 = vld [vmem:[#allocation5 + $0xb58] sm:$0xff]
    %v484 = vld [vmem:[#allocation5 + $0xb60] sm:$0xff]
    %v485 = vld [vmem:[#allocation5 + $0xb68] sm:$0xff]
    %v486 = vld [vmem:[#allocation5 + $0xb70] sm:$0xff]
    %v487 = vld [vmem:[#allocation5 + $0xb78] sm:$0xff]
    %v488 = vld [vmem:[#allocation5 + $0xb80] sm:$0xff]
    %v489 = vld [vmem:[#allocation5 + $0xb88] sm:$0xff]
    %v490 = vld [vmem:[#allocation5 + $0xb90] sm:$0xff]
    %v491 = vld [vmem:[#allocation5 + $0xb98] sm:$0xff]
    %v492 = vld [vmem:[#allocation5 + $0xba0] sm:$0xff]
    %v493 = vld [vmem:[#allocation5 + $0xba8] sm:$0xff]
    %v494 = vld [vmem:[#allocation5 + $0xbb0] sm:$0xff]
    %v495 = vld [vmem:[#allocation5 + $0xbb8] sm:$0xff]
    %v496 = vld [vmem:[#allocation5 + $0xbc0] sm:$0xff]
    %v497 = vld [vmem:[#allocation5 + $0xbc8] sm:$0xff]
    %v498 = vld [vmem:[#allocation5 + $0xbd0] sm:$0xff]
    %v499 = vld [vmem:[#allocation5 + $0xbd8] sm:$0xff]
    %v500 = vld [vmem:[#allocation5 + $0xbe0] sm:$0xff]
    %v501 = vld [vmem:[#allocation5 + $0xbe8] sm:$0xff]
    %v502 = vld [vmem:[#allocation5 + $0xbf0] sm:$0xff]
    %v503 = vld [vmem:[#allocation5 + $0xbf8] sm:$0xff]
    %v504 = vld [vmem:[#allocation5 + $0xc00] sm:$0xff]
    %v505 = vld [vmem:[#allocation5 + $0xc08] sm:$0xff]
    %v506 = vld [vmem:[#allocation5 + $0xc10] sm:$0xff]
    %v507 = vld [vmem:[#allocation5 + $0xc18] sm:$0xff]
    %v508 = vld [vmem:[#allocation5 + $0xc20] sm:$0xff]
    %v509 = vld [vmem:[#allocation5 + $0xc28] sm:$0xff]
    %v510 = vld [vmem:[#allocation5 + $0xc30] sm:$0xff]
    %v511 = vld [vmem:[#allocation5 + $0xc38] sm:$0xff]
    %v512 = vld [vmem:[#allocation5 + $0xc40] sm:$0xff]
    %v513 = vld [vmem:[#allocation5 + $0xc48] sm:$0xff]
    %v514 = vld [vmem:[#allocation5 + $0xc50] sm:$0xff]
    %v515 = vld [vmem:[#allocation5 + $0xc58] sm:$0xff]
    %v516 = vld [vmem:[#allocation5 + $0xc60] sm:$0xff]
    %v517 = vld [vmem:[#allocation5 + $0xc68] sm:$0xff]
    %v518 = vld [vmem:[#allocation5 + $0xc70] sm:$0xff]
    %v519 = vld [vmem:[#allocation5 + $0xc78] sm:$0xff]
    %v520 = vld [vmem:[#allocation5 + $0xc80] sm:$0xff]
    %v521 = vld [vmem:[#allocation5 + $0xc88] sm:$0xff]
    %v522 = vld [vmem:[#allocation5 + $0xc90] sm:$0xff]
    %v523 = vld [vmem:[#allocation5 + $0xc98] sm:$0xff]
    %v524 = vld [vmem:[#allocation5 + $0xca0] sm:$0xff]
    %v525 = vld [vmem:[#allocation5 + $0xca8] sm:$0xff]
    %v526 = vld [vmem:[#allocation5 + $0xcb0] sm:$0xff]
    %v527 = vld [vmem:[#allocation5 + $0xcb8] sm:$0xff]
    %v528 = vld [vmem:[#allocation5 + $0xcc0] sm:$0xff]
    %v529 = vld [vmem:[#allocation5 + $0xcc8] sm:$0xff]
    %v530 = vld [vmem:[#allocation5 + $0xcd0] sm:$0xff]
    %v531 = vld [vmem:[#allocation5 + $0xcd8] sm:$0xff]
    %v532 = vld [vmem:[#allocation5 + $0xce0] sm:$0xff]
    %v533 = vld [vmem:[#allocation5 + $0xce8] sm:$0xff]
    %v534 = vld [vmem:[#allocation5 + $0xcf0] sm:$0xff]
    %v535 = vld [vmem:[#allocation5 + $0xcf8] sm:$0xff]
    %v536 = vld [vmem:[#allocation5 + $0xd00] sm:$0xff]
    %v537 = vld [vmem:[#allocation5 + $0xd08] sm:$0xff]
    %v538 = vld [vmem:[#allocation5 + $0xd10] sm:$0xff]
    %v539 = vld [vmem:[#allocation5 + $0xd18] sm:$0xff]
    %v540 = vld [vmem:[#allocation5 + $0xd20] sm:$0xff]
    %v541 = vld [vmem:[#allocation5 + $0xd28] sm:$0xff]
    %v542 = vld [vmem:[#allocation5 + $0xd30] sm:$0xff]
    %v543 = vld [vmem:[#allocation5 + $0xd38] sm:$0xff]
    %v544 = vld [vmem:[#allocation5 + $0xd40] sm:$0xff]
    %v545 = vld [vmem:[#allocation5 + $0xd48] sm:$0xff]
    %v546 = vld [vmem:[#allocation5 + $0xd50] sm:$0xff]
    %v547 = vld [vmem:[#allocation5 + $0xd58] sm:$0xff]
    %v548 = vld [vmem:[#allocation5 + $0xd60] sm:$0xff]
    %v549 = vld [vmem:[#allocation5 + $0xd68] sm:$0xff]
    %v550 = vld [vmem:[#allocation5 + $0xd70] sm:$0xff]
    %v551 = vld [vmem:[#allocation5 + $0xd78] sm:$0xff]
    %v552 = vld [vmem:[#allocation5 + $0xd80] sm:$0xff]
    %v553 = vld [vmem:[#allocation5 + $0xd88] sm:$0xff]
    %v554 = vld [vmem:[#allocation5 + $0xd90] sm:$0xff]
    %v555 = vld [vmem:[#allocation5 + $0xd98] sm:$0xff]
    %v556 = vld [vmem:[#allocation5 + $0xda0] sm:$0xff]
    %v557 = vld [vmem:[#allocation5 + $0xda8] sm:$0xff]
    %v558 = vld [vmem:[#allocation5 + $0xdb0] sm:$0xff]
    %v559 = vld [vmem:[#allocation5 + $0xdb8] sm:$0xff]
    %v560 = vld [vmem:[#allocation5 + $0xdc0] sm:$0xff]
    %v561 = vld [vmem:[#allocation5 + $0xdc8] sm:$0xff]
    %v562 = vld [vmem:[#allocation5 + $0xdd0] sm:$0xff]
    %v563 = vld [vmem:[#allocation5 + $0xdd8] sm:$0xff]
    %v564 = vld [vmem:[#allocation5 + $0xde0] sm:$0xff]
    %v565 = vld [vmem:[#allocation5 + $0xde8] sm:$0xff]
    %v566 = vld [vmem:[#allocation5 + $0xdf0] sm:$0xff]
    %v567 = vld [vmem:[#allocation5 + $0xdf8] sm:$0xff]
    %v568 = vld [vmem:[#allocation5 + $0xe00] sm:$0xff]
    %v569 = vld [vmem:[#allocation5 + $0xe08] sm:$0xff]
    %v570 = vld [vmem:[#allocation5 + $0xe10] sm:$0xff]
    %v571 = vld [vmem:[#allocation5 + $0xe18] sm:$0xff]
    %v572 = vld [vmem:[#allocation5 + $0xe20] sm:$0xff]
    %v573 = vld [vmem:[#allocation5 + $0xe28] sm:$0xff]
    %v574 = vld [vmem:[#allocation5 + $0xe30] sm:$0xff]
    %v575 = vld [vmem:[#allocation5 + $0xe38] sm:$0xff]
    %v576 = vld [vmem:[#allocation5 + $0xe40] sm:$0xff]
    %v577 = vld [vmem:[#allocation5 + $0xe48] sm:$0xff]
    %v578 = vld [vmem:[#allocation5 + $0xe50] sm:$0xff]
    %v579 = vld [vmem:[#allocation5 + $0xe58] sm:$0xff]
    %v580 = vld [vmem:[#allocation5 + $0xe60] sm:$0xff]
    %v581 = vld [vmem:[#allocation5 + $0xe68] sm:$0xff]
    %v582 = vld [vmem:[#allocation5 + $0xe70] sm:$0xff]
    %v583 = vld [vmem:[#allocation5 + $0xe78] sm:$0xff]
    %v584 = vld [vmem:[#allocation5 + $0xe80] sm:$0xff]
    %v585 = vld [vmem:[#allocation5 + $0xe88] sm:$0xff]
    %v586 = vld [vmem:[#allocation5 + $0xe90] sm:$0xff]
    %v587 = vld [vmem:[#allocation5 + $0xe98] sm:$0xff]
    %v588 = vld [vmem:[#allocation5 + $0xea0] sm:$0xff]
    %v589 = vld [vmem:[#allocation5 + $0xea8] sm:$0xff]
    %v590 = vld [vmem:[#allocation5 + $0xeb0] sm:$0xff]
    %v591 = vld [vmem:[#allocation5 + $0xeb8] sm:$0xff]
    %v592 = vld [vmem:[#allocation5 + $0xec0] sm:$0xff]
    %v593 = vld [vmem:[#allocation5 + $0xec8] sm:$0xff]
    %v594 = vld [vmem:[#allocation5 + $0xed0] sm:$0xff]
    %v595 = vld [vmem:[#allocation5 + $0xed8] sm:$0xff]
    %v596 = vld [vmem:[#allocation5 + $0xee0] sm:$0xff]
    %v597 = vld [vmem:[#allocation5 + $0xee8] sm:$0xff]
    %v598 = vld [vmem:[#allocation5 + $0xef0] sm:$0xff]
    %v599 = vld [vmem:[#allocation5 + $0xef8] sm:$0xff]
    %v600 = vld [vmem:[#allocation5 + $0xf00] sm:$0xff]
    %v601 = vld [vmem:[#allocation5 + $0xf08] sm:$0xff]
    %v602 = vld [vmem:[#allocation5 + $0xf10] sm:$0xff]
    %v603 = vld [vmem:[#allocation5 + $0xf18] sm:$0xff]
    %v604 = vld [vmem:[#allocation5 + $0xf20] sm:$0xff]
    %v605 = vld [vmem:[#allocation5 + $0xf28] sm:$0xff]
    %v606 = vld [vmem:[#allocation5 + $0xf30] sm:$0xff]
    %v607 = vld [vmem:[#allocation5 + $0xf38] sm:$0xff]
    %v608 = vld [vmem:[#allocation5 + $0xf40] sm:$0xff]
    %v609 = vld [vmem:[#allocation5 + $0xf48] sm:$0xff]
    %v610 = vld [vmem:[#allocation5 + $0xf50] sm:$0xff]
    %v611 = vld [vmem:[#allocation5 + $0xf58] sm:$0xff]
    %v612 = vld [vmem:[#allocation5 + $0xf60] sm:$0xff]
    %v613 = vld [vmem:[#allocation5 + $0xf68] sm:$0xff]
    %v614 = vld [vmem:[#allocation5 + $0xf70] sm:$0xff]
    %v615 = vld [vmem:[#allocation5 + $0xf78] sm:$0xff]
    %v616 = vld [vmem:[#allocation5 + $0xf80] sm:$0xff]
    %v617 = vld [vmem:[#allocation5 + $0xf88] sm:$0xff]
    %v618 = vld [vmem:[#allocation5 + $0xf90] sm:$0xff]
    %v619 = vld [vmem:[#allocation5 + $0xf98] sm:$0xff]
    %v620 = vld [vmem:[#allocation5 + $0xfa0] sm:$0xff]
    %v621 = vld [vmem:[#allocation5 + $0xfa8] sm:$0xff]
    %v622 = vld [vmem:[#allocation5 + $0xfb0] sm:$0xff]
    %v623 = vld [vmem:[#allocation5 + $0xfb8] sm:$0xff]
    %v624 = vld [vmem:[#allocation5 + $0xfc0] sm:$0xff]
    %v625 = vld [vmem:[#allocation5 + $0xfc8] sm:$0xff]
    %v626 = vld [vmem:[#allocation5 + $0xfd0] sm:$0xff]
    %v627 = vld [vmem:[#allocation5 + $0xfd8] sm:$0xff]
    %v628 = vld [vmem:[#allocation5 + $0xfe0] sm:$0xff]
    %v629 = vld [vmem:[#allocation5 + $0xfe8] sm:$0xff]
    %v630 = vld [vmem:[#allocation5 + $0xff0] sm:$0xff]
    %v631 = vld [vmem:[#allocation5 + $0xff8] sm:$0xff]
    %v696 = vunpack.c.l.b16 %v56
    %v697 = vunpack.c.h.b16 %v56
    %v698 = vunpack.c.l.b16 %v57
    %v699 = vunpack.c.h.b16 %v57
    %v700 = vunpack.c.l.b16 %v58
    %v701 = vunpack.c.h.b16 %v58
    %v702 = vunpack.c.l.b16 %v59
    %v703 = vunpack.c.h.b16 %v59
    %v704 = vunpack.c.l.b16 %v60
    %v705 = vunpack.c.h.b16 %v60
    %v706 = vunpack.c.l.b16 %v61
    %v707 = vunpack.c.h.b16 %v61
    %v708 = vunpack.c.l.b16 %v62
    %v709 = vunpack.c.h.b16 %v62
    %v710 = vunpack.c.l.b16 %v63
    %v711 = vunpack.c.h.b16 %v63
    %v712 = vunpack.c.l.b16 %v64
    %v713 = vunpack.c.h.b16 %v64
    %v714 = vunpack.c.l.b16 %v65
    %v715 = vunpack.c.h.b16 %v65
    %v716 = vunpack.c.l.b16 %v66
    %v717 = vunpack.c.h.b16 %v66
    %v718 = vunpack.c.l.b16 %v67
    %v719 = vunpack.c.h.b16 %v67
    %v720 = vunpack.c.l.b16 %v68
    %v721 = vunpack.c.h.b16 %v68
    %v722 = vunpack.c.l.b16 %v69
    %v723 = vunpack.c.h.b16 %v69
    %v724 = vunpack.c.l.b16 %v70
    %v725 = vunpack.c.h.b16 %v70
    %v726 = vunpack.c.l.b16 %v71
    %v727 = vunpack.c.h.b16 %v71
    %v728 = vunpack.c.l.b16 %v72
    %v729 = vunpack.c.h.b16 %v72
    %v730 = vunpack.c.l.b16 %v73
    %v731 = vunpack.c.h.b16 %v73
    %v732 = vunpack.c.l.b16 %v74
    %v733 = vunpack.c.h.b16 %v74
    %v734 = vunpack.c.l.b16 %v75
    %v735 = vunpack.c.h.b16 %v75
    %v736 = vunpack.c.l.b16 %v76
    %v737 = vunpack.c.h.b16 %v76
    %v738 = vunpack.c.l.b16 %v77
    %v739 = vunpack.c.h.b16 %v77
    %v740 = vunpack.c.l.b16 %v78
    %v741 = vunpack.c.h.b16 %v78
    %v742 = vunpack.c.l.b16 %v79
    %v743 = vunpack.c.h.b16 %v79
    %v744 = vunpack.c.l.b16 %v80
    %v745 = vunpack.c.h.b16 %v80
    %v746 = vunpack.c.l.b16 %v81
    %v747 = vunpack.c.h.b16 %v81
    %v748 = vunpack.c.l.b16 %v82
    %v749 = vunpack.c.h.b16 %v82
    %v750 = vunpack.c.l.b16 %v83
    %v751 = vunpack.c.h.b16 %v83
    %v752 = vunpack.c.l.b16 %v84
    %v753 = vunpack.c.h.b16 %v84
    %v754 = vunpack.c.l.b16 %v85
    %v755 = vunpack.c.h.b16 %v85
    %v756 = vunpack.c.l.b16 %v86
    %v757 = vunpack.c.h.b16 %v86
    %v758 = vunpack.c.l.b16 %v87
    %v759 = vunpack.c.h.b16 %v87
    %v760 = vunpack.c.l.b16 %v88
    %v761 = vunpack.c.h.b16 %v88
    %v762 = vunpack.c.l.b16 %v89
    %v763 = vunpack.c.h.b16 %v89
    %v764 = vunpack.c.l.b16 %v90
    %v765 = vunpack.c.h.b16 %v90
    %v766 = vunpack.c.l.b16 %v91
    %v767 = vunpack.c.h.b16 %v91
    %v768 = vunpack.c.l.b16 %v92
    %v769 = vunpack.c.h.b16 %v92
    %v770 = vunpack.c.l.b16 %v93
    %v771 = vunpack.c.h.b16 %v93
    %v772 = vunpack.c.l.b16 %v94
    %v773 = vunpack.c.h.b16 %v94
    %v774 = vunpack.c.l.b16 %v95
    %v775 = vunpack.c.h.b16 %v95
    %v776 = vunpack.c.l.b16 %v96
    %v777 = vunpack.c.h.b16 %v96
    %v778 = vunpack.c.l.b16 %v97
    %v779 = vunpack.c.h.b16 %v97
    %v780 = vunpack.c.l.b16 %v98
    %v781 = vunpack.c.h.b16 %v98
    %v782 = vunpack.c.l.b16 %v99
    %v783 = vunpack.c.h.b16 %v99
    %v784 = vunpack.c.l.b16 %v100
    %v785 = vunpack.c.h.b16 %v100
    %v786 = vunpack.c.l.b16 %v101
    %v787 = vunpack.c.h.b16 %v101
    %v788 = vunpack.c.l.b16 %v102
    %v789 = vunpack.c.h.b16 %v102
    %v790 = vunpack.c.l.b16 %v103
    %v791 = vunpack.c.h.b16 %v103
    %v792 = vunpack.c.l.b16 %v104
    %v793 = vunpack.c.h.b16 %v104
    %v794 = vunpack.c.l.b16 %v105
    %v795 = vunpack.c.h.b16 %v105
    %v796 = vunpack.c.l.b16 %v106
    %v797 = vunpack.c.h.b16 %v106
    %v798 = vunpack.c.l.b16 %v107
    %v799 = vunpack.c.h.b16 %v107
    %v800 = vunpack.c.l.b16 %v108
    %v801 = vunpack.c.h.b16 %v108
    %v802 = vunpack.c.l.b16 %v109
    %v803 = vunpack.c.h.b16 %v109
    %v804 = vunpack.c.l.b16 %v110
    %v805 = vunpack.c.h.b16 %v110
    %v806 = vunpack.c.l.b16 %v111
    %v807 = vunpack.c.h.b16 %v111
    %v808 = vunpack.c.l.b16 %v112
    %v809 = vunpack.c.h.b16 %v112
    %v810 = vunpack.c.l.b16 %v113
    %v811 = vunpack.c.h.b16 %v113
    %v812 = vunpack.c.l.b16 %v114
    %v813 = vunpack.c.h.b16 %v114
    %v814 = vunpack.c.l.b16 %v115
    %v815 = vunpack.c.h.b16 %v115
    %v816 = vunpack.c.l.b16 %v116
    %v817 = vunpack.c.h.b16 %v116
    %v818 = vunpack.c.l.b16 %v117
    %v819 = vunpack.c.h.b16 %v117
    %v820 = vunpack.c.l.b16 %v118
    %v821 = vunpack.c.h.b16 %v118
    %v822 = vunpack.c.l.b16 %v119
    %v823 = vunpack.c.h.b16 %v119
    %v824 = vpack.c.b16 %v704, %v696
    %v825 = vpack.c.b16 %v705, %v697
    %v826 = vpack.c.b16 %v706, %v698
    %v827 = vpack.c.b16 %v707, %v699
    %v828 = vpack.c.b16 %v708, %v700
    %v829 = vpack.c.b16 %v709, %v701
    %v830 = vpack.c.b16 %v710, %v702
    %v831 = vpack.c.b16 %v711, %v703
    %v832 = vpack.c.b16 %v720, %v712
    %v833 = vpack.c.b16 %v721, %v713
    %v834 = vpack.c.b16 %v722, %v714
    %v835 = vpack.c.b16 %v723, %v715
    %v836 = vpack.c.b16 %v724, %v716
    %v837 = vpack.c.b16 %v725, %v717
    %v838 = vpack.c.b16 %v726, %v718
    %v839 = vpack.c.b16 %v727, %v719
    %v840 = vpack.c.b16 %v736, %v728
    %v841 = vpack.c.b16 %v737, %v729
    %v842 = vpack.c.b16 %v738, %v730
    %v843 = vpack.c.b16 %v739, %v731
    %v844 = vpack.c.b16 %v740, %v732
    %v845 = vpack.c.b16 %v741, %v733
    %v846 = vpack.c.b16 %v742, %v734
    %v847 = vpack.c.b16 %v743, %v735
    %v848 = vpack.c.b16 %v752, %v744
    %v849 = vpack.c.b16 %v753, %v745
    %v850 = vpack.c.b16 %v754, %v746
    %v851 = vpack.c.b16 %v755, %v747
    %v852 = vpack.c.b16 %v756, %v748
    %v853 = vpack.c.b16 %v757, %v749
    %v854 = vpack.c.b16 %v758, %v750
    %v855 = vpack.c.b16 %v759, %v751
    %v856 = vpack.c.b16 %v768, %v760
    %v857 = vpack.c.b16 %v769, %v761
    %v858 = vpack.c.b16 %v770, %v762
    %v859 = vpack.c.b16 %v771, %v763
    %v860 = vpack.c.b16 %v772, %v764
    %v861 = vpack.c.b16 %v773, %v765
    %v862 = vpack.c.b16 %v774, %v766
    %v863 = vpack.c.b16 %v775, %v767
    %v864 = vpack.c.b16 %v784, %v776
    %v865 = vpack.c.b16 %v785, %v777
    %v866 = vpack.c.b16 %v786, %v778
    %v867 = vpack.c.b16 %v787, %v779
    %v868 = vpack.c.b16 %v788, %v780
    %v869 = vpack.c.b16 %v789, %v781
    %v870 = vpack.c.b16 %v790, %v782
    %v871 = vpack.c.b16 %v791, %v783
    %v872 = vpack.c.b16 %v800, %v792
    %v873 = vpack.c.b16 %v801, %v793
    %v874 = vpack.c.b16 %v802, %v794
    %v875 = vpack.c.b16 %v803, %v795
    %v876 = vpack.c.b16 %v804, %v796
    %v877 = vpack.c.b16 %v805, %v797
    %v878 = vpack.c.b16 %v806, %v798
    %v879 = vpack.c.b16 %v807, %v799
    %v880 = vpack.c.b16 %v816, %v808
    %v881 = vpack.c.b16 %v817, %v809
    %v882 = vpack.c.b16 %v818, %v810
    %v883 = vpack.c.b16 %v819, %v811
    %v884 = vpack.c.b16 %v820, %v812
    %v885 = vpack.c.b16 %v821, %v813
    %v886 = vpack.c.b16 %v822, %v814
    %v887 = vpack.c.b16 %v823, %v815
    %v1464 = vunpack.c.l.b16 %v120
    %v1465 = vunpack.c.h.b16 %v120
    %v1466 = vunpack.c.l.b16 %v121
    %v1467 = vunpack.c.h.b16 %v121
    %v1468 = vunpack.c.l.b16 %v122
    %v1469 = vunpack.c.h.b16 %v122
    %v1470 = vunpack.c.l.b16 %v123
    %v1471 = vunpack.c.h.b16 %v123
    %v1472 = vunpack.c.l.b16 %v124
    %v1473 = vunpack.c.h.b16 %v124
    %v1474 = vunpack.c.l.b16 %v125
    %v1475 = vunpack.c.h.b16 %v125
    %v1476 = vunpack.c.l.b16 %v126
    %v1477 = vunpack.c.h.b16 %v126
    %v1478 = vunpack.c.l.b16 %v127
    %v1479 = vunpack.c.h.b16 %v127
    %v1480 = vunpack.c.l.b16 %v128
    %v1481 = vunpack.c.h.b16 %v128
    %v1482 = vunpack.c.l.b16 %v129
    %v1483 = vunpack.c.h.b16 %v129
    %v1484 = vunpack.c.l.b16 %v130
    %v1485 = vunpack.c.h.b16 %v130
    %v1486 = vunpack.c.l.b16 %v131
    %v1487 = vunpack.c.h.b16 %v131
    %v1488 = vunpack.c.l.b16 %v132
    %v1489 = vunpack.c.h.b16 %v132
    %v1490 = vunpack.c.l.b16 %v133
    %v1491 = vunpack.c.h.b16 %v133
    %v1492 = vunpack.c.l.b16 %v134
    %v1493 = vunpack.c.h.b16 %v134
    %v1494 = vunpack.c.l.b16 %v135
    %v1495 = vunpack.c.h.b16 %v135
    %v1496 = vunpack.c.l.b16 %v136
    %v1497 = vunpack.c.h.b16 %v136
    %v1498 = vunpack.c.l.b16 %v137
    %v1499 = vunpack.c.h.b16 %v137
    %v1500 = vunpack.c.l.b16 %v138
    %v1501 = vunpack.c.h.b16 %v138
    %v1502 = vunpack.c.l.b16 %v139
    %v1503 = vunpack.c.h.b16 %v139
    %v1504 = vunpack.c.l.b16 %v140
    %v1505 = vunpack.c.h.b16 %v140
    %v1506 = vunpack.c.l.b16 %v141
    %v1507 = vunpack.c.h.b16 %v141
    %v1508 = vunpack.c.l.b16 %v142
    %v1509 = vunpack.c.h.b16 %v142
    %v1510 = vunpack.c.l.b16 %v143
    %v1511 = vunpack.c.h.b16 %v143
    %v1512 = vunpack.c.l.b16 %v144
    %v1513 = vunpack.c.h.b16 %v144
    %v1514 = vunpack.c.l.b16 %v145
    %v1515 = vunpack.c.h.b16 %v145
    %v1516 = vunpack.c.l.b16 %v146
    %v1517 = vunpack.c.h.b16 %v146
    %v1518 = vunpack.c.l.b16 %v147
    %v1519 = vunpack.c.h.b16 %v147
    %v1520 = vunpack.c.l.b16 %v148
    %v1521 = vunpack.c.h.b16 %v148
    %v1522 = vunpack.c.l.b16 %v149
    %v1523 = vunpack.c.h.b16 %v149
    %v1524 = vunpack.c.l.b16 %v150
    %v1525 = vunpack.c.h.b16 %v150
    %v1526 = vunpack.c.l.b16 %v151
    %v1527 = vunpack.c.h.b16 %v151
    %v1528 = vunpack.c.l.b16 %v152
    %v1529 = vunpack.c.h.b16 %v152
    %v1530 = vunpack.c.l.b16 %v153
    %v1531 = vunpack.c.h.b16 %v153
    %v1532 = vunpack.c.l.b16 %v154
    %v1533 = vunpack.c.h.b16 %v154
    %v1534 = vunpack.c.l.b16 %v155
    %v1535 = vunpack.c.h.b16 %v155
    %v1536 = vunpack.c.l.b16 %v156
    %v1537 = vunpack.c.h.b16 %v156
    %v1538 = vunpack.c.l.b16 %v157
    %v1539 = vunpack.c.h.b16 %v157
    %v1540 = vunpack.c.l.b16 %v158
    %v1541 = vunpack.c.h.b16 %v158
    %v1542 = vunpack.c.l.b16 %v159
    %v1543 = vunpack.c.h.b16 %v159
    %v1544 = vunpack.c.l.b16 %v160
    %v1545 = vunpack.c.h.b16 %v160
    %v1546 = vunpack.c.l.b16 %v161
    %v1547 = vunpack.c.h.b16 %v161
    %v1548 = vunpack.c.l.b16 %v162
    %v1549 = vunpack.c.h.b16 %v162
    %v1550 = vunpack.c.l.b16 %v163
    %v1551 = vunpack.c.h.b16 %v163
    %v1552 = vunpack.c.l.b16 %v164
    %v1553 = vunpack.c.h.b16 %v164
    %v1554 = vunpack.c.l.b16 %v165
    %v1555 = vunpack.c.h.b16 %v165
    %v1556 = vunpack.c.l.b16 %v166
    %v1557 = vunpack.c.h.b16 %v166
    %v1558 = vunpack.c.l.b16 %v167
    %v1559 = vunpack.c.h.b16 %v167
    %v1560 = vunpack.c.l.b16 %v168
    %v1561 = vunpack.c.h.b16 %v168
    %v1562 = vunpack.c.l.b16 %v169
    %v1563 = vunpack.c.h.b16 %v169
    %v1564 = vunpack.c.l.b16 %v170
    %v1565 = vunpack.c.h.b16 %v170
    %v1566 = vunpack.c.l.b16 %v171
    %v1567 = vunpack.c.h.b16 %v171
    %v1568 = vunpack.c.l.b16 %v172
    %v1569 = vunpack.c.h.b16 %v172
    %v1570 = vunpack.c.l.b16 %v173
    %v1571 = vunpack.c.h.b16 %v173
    %v1572 = vunpack.c.l.b16 %v174
    %v1573 = vunpack.c.h.b16 %v174
    %v1574 = vunpack.c.l.b16 %v175
    %v1575 = vunpack.c.h.b16 %v175
    %v1576 = vunpack.c.l.b16 %v176
    %v1577 = vunpack.c.h.b16 %v176
    %v1578 = vunpack.c.l.b16 %v177
    %v1579 = vunpack.c.h.b16 %v177
    %v1580 = vunpack.c.l.b16 %v178
    %v1581 = vunpack.c.h.b16 %v178
    %v1582 = vunpack.c.l.b16 %v179
    %v1583 = vunpack.c.h.b16 %v179
    %v1584 = vunpack.c.l.b16 %v180
    %v1585 = vunpack.c.h.b16 %v180
    %v1586 = vunpack.c.l.b16 %v181
    %v1587 = vunpack.c.h.b16 %v181
    %v1588 = vunpack.c.l.b16 %v182
    %v1589 = vunpack.c.h.b16 %v182
    %v1590 = vunpack.c.l.b16 %v183
    %v1591 = vunpack.c.h.b16 %v183
    %v1592 = vunpack.c.l.b16 %v184
    %v1593 = vunpack.c.h.b16 %v184
    %v1594 = vunpack.c.l.b16 %v185
    %v1595 = vunpack.c.h.b16 %v185
    %v1596 = vunpack.c.l.b16 %v186
    %v1597 = vunpack.c.h.b16 %v186
    %v1598 = vunpack.c.l.b16 %v187
    %v1599 = vunpack.c.h.b16 %v187
    %v1600 = vunpack.c.l.b16 %v188
    %v1601 = vunpack.c.h.b16 %v188
    %v1602 = vunpack.c.l.b16 %v189
    %v1603 = vunpack.c.h.b16 %v189
    %v1604 = vunpack.c.l.b16 %v190
    %v1605 = vunpack.c.h.b16 %v190
    %v1606 = vunpack.c.l.b16 %v191
    %v1607 = vunpack.c.h.b16 %v191
    %v1608 = vunpack.c.l.b16 %v192
    %v1609 = vunpack.c.h.b16 %v192
    %v1610 = vunpack.c.l.b16 %v193
    %v1611 = vunpack.c.h.b16 %v193
    %v1612 = vunpack.c.l.b16 %v194
    %v1613 = vunpack.c.h.b16 %v194
    %v1614 = vunpack.c.l.b16 %v195
    %v1615 = vunpack.c.h.b16 %v195
    %v1616 = vunpack.c.l.b16 %v196
    %v1617 = vunpack.c.h.b16 %v196
    %v1618 = vunpack.c.l.b16 %v197
    %v1619 = vunpack.c.h.b16 %v197
    %v1620 = vunpack.c.l.b16 %v198
    %v1621 = vunpack.c.h.b16 %v198
    %v1622 = vunpack.c.l.b16 %v199
    %v1623 = vunpack.c.h.b16 %v199
    %v1624 = vunpack.c.l.b16 %v200
    %v1625 = vunpack.c.h.b16 %v200
    %v1626 = vunpack.c.l.b16 %v201
    %v1627 = vunpack.c.h.b16 %v201
    %v1628 = vunpack.c.l.b16 %v202
    %v1629 = vunpack.c.h.b16 %v202
    %v1630 = vunpack.c.l.b16 %v203
    %v1631 = vunpack.c.h.b16 %v203
    %v1632 = vunpack.c.l.b16 %v204
    %v1633 = vunpack.c.h.b16 %v204
    %v1634 = vunpack.c.l.b16 %v205
    %v1635 = vunpack.c.h.b16 %v205
    %v1636 = vunpack.c.l.b16 %v206
    %v1637 = vunpack.c.h.b16 %v206
    %v1638 = vunpack.c.l.b16 %v207
    %v1639 = vunpack.c.h.b16 %v207
    %v1640 = vunpack.c.l.b16 %v208
    %v1641 = vunpack.c.h.b16 %v208
    %v1642 = vunpack.c.l.b16 %v209
    %v1643 = vunpack.c.h.b16 %v209
    %v1644 = vunpack.c.l.b16 %v210
    %v1645 = vunpack.c.h.b16 %v210
    %v1646 = vunpack.c.l.b16 %v211
    %v1647 = vunpack.c.h.b16 %v211
    %v1648 = vunpack.c.l.b16 %v212
    %v1649 = vunpack.c.h.b16 %v212
    %v1650 = vunpack.c.l.b16 %v213
    %v1651 = vunpack.c.h.b16 %v213
    %v1652 = vunpack.c.l.b16 %v214
    %v1653 = vunpack.c.h.b16 %v214
    %v1654 = vunpack.c.l.b16 %v215
    %v1655 = vunpack.c.h.b16 %v215
    %v1656 = vunpack.c.l.b16 %v216
    %v1657 = vunpack.c.h.b16 %v216
    %v1658 = vunpack.c.l.b16 %v217
    %v1659 = vunpack.c.h.b16 %v217
    %v1660 = vunpack.c.l.b16 %v218
    %v1661 = vunpack.c.h.b16 %v218
    %v1662 = vunpack.c.l.b16 %v219
    %v1663 = vunpack.c.h.b16 %v219
    %v1664 = vunpack.c.l.b16 %v220
    %v1665 = vunpack.c.h.b16 %v220
    %v1666 = vunpack.c.l.b16 %v221
    %v1667 = vunpack.c.h.b16 %v221
    %v1668 = vunpack.c.l.b16 %v222
    %v1669 = vunpack.c.h.b16 %v222
    %v1670 = vunpack.c.l.b16 %v223
    %v1671 = vunpack.c.h.b16 %v223
    %v1672 = vunpack.c.l.b16 %v224
    %v1673 = vunpack.c.h.b16 %v224
    %v1674 = vunpack.c.l.b16 %v225
    %v1675 = vunpack.c.h.b16 %v225
    %v1676 = vunpack.c.l.b16 %v226
    %v1677 = vunpack.c.h.b16 %v226
    %v1678 = vunpack.c.l.b16 %v227
    %v1679 = vunpack.c.h.b16 %v227
    %v1680 = vunpack.c.l.b16 %v228
    %v1681 = vunpack.c.h.b16 %v228
    %v1682 = vunpack.c.l.b16 %v229
    %v1683 = vunpack.c.h.b16 %v229
    %v1684 = vunpack.c.l.b16 %v230
    %v1685 = vunpack.c.h.b16 %v230
    %v1686 = vunpack.c.l.b16 %v231
    %v1687 = vunpack.c.h.b16 %v231
    %v1688 = vunpack.c.l.b16 %v232
    %v1689 = vunpack.c.h.b16 %v232
    %v1690 = vunpack.c.l.b16 %v233
    %v1691 = vunpack.c.h.b16 %v233
    %v1692 = vunpack.c.l.b16 %v234
    %v1693 = vunpack.c.h.b16 %v234
    %v1694 = vunpack.c.l.b16 %v235
    %v1695 = vunpack.c.h.b16 %v235
    %v1696 = vunpack.c.l.b16 %v236
    %v1697 = vunpack.c.h.b16 %v236
    %v1698 = vunpack.c.l.b16 %v237
    %v1699 = vunpack.c.h.b16 %v237
    %v1700 = vunpack.c.l.b16 %v238
    %v1701 = vunpack.c.h.b16 %v238
    %v1702 = vunpack.c.l.b16 %v239
    %v1703 = vunpack.c.h.b16 %v239
    %v1704 = vunpack.c.l.b16 %v240
    %v1705 = vunpack.c.h.b16 %v240
    %v1706 = vunpack.c.l.b16 %v241
    %v1707 = vunpack.c.h.b16 %v241
    %v1708 = vunpack.c.l.b16 %v242
    %v1709 = vunpack.c.h.b16 %v242
    %v1710 = vunpack.c.l.b16 %v243
    %v1711 = vunpack.c.h.b16 %v243
    %v1712 = vunpack.c.l.b16 %v244
    %v1713 = vunpack.c.h.b16 %v244
    %v1714 = vunpack.c.l.b16 %v245
    %v1715 = vunpack.c.h.b16 %v245
    %v1716 = vunpack.c.l.b16 %v246
    %v1717 = vunpack.c.h.b16 %v246
    %v1718 = vunpack.c.l.b16 %v247
    %v1719 = vunpack.c.h.b16 %v247
    %v1720 = vunpack.c.l.b16 %v248
    %v1721 = vunpack.c.h.b16 %v248
    %v1722 = vunpack.c.l.b16 %v249
    %v1723 = vunpack.c.h.b16 %v249
    %v1724 = vunpack.c.l.b16 %v250
    %v1725 = vunpack.c.h.b16 %v250
    %v1726 = vunpack.c.l.b16 %v251
    %v1727 = vunpack.c.h.b16 %v251
    %v1728 = vunpack.c.l.b16 %v252
    %v1729 = vunpack.c.h.b16 %v252
    %v1730 = vunpack.c.l.b16 %v253
    %v1731 = vunpack.c.h.b16 %v253
    %v1732 = vunpack.c.l.b16 %v254
    %v1733 = vunpack.c.h.b16 %v254
    %v1734 = vunpack.c.l.b16 %v255
    %v1735 = vunpack.c.h.b16 %v255
    %v1736 = vunpack.c.l.b16 %v256
    %v1737 = vunpack.c.h.b16 %v256
    %v1738 = vunpack.c.l.b16 %v257
    %v1739 = vunpack.c.h.b16 %v257
    %v1740 = vunpack.c.l.b16 %v258
    %v1741 = vunpack.c.h.b16 %v258
    %v1742 = vunpack.c.l.b16 %v259
    %v1743 = vunpack.c.h.b16 %v259
    %v1744 = vunpack.c.l.b16 %v260
    %v1745 = vunpack.c.h.b16 %v260
    %v1746 = vunpack.c.l.b16 %v261
    %v1747 = vunpack.c.h.b16 %v261
    %v1748 = vunpack.c.l.b16 %v262
    %v1749 = vunpack.c.h.b16 %v262
    %v1750 = vunpack.c.l.b16 %v263
    %v1751 = vunpack.c.h.b16 %v263
    %v1752 = vunpack.c.l.b16 %v264
    %v1753 = vunpack.c.h.b16 %v264
    %v1754 = vunpack.c.l.b16 %v265
    %v1755 = vunpack.c.h.b16 %v265
    %v1756 = vunpack.c.l.b16 %v266
    %v1757 = vunpack.c.h.b16 %v266
    %v1758 = vunpack.c.l.b16 %v267
    %v1759 = vunpack.c.h.b16 %v267
    %v1760 = vunpack.c.l.b16 %v268
    %v1761 = vunpack.c.h.b16 %v268
    %v1762 = vunpack.c.l.b16 %v269
    %v1763 = vunpack.c.h.b16 %v269
    %v1764 = vunpack.c.l.b16 %v270
    %v1765 = vunpack.c.h.b16 %v270
    %v1766 = vunpack.c.l.b16 %v271
    %v1767 = vunpack.c.h.b16 %v271
    %v1768 = vunpack.c.l.b16 %v272
    %v1769 = vunpack.c.h.b16 %v272
    %v1770 = vunpack.c.l.b16 %v273
    %v1771 = vunpack.c.h.b16 %v273
    %v1772 = vunpack.c.l.b16 %v274
    %v1773 = vunpack.c.h.b16 %v274
    %v1774 = vunpack.c.l.b16 %v275
    %v1775 = vunpack.c.h.b16 %v275
    %v1776 = vunpack.c.l.b16 %v276
    %v1777 = vunpack.c.h.b16 %v276
    %v1778 = vunpack.c.l.b16 %v277
    %v1779 = vunpack.c.h.b16 %v277
    %v1780 = vunpack.c.l.b16 %v278
    %v1781 = vunpack.c.h.b16 %v278
    %v1782 = vunpack.c.l.b16 %v279
    %v1783 = vunpack.c.h.b16 %v279
    %v1784 = vunpack.c.l.b16 %v280
    %v1785 = vunpack.c.h.b16 %v280
    %v1786 = vunpack.c.l.b16 %v281
    %v1787 = vunpack.c.h.b16 %v281
    %v1788 = vunpack.c.l.b16 %v282
    %v1789 = vunpack.c.h.b16 %v282
    %v1790 = vunpack.c.l.b16 %v283
    %v1791 = vunpack.c.h.b16 %v283
    %v1792 = vunpack.c.l.b16 %v284
    %v1793 = vunpack.c.h.b16 %v284
    %v1794 = vunpack.c.l.b16 %v285
    %v1795 = vunpack.c.h.b16 %v285
    %v1796 = vunpack.c.l.b16 %v286
    %v1797 = vunpack.c.h.b16 %v286
    %v1798 = vunpack.c.l.b16 %v287
    %v1799 = vunpack.c.h.b16 %v287
    %v1800 = vunpack.c.l.b16 %v288
    %v1801 = vunpack.c.h.b16 %v288
    %v1802 = vunpack.c.l.b16 %v289
    %v1803 = vunpack.c.h.b16 %v289
    %v1804 = vunpack.c.l.b16 %v290
    %v1805 = vunpack.c.h.b16 %v290
    %v1806 = vunpack.c.l.b16 %v291
    %v1807 = vunpack.c.h.b16 %v291
    %v1808 = vunpack.c.l.b16 %v292
    %v1809 = vunpack.c.h.b16 %v292
    %v1810 = vunpack.c.l.b16 %v293
    %v1811 = vunpack.c.h.b16 %v293
    %v1812 = vunpack.c.l.b16 %v294
    %v1813 = vunpack.c.h.b16 %v294
    %v1814 = vunpack.c.l.b16 %v295
    %v1815 = vunpack.c.h.b16 %v295
    %v1816 = vunpack.c.l.b16 %v296
    %v1817 = vunpack.c.h.b16 %v296
    %v1818 = vunpack.c.l.b16 %v297
    %v1819 = vunpack.c.h.b16 %v297
    %v1820 = vunpack.c.l.b16 %v298
    %v1821 = vunpack.c.h.b16 %v298
    %v1822 = vunpack.c.l.b16 %v299
    %v1823 = vunpack.c.h.b16 %v299
    %v1824 = vunpack.c.l.b16 %v300
    %v1825 = vunpack.c.h.b16 %v300
    %v1826 = vunpack.c.l.b16 %v301
    %v1827 = vunpack.c.h.b16 %v301
    %v1828 = vunpack.c.l.b16 %v302
    %v1829 = vunpack.c.h.b16 %v302
    %v1830 = vunpack.c.l.b16 %v303
    %v1831 = vunpack.c.h.b16 %v303
    %v1832 = vunpack.c.l.b16 %v304
    %v1833 = vunpack.c.h.b16 %v304
    %v1834 = vunpack.c.l.b16 %v305
    %v1835 = vunpack.c.h.b16 %v305
    %v1836 = vunpack.c.l.b16 %v306
    %v1837 = vunpack.c.h.b16 %v306
    %v1838 = vunpack.c.l.b16 %v307
    %v1839 = vunpack.c.h.b16 %v307
    %v1840 = vunpack.c.l.b16 %v308
    %v1841 = vunpack.c.h.b16 %v308
    %v1842 = vunpack.c.l.b16 %v309
    %v1843 = vunpack.c.h.b16 %v309
    %v1844 = vunpack.c.l.b16 %v310
    %v1845 = vunpack.c.h.b16 %v310
    %v1846 = vunpack.c.l.b16 %v311
    %v1847 = vunpack.c.h.b16 %v311
    %v1848 = vunpack.c.l.b16 %v312
    %v1849 = vunpack.c.h.b16 %v312
    %v1850 = vunpack.c.l.b16 %v313
    %v1851 = vunpack.c.h.b16 %v313
    %v1852 = vunpack.c.l.b16 %v314
    %v1853 = vunpack.c.h.b16 %v314
    %v1854 = vunpack.c.l.b16 %v315
    %v1855 = vunpack.c.h.b16 %v315
    %v1856 = vunpack.c.l.b16 %v316
    %v1857 = vunpack.c.h.b16 %v316
    %v1858 = vunpack.c.l.b16 %v317
    %v1859 = vunpack.c.h.b16 %v317
    %v1860 = vunpack.c.l.b16 %v318
    %v1861 = vunpack.c.h.b16 %v318
    %v1862 = vunpack.c.l.b16 %v319
    %v1863 = vunpack.c.h.b16 %v319
    %v1864 = vunpack.c.l.b16 %v320
    %v1865 = vunpack.c.h.b16 %v320
    %v1866 = vunpack.c.l.b16 %v321
    %v1867 = vunpack.c.h.b16 %v321
    %v1868 = vunpack.c.l.b16 %v322
    %v1869 = vunpack.c.h.b16 %v322
    %v1870 = vunpack.c.l.b16 %v323
    %v1871 = vunpack.c.h.b16 %v323
    %v1872 = vunpack.c.l.b16 %v324
    %v1873 = vunpack.c.h.b16 %v324
    %v1874 = vunpack.c.l.b16 %v325
    %v1875 = vunpack.c.h.b16 %v325
    %v1876 = vunpack.c.l.b16 %v326
    %v1877 = vunpack.c.h.b16 %v326
    %v1878 = vunpack.c.l.b16 %v327
    %v1879 = vunpack.c.h.b16 %v327
    %v1880 = vunpack.c.l.b16 %v328
    %v1881 = vunpack.c.h.b16 %v328
    %v1882 = vunpack.c.l.b16 %v329
    %v1883 = vunpack.c.h.b16 %v329
    %v1884 = vunpack.c.l.b16 %v330
    %v1885 = vunpack.c.h.b16 %v330
    %v1886 = vunpack.c.l.b16 %v331
    %v1887 = vunpack.c.h.b16 %v331
    %v1888 = vunpack.c.l.b16 %v332
    %v1889 = vunpack.c.h.b16 %v332
    %v1890 = vunpack.c.l.b16 %v333
    %v1891 = vunpack.c.h.b16 %v333
    %v1892 = vunpack.c.l.b16 %v334
    %v1893 = vunpack.c.h.b16 %v334
    %v1894 = vunpack.c.l.b16 %v335
    %v1895 = vunpack.c.h.b16 %v335
    %v1896 = vunpack.c.l.b16 %v336
    %v1897 = vunpack.c.h.b16 %v336
    %v1898 = vunpack.c.l.b16 %v337
    %v1899 = vunpack.c.h.b16 %v337
    %v1900 = vunpack.c.l.b16 %v338
    %v1901 = vunpack.c.h.b16 %v338
    %v1902 = vunpack.c.l.b16 %v339
    %v1903 = vunpack.c.h.b16 %v339
    %v1904 = vunpack.c.l.b16 %v340
    %v1905 = vunpack.c.h.b16 %v340
    %v1906 = vunpack.c.l.b16 %v341
    %v1907 = vunpack.c.h.b16 %v341
    %v1908 = vunpack.c.l.b16 %v342
    %v1909 = vunpack.c.h.b16 %v342
    %v1910 = vunpack.c.l.b16 %v343
    %v1911 = vunpack.c.h.b16 %v343
    %v1912 = vunpack.c.l.b16 %v344
    %v1913 = vunpack.c.h.b16 %v344
    %v1914 = vunpack.c.l.b16 %v345
    %v1915 = vunpack.c.h.b16 %v345
    %v1916 = vunpack.c.l.b16 %v346
    %v1917 = vunpack.c.h.b16 %v346
    %v1918 = vunpack.c.l.b16 %v347
    %v1919 = vunpack.c.h.b16 %v347
    %v1920 = vunpack.c.l.b16 %v348
    %v1921 = vunpack.c.h.b16 %v348
    %v1922 = vunpack.c.l.b16 %v349
    %v1923 = vunpack.c.h.b16 %v349
    %v1924 = vunpack.c.l.b16 %v350
    %v1925 = vunpack.c.h.b16 %v350
    %v1926 = vunpack.c.l.b16 %v351
    %v1927 = vunpack.c.h.b16 %v351
    %v1928 = vunpack.c.l.b16 %v352
    %v1929 = vunpack.c.h.b16 %v352
    %v1930 = vunpack.c.l.b16 %v353
    %v1931 = vunpack.c.h.b16 %v353
    %v1932 = vunpack.c.l.b16 %v354
    %v1933 = vunpack.c.h.b16 %v354
    %v1934 = vunpack.c.l.b16 %v355
    %v1935 = vunpack.c.h.b16 %v355
    %v1936 = vunpack.c.l.b16 %v356
    %v1937 = vunpack.c.h.b16 %v356
    %v1938 = vunpack.c.l.b16 %v357
    %v1939 = vunpack.c.h.b16 %v357
    %v1940 = vunpack.c.l.b16 %v358
    %v1941 = vunpack.c.h.b16 %v358
    %v1942 = vunpack.c.l.b16 %v359
    %v1943 = vunpack.c.h.b16 %v359
    %v1944 = vunpack.c.l.b16 %v360
    %v1945 = vunpack.c.h.b16 %v360
    %v1946 = vunpack.c.l.b16 %v361
    %v1947 = vunpack.c.h.b16 %v361
    %v1948 = vunpack.c.l.b16 %v362
    %v1949 = vunpack.c.h.b16 %v362
    %v1950 = vunpack.c.l.b16 %v363
    %v1951 = vunpack.c.h.b16 %v363
    %v1952 = vunpack.c.l.b16 %v364
    %v1953 = vunpack.c.h.b16 %v364
    %v1954 = vunpack.c.l.b16 %v365
    %v1955 = vunpack.c.h.b16 %v365
    %v1956 = vunpack.c.l.b16 %v366
    %v1957 = vunpack.c.h.b16 %v366
    %v1958 = vunpack.c.l.b16 %v367
    %v1959 = vunpack.c.h.b16 %v367
    %v1960 = vunpack.c.l.b16 %v368
    %v1961 = vunpack.c.h.b16 %v368
    %v1962 = vunpack.c.l.b16 %v369
    %v1963 = vunpack.c.h.b16 %v369
    %v1964 = vunpack.c.l.b16 %v370
    %v1965 = vunpack.c.h.b16 %v370
    %v1966 = vunpack.c.l.b16 %v371
    %v1967 = vunpack.c.h.b16 %v371
    %v1968 = vunpack.c.l.b16 %v372
    %v1969 = vunpack.c.h.b16 %v372
    %v1970 = vunpack.c.l.b16 %v373
    %v1971 = vunpack.c.h.b16 %v373
    %v1972 = vunpack.c.l.b16 %v374
    %v1973 = vunpack.c.h.b16 %v374
    %v1974 = vunpack.c.l.b16 %v375
    %v1975 = vunpack.c.h.b16 %v375
    %v1976 = vunpack.c.l.b16 %v376
    %v1977 = vunpack.c.h.b16 %v376
    %v1978 = vunpack.c.l.b16 %v377
    %v1979 = vunpack.c.h.b16 %v377
    %v1980 = vunpack.c.l.b16 %v378
    %v1981 = vunpack.c.h.b16 %v378
    %v1982 = vunpack.c.l.b16 %v379
    %v1983 = vunpack.c.h.b16 %v379
    %v1984 = vunpack.c.l.b16 %v380
    %v1985 = vunpack.c.h.b16 %v380
    %v1986 = vunpack.c.l.b16 %v381
    %v1987 = vunpack.c.h.b16 %v381
    %v1988 = vunpack.c.l.b16 %v382
    %v1989 = vunpack.c.h.b16 %v382
    %v1990 = vunpack.c.l.b16 %v383
    %v1991 = vunpack.c.h.b16 %v383
    %v1992 = vunpack.c.l.b16 %v384
    %v1993 = vunpack.c.h.b16 %v384
    %v1994 = vunpack.c.l.b16 %v385
    %v1995 = vunpack.c.h.b16 %v385
    %v1996 = vunpack.c.l.b16 %v386
    %v1997 = vunpack.c.h.b16 %v386
    %v1998 = vunpack.c.l.b16 %v387
    %v1999 = vunpack.c.h.b16 %v387
    %v2000 = vunpack.c.l.b16 %v388
    %v2001 = vunpack.c.h.b16 %v388
    %v2002 = vunpack.c.l.b16 %v389
    %v2003 = vunpack.c.h.b16 %v389
    %v2004 = vunpack.c.l.b16 %v390
    %v2005 = vunpack.c.h.b16 %v390
    %v2006 = vunpack.c.l.b16 %v391
    %v2007 = vunpack.c.h.b16 %v391
    %v2008 = vunpack.c.l.b16 %v392
    %v2009 = vunpack.c.h.b16 %v392
    %v2010 = vunpack.c.l.b16 %v393
    %v2011 = vunpack.c.h.b16 %v393
    %v2012 = vunpack.c.l.b16 %v394
    %v2013 = vunpack.c.h.b16 %v394
    %v2014 = vunpack.c.l.b16 %v395
    %v2015 = vunpack.c.h.b16 %v395
    %v2016 = vunpack.c.l.b16 %v396
    %v2017 = vunpack.c.h.b16 %v396
    %v2018 = vunpack.c.l.b16 %v397
    %v2019 = vunpack.c.h.b16 %v397
    %v2020 = vunpack.c.l.b16 %v398
    %v2021 = vunpack.c.h.b16 %v398
    %v2022 = vunpack.c.l.b16 %v399
    %v2023 = vunpack.c.h.b16 %v399
    %v2024 = vunpack.c.l.b16 %v400
    %v2025 = vunpack.c.h.b16 %v400
    %v2026 = vunpack.c.l.b16 %v401
    %v2027 = vunpack.c.h.b16 %v401
    %v2028 = vunpack.c.l.b16 %v402
    %v2029 = vunpack.c.h.b16 %v402
    %v2030 = vunpack.c.l.b16 %v403
    %v2031 = vunpack.c.h.b16 %v403
    %v2032 = vunpack.c.l.b16 %v404
    %v2033 = vunpack.c.h.b16 %v404
    %v2034 = vunpack.c.l.b16 %v405
    %v2035 = vunpack.c.h.b16 %v405
    %v2036 = vunpack.c.l.b16 %v406
    %v2037 = vunpack.c.h.b16 %v406
    %v2038 = vunpack.c.l.b16 %v407
    %v2039 = vunpack.c.h.b16 %v407
    %v2040 = vunpack.c.l.b16 %v408
    %v2041 = vunpack.c.h.b16 %v408
    %v2042 = vunpack.c.l.b16 %v409
    %v2043 = vunpack.c.h.b16 %v409
    %v2044 = vunpack.c.l.b16 %v410
    %v2045 = vunpack.c.h.b16 %v410
    %v2046 = vunpack.c.l.b16 %v411
    %v2047 = vunpack.c.h.b16 %v411
    %v2048 = vunpack.c.l.b16 %v412
    %v2049 = vunpack.c.h.b16 %v412
    %v2050 = vunpack.c.l.b16 %v413
    %v2051 = vunpack.c.h.b16 %v413
    %v2052 = vunpack.c.l.b16 %v414
    %v2053 = vunpack.c.h.b16 %v414
    %v2054 = vunpack.c.l.b16 %v415
    %v2055 = vunpack.c.h.b16 %v415
    %v2056 = vunpack.c.l.b16 %v416
    %v2057 = vunpack.c.h.b16 %v416
    %v2058 = vunpack.c.l.b16 %v417
    %v2059 = vunpack.c.h.b16 %v417
    %v2060 = vunpack.c.l.b16 %v418
    %v2061 = vunpack.c.h.b16 %v418
    %v2062 = vunpack.c.l.b16 %v419
    %v2063 = vunpack.c.h.b16 %v419
    %v2064 = vunpack.c.l.b16 %v420
    %v2065 = vunpack.c.h.b16 %v420
    %v2066 = vunpack.c.l.b16 %v421
    %v2067 = vunpack.c.h.b16 %v421
    %v2068 = vunpack.c.l.b16 %v422
    %v2069 = vunpack.c.h.b16 %v422
    %v2070 = vunpack.c.l.b16 %v423
    %v2071 = vunpack.c.h.b16 %v423
    %v2072 = vunpack.c.l.b16 %v424
    %v2073 = vunpack.c.h.b16 %v424
    %v2074 = vunpack.c.l.b16 %v425
    %v2075 = vunpack.c.h.b16 %v425
    %v2076 = vunpack.c.l.b16 %v426
    %v2077 = vunpack.c.h.b16 %v426
    %v2078 = vunpack.c.l.b16 %v427
    %v2079 = vunpack.c.h.b16 %v427
    %v2080 = vunpack.c.l.b16 %v428
    %v2081 = vunpack.c.h.b16 %v428
    %v2082 = vunpack.c.l.b16 %v429
    %v2083 = vunpack.c.h.b16 %v429
    %v2084 = vunpack.c.l.b16 %v430
    %v2085 = vunpack.c.h.b16 %v430
    %v2086 = vunpack.c.l.b16 %v431
    %v2087 = vunpack.c.h.b16 %v431
    %v2088 = vunpack.c.l.b16 %v432
    %v2089 = vunpack.c.h.b16 %v432
    %v2090 = vunpack.c.l.b16 %v433
    %v2091 = vunpack.c.h.b16 %v433
    %v2092 = vunpack.c.l.b16 %v434
    %v2093 = vunpack.c.h.b16 %v434
    %v2094 = vunpack.c.l.b16 %v435
    %v2095 = vunpack.c.h.b16 %v435
    %v2096 = vunpack.c.l.b16 %v436
    %v2097 = vunpack.c.h.b16 %v436
    %v2098 = vunpack.c.l.b16 %v437
    %v2099 = vunpack.c.h.b16 %v437
    %v2100 = vunpack.c.l.b16 %v438
    %v2101 = vunpack.c.h.b16 %v438
    %v2102 = vunpack.c.l.b16 %v439
    %v2103 = vunpack.c.h.b16 %v439
    %v2104 = vunpack.c.l.b16 %v440
    %v2105 = vunpack.c.h.b16 %v440
    %v2106 = vunpack.c.l.b16 %v441
    %v2107 = vunpack.c.h.b16 %v441
    %v2108 = vunpack.c.l.b16 %v442
    %v2109 = vunpack.c.h.b16 %v442
    %v2110 = vunpack.c.l.b16 %v443
    %v2111 = vunpack.c.h.b16 %v443
    %v2112 = vunpack.c.l.b16 %v444
    %v2113 = vunpack.c.h.b16 %v444
    %v2114 = vunpack.c.l.b16 %v445
    %v2115 = vunpack.c.h.b16 %v445
    %v2116 = vunpack.c.l.b16 %v446
    %v2117 = vunpack.c.h.b16 %v446
    %v2118 = vunpack.c.l.b16 %v447
    %v2119 = vunpack.c.h.b16 %v447
    %v2120 = vunpack.c.l.b16 %v448
    %v2121 = vunpack.c.h.b16 %v448
    %v2122 = vunpack.c.l.b16 %v449
    %v2123 = vunpack.c.h.b16 %v449
    %v2124 = vunpack.c.l.b16 %v450
    %v2125 = vunpack.c.h.b16 %v450
    %v2126 = vunpack.c.l.b16 %v451
    %v2127 = vunpack.c.h.b16 %v451
    %v2128 = vunpack.c.l.b16 %v452
    %v2129 = vunpack.c.h.b16 %v452
    %v2130 = vunpack.c.l.b16 %v453
    %v2131 = vunpack.c.h.b16 %v453
    %v2132 = vunpack.c.l.b16 %v454
    %v2133 = vunpack.c.h.b16 %v454
    %v2134 = vunpack.c.l.b16 %v455
    %v2135 = vunpack.c.h.b16 %v455
    %v2136 = vunpack.c.l.b16 %v456
    %v2137 = vunpack.c.h.b16 %v456
    %v2138 = vunpack.c.l.b16 %v457
    %v2139 = vunpack.c.h.b16 %v457
    %v2140 = vunpack.c.l.b16 %v458
    %v2141 = vunpack.c.h.b16 %v458
    %v2142 = vunpack.c.l.b16 %v459
    %v2143 = vunpack.c.h.b16 %v459
    %v2144 = vunpack.c.l.b16 %v460
    %v2145 = vunpack.c.h.b16 %v460
    %v2146 = vunpack.c.l.b16 %v461
    %v2147 = vunpack.c.h.b16 %v461
    %v2148 = vunpack.c.l.b16 %v462
    %v2149 = vunpack.c.h.b16 %v462
    %v2150 = vunpack.c.l.b16 %v463
    %v2151 = vunpack.c.h.b16 %v463
    %v2152 = vunpack.c.l.b16 %v464
    %v2153 = vunpack.c.h.b16 %v464
    %v2154 = vunpack.c.l.b16 %v465
    %v2155 = vunpack.c.h.b16 %v465
    %v2156 = vunpack.c.l.b16 %v466
    %v2157 = vunpack.c.h.b16 %v466
    %v2158 = vunpack.c.l.b16 %v467
    %v2159 = vunpack.c.h.b16 %v467
    %v2160 = vunpack.c.l.b16 %v468
    %v2161 = vunpack.c.h.b16 %v468
    %v2162 = vunpack.c.l.b16 %v469
    %v2163 = vunpack.c.h.b16 %v469
    %v2164 = vunpack.c.l.b16 %v470
    %v2165 = vunpack.c.h.b16 %v470
    %v2166 = vunpack.c.l.b16 %v471
    %v2167 = vunpack.c.h.b16 %v471
    %v2168 = vunpack.c.l.b16 %v472
    %v2169 = vunpack.c.h.b16 %v472
    %v2170 = vunpack.c.l.b16 %v473
    %v2171 = vunpack.c.h.b16 %v473
    %v2172 = vunpack.c.l.b16 %v474
    %v2173 = vunpack.c.h.b16 %v474
    %v2174 = vunpack.c.l.b16 %v475
    %v2175 = vunpack.c.h.b16 %v475
    %v2176 = vunpack.c.l.b16 %v476
    %v2177 = vunpack.c.h.b16 %v476
    %v2178 = vunpack.c.l.b16 %v477
    %v2179 = vunpack.c.h.b16 %v477
    %v2180 = vunpack.c.l.b16 %v478
    %v2181 = vunpack.c.h.b16 %v478
    %v2182 = vunpack.c.l.b16 %v479
    %v2183 = vunpack.c.h.b16 %v479
    %v2184 = vunpack.c.l.b16 %v480
    %v2185 = vunpack.c.h.b16 %v480
    %v2186 = vunpack.c.l.b16 %v481
    %v2187 = vunpack.c.h.b16 %v481
    %v2188 = vunpack.c.l.b16 %v482
    %v2189 = vunpack.c.h.b16 %v482
    %v2190 = vunpack.c.l.b16 %v483
    %v2191 = vunpack.c.h.b16 %v483
    %v2192 = vunpack.c.l.b16 %v484
    %v2193 = vunpack.c.h.b16 %v484
    %v2194 = vunpack.c.l.b16 %v485
    %v2195 = vunpack.c.h.b16 %v485
    %v2196 = vunpack.c.l.b16 %v486
    %v2197 = vunpack.c.h.b16 %v486
    %v2198 = vunpack.c.l.b16 %v487
    %v2199 = vunpack.c.h.b16 %v487
    %v2200 = vunpack.c.l.b16 %v488
    %v2201 = vunpack.c.h.b16 %v488
    %v2202 = vunpack.c.l.b16 %v489
    %v2203 = vunpack.c.h.b16 %v489
    %v2204 = vunpack.c.l.b16 %v490
    %v2205 = vunpack.c.h.b16 %v490
    %v2206 = vunpack.c.l.b16 %v491
    %v2207 = vunpack.c.h.b16 %v491
    %v2208 = vunpack.c.l.b16 %v492
    %v2209 = vunpack.c.h.b16 %v492
    %v2210 = vunpack.c.l.b16 %v493
    %v2211 = vunpack.c.h.b16 %v493
    %v2212 = vunpack.c.l.b16 %v494
    %v2213 = vunpack.c.h.b16 %v494
    %v2214 = vunpack.c.l.b16 %v495
    %v2215 = vunpack.c.h.b16 %v495
    %v2216 = vunpack.c.l.b16 %v496
    %v2217 = vunpack.c.h.b16 %v496
    %v2218 = vunpack.c.l.b16 %v497
    %v2219 = vunpack.c.h.b16 %v497
    %v2220 = vunpack.c.l.b16 %v498
    %v2221 = vunpack.c.h.b16 %v498
    %v2222 = vunpack.c.l.b16 %v499
    %v2223 = vunpack.c.h.b16 %v499
    %v2224 = vunpack.c.l.b16 %v500
    %v2225 = vunpack.c.h.b16 %v500
    %v2226 = vunpack.c.l.b16 %v501
    %v2227 = vunpack.c.h.b16 %v501
    %v2228 = vunpack.c.l.b16 %v502
    %v2229 = vunpack.c.h.b16 %v502
    %v2230 = vunpack.c.l.b16 %v503
    %v2231 = vunpack.c.h.b16 %v503
    %v2232 = vunpack.c.l.b16 %v504
    %v2233 = vunpack.c.h.b16 %v504
    %v2234 = vunpack.c.l.b16 %v505
    %v2235 = vunpack.c.h.b16 %v505
    %v2236 = vunpack.c.l.b16 %v506
    %v2237 = vunpack.c.h.b16 %v506
    %v2238 = vunpack.c.l.b16 %v507
    %v2239 = vunpack.c.h.b16 %v507
    %v2240 = vunpack.c.l.b16 %v508
    %v2241 = vunpack.c.h.b16 %v508
    %v2242 = vunpack.c.l.b16 %v509
    %v2243 = vunpack.c.h.b16 %v509
    %v2244 = vunpack.c.l.b16 %v510
    %v2245 = vunpack.c.h.b16 %v510
    %v2246 = vunpack.c.l.b16 %v511
    %v2247 = vunpack.c.h.b16 %v511
    %v2248 = vunpack.c.l.b16 %v512
    %v2249 = vunpack.c.h.b16 %v512
    %v2250 = vunpack.c.l.b16 %v513
    %v2251 = vunpack.c.h.b16 %v513
    %v2252 = vunpack.c.l.b16 %v514
    %v2253 = vunpack.c.h.b16 %v514
    %v2254 = vunpack.c.l.b16 %v515
    %v2255 = vunpack.c.h.b16 %v515
    %v2256 = vunpack.c.l.b16 %v516
    %v2257 = vunpack.c.h.b16 %v516
    %v2258 = vunpack.c.l.b16 %v517
    %v2259 = vunpack.c.h.b16 %v517
    %v2260 = vunpack.c.l.b16 %v518
    %v2261 = vunpack.c.h.b16 %v518
    %v2262 = vunpack.c.l.b16 %v519
    %v2263 = vunpack.c.h.b16 %v519
    %v2264 = vunpack.c.l.b16 %v520
    %v2265 = vunpack.c.h.b16 %v520
    %v2266 = vunpack.c.l.b16 %v521
    %v2267 = vunpack.c.h.b16 %v521
    %v2268 = vunpack.c.l.b16 %v522
    %v2269 = vunpack.c.h.b16 %v522
    %v2270 = vunpack.c.l.b16 %v523
    %v2271 = vunpack.c.h.b16 %v523
    %v2272 = vunpack.c.l.b16 %v524
    %v2273 = vunpack.c.h.b16 %v524
    %v2274 = vunpack.c.l.b16 %v525
    %v2275 = vunpack.c.h.b16 %v525
    %v2276 = vunpack.c.l.b16 %v526
    %v2277 = vunpack.c.h.b16 %v526
    %v2278 = vunpack.c.l.b16 %v527
    %v2279 = vunpack.c.h.b16 %v527
    %v2280 = vunpack.c.l.b16 %v528
    %v2281 = vunpack.c.h.b16 %v528
    %v2282 = vunpack.c.l.b16 %v529
    %v2283 = vunpack.c.h.b16 %v529
    %v2284 = vunpack.c.l.b16 %v530
    %v2285 = vunpack.c.h.b16 %v530
    %v2286 = vunpack.c.l.b16 %v531
    %v2287 = vunpack.c.h.b16 %v531
    %v2288 = vunpack.c.l.b16 %v532
    %v2289 = vunpack.c.h.b16 %v532
    %v2290 = vunpack.c.l.b16 %v533
    %v2291 = vunpack.c.h.b16 %v533
    %v2292 = vunpack.c.l.b16 %v534
    %v2293 = vunpack.c.h.b16 %v534
    %v2294 = vunpack.c.l.b16 %v535
    %v2295 = vunpack.c.h.b16 %v535
    %v2296 = vunpack.c.l.b16 %v536
    %v2297 = vunpack.c.h.b16 %v536
    %v2298 = vunpack.c.l.b16 %v537
    %v2299 = vunpack.c.h.b16 %v537
    %v2300 = vunpack.c.l.b16 %v538
    %v2301 = vunpack.c.h.b16 %v538
    %v2302 = vunpack.c.l.b16 %v539
    %v2303 = vunpack.c.h.b16 %v539
    %v2304 = vunpack.c.l.b16 %v540
    %v2305 = vunpack.c.h.b16 %v540
    %v2306 = vunpack.c.l.b16 %v541
    %v2307 = vunpack.c.h.b16 %v541
    %v2308 = vunpack.c.l.b16 %v542
    %v2309 = vunpack.c.h.b16 %v542
    %v2310 = vunpack.c.l.b16 %v543
    %v2311 = vunpack.c.h.b16 %v543
    %v2312 = vunpack.c.l.b16 %v544
    %v2313 = vunpack.c.h.b16 %v544
    %v2314 = vunpack.c.l.b16 %v545
    %v2315 = vunpack.c.h.b16 %v545
    %v2316 = vunpack.c.l.b16 %v546
    %v2317 = vunpack.c.h.b16 %v546
    %v2318 = vunpack.c.l.b16 %v547
    %v2319 = vunpack.c.h.b16 %v547
    %v2320 = vunpack.c.l.b16 %v548
    %v2321 = vunpack.c.h.b16 %v548
    %v2322 = vunpack.c.l.b16 %v549
    %v2323 = vunpack.c.h.b16 %v549
    %v2324 = vunpack.c.l.b16 %v550
    %v2325 = vunpack.c.h.b16 %v550
    %v2326 = vunpack.c.l.b16 %v551
    %v2327 = vunpack.c.h.b16 %v551
    %v2328 = vunpack.c.l.b16 %v552
    %v2329 = vunpack.c.h.b16 %v552
    %v2330 = vunpack.c.l.b16 %v553
    %v2331 = vunpack.c.h.b16 %v553
    %v2332 = vunpack.c.l.b16 %v554
    %v2333 = vunpack.c.h.b16 %v554
    %v2334 = vunpack.c.l.b16 %v555
    %v2335 = vunpack.c.h.b16 %v555
    %v2336 = vunpack.c.l.b16 %v556
    %v2337 = vunpack.c.h.b16 %v556
    %v2338 = vunpack.c.l.b16 %v557
    %v2339 = vunpack.c.h.b16 %v557
    %v2340 = vunpack.c.l.b16 %v558
    %v2341 = vunpack.c.h.b16 %v558
    %v2342 = vunpack.c.l.b16 %v559
    %v2343 = vunpack.c.h.b16 %v559
    %v2344 = vunpack.c.l.b16 %v560
    %v2345 = vunpack.c.h.b16 %v560
    %v2346 = vunpack.c.l.b16 %v561
    %v2347 = vunpack.c.h.b16 %v561
    %v2348 = vunpack.c.l.b16 %v562
    %v2349 = vunpack.c.h.b16 %v562
    %v2350 = vunpack.c.l.b16 %v563
    %v2351 = vunpack.c.h.b16 %v563
    %v2352 = vunpack.c.l.b16 %v564
    %v2353 = vunpack.c.h.b16 %v564
    %v2354 = vunpack.c.l.b16 %v565
    %v2355 = vunpack.c.h.b16 %v565
    %v2356 = vunpack.c.l.b16 %v566
    %v2357 = vunpack.c.h.b16 %v566
    %v2358 = vunpack.c.l.b16 %v567
    %v2359 = vunpack.c.h.b16 %v567
    %v2360 = vunpack.c.l.b16 %v568
    %v2361 = vunpack.c.h.b16 %v568
    %v2362 = vunpack.c.l.b16 %v569
    %v2363 = vunpack.c.h.b16 %v569
    %v2364 = vunpack.c.l.b16 %v570
    %v2365 = vunpack.c.h.b16 %v570
    %v2366 = vunpack.c.l.b16 %v571
    %v2367 = vunpack.c.h.b16 %v571
    %v2368 = vunpack.c.l.b16 %v572
    %v2369 = vunpack.c.h.b16 %v572
    %v2370 = vunpack.c.l.b16 %v573
    %v2371 = vunpack.c.h.b16 %v573
    %v2372 = vunpack.c.l.b16 %v574
    %v2373 = vunpack.c.h.b16 %v574
    %v2374 = vunpack.c.l.b16 %v575
    %v2375 = vunpack.c.h.b16 %v575
    %v2376 = vunpack.c.l.b16 %v576
    %v2377 = vunpack.c.h.b16 %v576
    %v2378 = vunpack.c.l.b16 %v577
    %v2379 = vunpack.c.h.b16 %v577
    %v2380 = vunpack.c.l.b16 %v578
    %v2381 = vunpack.c.h.b16 %v578
    %v2382 = vunpack.c.l.b16 %v579
    %v2383 = vunpack.c.h.b16 %v579
    %v2384 = vunpack.c.l.b16 %v580
    %v2385 = vunpack.c.h.b16 %v580
    %v2386 = vunpack.c.l.b16 %v581
    %v2387 = vunpack.c.h.b16 %v581
    %v2388 = vunpack.c.l.b16 %v582
    %v2389 = vunpack.c.h.b16 %v582
    %v2390 = vunpack.c.l.b16 %v583
    %v2391 = vunpack.c.h.b16 %v583
    %v2392 = vunpack.c.l.b16 %v584
    %v2393 = vunpack.c.h.b16 %v584
    %v2394 = vunpack.c.l.b16 %v585
    %v2395 = vunpack.c.h.b16 %v585
    %v2396 = vunpack.c.l.b16 %v586
    %v2397 = vunpack.c.h.b16 %v586
    %v2398 = vunpack.c.l.b16 %v587
    %v2399 = vunpack.c.h.b16 %v587
    %v2400 = vunpack.c.l.b16 %v588
    %v2401 = vunpack.c.h.b16 %v588
    %v2402 = vunpack.c.l.b16 %v589
    %v2403 = vunpack.c.h.b16 %v589
    %v2404 = vunpack.c.l.b16 %v590
    %v2405 = vunpack.c.h.b16 %v590
    %v2406 = vunpack.c.l.b16 %v591
    %v2407 = vunpack.c.h.b16 %v591
    %v2408 = vunpack.c.l.b16 %v592
    %v2409 = vunpack.c.h.b16 %v592
    %v2410 = vunpack.c.l.b16 %v593
    %v2411 = vunpack.c.h.b16 %v593
    %v2412 = vunpack.c.l.b16 %v594
    %v2413 = vunpack.c.h.b16 %v594
    %v2414 = vunpack.c.l.b16 %v595
    %v2415 = vunpack.c.h.b16 %v595
    %v2416 = vunpack.c.l.b16 %v596
    %v2417 = vunpack.c.h.b16 %v596
    %v2418 = vunpack.c.l.b16 %v597
    %v2419 = vunpack.c.h.b16 %v597
    %v2420 = vunpack.c.l.b16 %v598
    %v2421 = vunpack.c.h.b16 %v598
    %v2422 = vunpack.c.l.b16 %v599
    %v2423 = vunpack.c.h.b16 %v599
    %v2424 = vunpack.c.l.b16 %v600
    %v2425 = vunpack.c.h.b16 %v600
    %v2426 = vunpack.c.l.b16 %v601
    %v2427 = vunpack.c.h.b16 %v601
    %v2428 = vunpack.c.l.b16 %v602
    %v2429 = vunpack.c.h.b16 %v602
    %v2430 = vunpack.c.l.b16 %v603
    %v2431 = vunpack.c.h.b16 %v603
    %v2432 = vunpack.c.l.b16 %v604
    %v2433 = vunpack.c.h.b16 %v604
    %v2434 = vunpack.c.l.b16 %v605
    %v2435 = vunpack.c.h.b16 %v605
    %v2436 = vunpack.c.l.b16 %v606
    %v2437 = vunpack.c.h.b16 %v606
    %v2438 = vunpack.c.l.b16 %v607
    %v2439 = vunpack.c.h.b16 %v607
    %v2440 = vunpack.c.l.b16 %v608
    %v2441 = vunpack.c.h.b16 %v608
    %v2442 = vunpack.c.l.b16 %v609
    %v2443 = vunpack.c.h.b16 %v609
    %v2444 = vunpack.c.l.b16 %v610
    %v2445 = vunpack.c.h.b16 %v610
    %v2446 = vunpack.c.l.b16 %v611
    %v2447 = vunpack.c.h.b16 %v611
    %v2448 = vunpack.c.l.b16 %v612
    %v2449 = vunpack.c.h.b16 %v612
    %v2450 = vunpack.c.l.b16 %v613
    %v2451 = vunpack.c.h.b16 %v613
    %v2452 = vunpack.c.l.b16 %v614
    %v2453 = vunpack.c.h.b16 %v614
    %v2454 = vunpack.c.l.b16 %v615
    %v2455 = vunpack.c.h.b16 %v615
    %v2456 = vunpack.c.l.b16 %v616
    %v2457 = vunpack.c.h.b16 %v616
    %v2458 = vunpack.c.l.b16 %v617
    %v2459 = vunpack.c.h.b16 %v617
    %v2460 = vunpack.c.l.b16 %v618
    %v2461 = vunpack.c.h.b16 %v618
    %v2462 = vunpack.c.l.b16 %v619
    %v2463 = vunpack.c.h.b16 %v619
    %v2464 = vunpack.c.l.b16 %v620
    %v2465 = vunpack.c.h.b16 %v620
    %v2466 = vunpack.c.l.b16 %v621
    %v2467 = vunpack.c.h.b16 %v621
    %v2468 = vunpack.c.l.b16 %v622
    %v2469 = vunpack.c.h.b16 %v622
    %v2470 = vunpack.c.l.b16 %v623
    %v2471 = vunpack.c.h.b16 %v623
    %v2472 = vunpack.c.l.b16 %v624
    %v2473 = vunpack.c.h.b16 %v624
    %v2474 = vunpack.c.l.b16 %v625
    %v2475 = vunpack.c.h.b16 %v625
    %v2476 = vunpack.c.l.b16 %v626
    %v2477 = vunpack.c.h.b16 %v626
    %v2478 = vunpack.c.l.b16 %v627
    %v2479 = vunpack.c.h.b16 %v627
    %v2480 = vunpack.c.l.b16 %v628
    %v2481 = vunpack.c.h.b16 %v628
    %v2482 = vunpack.c.l.b16 %v629
    %v2483 = vunpack.c.h.b16 %v629
    %v2484 = vunpack.c.l.b16 %v630
    %v2485 = vunpack.c.h.b16 %v630
    %v2486 = vunpack.c.l.b16 %v631
    %v2487 = vunpack.c.h.b16 %v631
    %v2488 = vpack.c.b16 %v1472, %v1464
    %v2489 = vpack.c.b16 %v1473, %v1465
    %v2490 = vpack.c.b16 %v1474, %v1466
    %v2491 = vpack.c.b16 %v1475, %v1467
    %v2492 = vpack.c.b16 %v1476, %v1468
    %v2493 = vpack.c.b16 %v1477, %v1469
    %v2494 = vpack.c.b16 %v1478, %v1470
    %v2495 = vpack.c.b16 %v1479, %v1471
    %v2496 = vpack.c.b16 %v1488, %v1480
    %v2497 = vpack.c.b16 %v1489, %v1481
    %v2498 = vpack.c.b16 %v1490, %v1482
    %v2499 = vpack.c.b16 %v1491, %v1483
    %v2500 = vpack.c.b16 %v1492, %v1484
    %v2501 = vpack.c.b16 %v1493, %v1485
    %v2502 = vpack.c.b16 %v1494, %v1486
    %v2503 = vpack.c.b16 %v1495, %v1487
    %v2504 = vpack.c.b16 %v1504, %v1496
    %v2505 = vpack.c.b16 %v1505, %v1497
    %v2506 = vpack.c.b16 %v1506, %v1498
    %v2507 = vpack.c.b16 %v1507, %v1499
    %v2508 = vpack.c.b16 %v1508, %v1500
    %v2509 = vpack.c.b16 %v1509, %v1501
    %v2510 = vpack.c.b16 %v1510, %v1502
    %v2511 = vpack.c.b16 %v1511, %v1503
    %v2512 = vpack.c.b16 %v1520, %v1512
    %v2513 = vpack.c.b16 %v1521, %v1513
    %v2514 = vpack.c.b16 %v1522, %v1514
    %v2515 = vpack.c.b16 %v1523, %v1515
    %v2516 = vpack.c.b16 %v1524, %v1516
    %v2517 = vpack.c.b16 %v1525, %v1517
    %v2518 = vpack.c.b16 %v1526, %v1518
    %v2519 = vpack.c.b16 %v1527, %v1519
    %v2520 = vpack.c.b16 %v1536, %v1528
    %v2521 = vpack.c.b16 %v1537, %v1529
    %v2522 = vpack.c.b16 %v1538, %v1530
    %v2523 = vpack.c.b16 %v1539, %v1531
    %v2524 = vpack.c.b16 %v1540, %v1532
    %v2525 = vpack.c.b16 %v1541, %v1533
    %v2526 = vpack.c.b16 %v1542, %v1534
    %v2527 = vpack.c.b16 %v1543, %v1535
    %v2528 = vpack.c.b16 %v1552, %v1544
    %v2529 = vpack.c.b16 %v1553, %v1545
    %v2530 = vpack.c.b16 %v1554, %v1546
    %v2531 = vpack.c.b16 %v1555, %v1547
    %v2532 = vpack.c.b16 %v1556, %v1548
    %v2533 = vpack.c.b16 %v1557, %v1549
    %v2534 = vpack.c.b16 %v1558, %v1550
    %v2535 = vpack.c.b16 %v1559, %v1551
    %v2536 = vpack.c.b16 %v1568, %v1560
    %v2537 = vpack.c.b16 %v1569, %v1561
    %v2538 = vpack.c.b16 %v1570, %v1562
    %v2539 = vpack.c.b16 %v1571, %v1563
    %v2540 = vpack.c.b16 %v1572, %v1564
    %v2541 = vpack.c.b16 %v1573, %v1565
    %v2542 = vpack.c.b16 %v1574, %v1566
    %v2543 = vpack.c.b16 %v1575, %v1567
    %v2544 = vpack.c.b16 %v1584, %v1576
    %v2545 = vpack.c.b16 %v1585, %v1577
    %v2546 = vpack.c.b16 %v1586, %v1578
    %v2547 = vpack.c.b16 %v1587, %v1579
    %v2548 = vpack.c.b16 %v1588, %v1580
    %v2549 = vpack.c.b16 %v1589, %v1581
    %v2550 = vpack.c.b16 %v1590, %v1582
    %v2551 = vpack.c.b16 %v1591, %v1583
    %v2552 = vpack.c.b16 %v1600, %v1592
    %v2553 = vpack.c.b16 %v1601, %v1593
    %v2554 = vpack.c.b16 %v1602, %v1594
    %v2555 = vpack.c.b16 %v1603, %v1595
    %v2556 = vpack.c.b16 %v1604, %v1596
    %v2557 = vpack.c.b16 %v1605, %v1597
    %v2558 = vpack.c.b16 %v1606, %v1598
    %v2559 = vpack.c.b16 %v1607, %v1599
    %v2560 = vpack.c.b16 %v1616, %v1608
    %v2561 = vpack.c.b16 %v1617, %v1609
    %v2562 = vpack.c.b16 %v1618, %v1610
    %v2563 = vpack.c.b16 %v1619, %v1611
    %v2564 = vpack.c.b16 %v1620, %v1612
    %v2565 = vpack.c.b16 %v1621, %v1613
    %v2566 = vpack.c.b16 %v1622, %v1614
    %v2567 = vpack.c.b16 %v1623, %v1615
    %v2568 = vpack.c.b16 %v1632, %v1624
    %v2569 = vpack.c.b16 %v1633, %v1625
    %v2570 = vpack.c.b16 %v1634, %v1626
    %v2571 = vpack.c.b16 %v1635, %v1627
    %v2572 = vpack.c.b16 %v1636, %v1628
    %v2573 = vpack.c.b16 %v1637, %v1629
    %v2574 = vpack.c.b16 %v1638, %v1630
    %v2575 = vpack.c.b16 %v1639, %v1631
    %v2576 = vpack.c.b16 %v1648, %v1640
    %v2577 = vpack.c.b16 %v1649, %v1641
    %v2578 = vpack.c.b16 %v1650, %v1642
    %v2579 = vpack.c.b16 %v1651, %v1643
    %v2580 = vpack.c.b16 %v1652, %v1644
    %v2581 = vpack.c.b16 %v1653, %v1645
    %v2582 = vpack.c.b16 %v1654, %v1646
    %v2583 = vpack.c.b16 %v1655, %v1647
    %v2584 = vpack.c.b16 %v1664, %v1656
    %v2585 = vpack.c.b16 %v1665, %v1657
    %v2586 = vpack.c.b16 %v1666, %v1658
    %v2587 = vpack.c.b16 %v1667, %v1659
    %v2588 = vpack.c.b16 %v1668, %v1660
    %v2589 = vpack.c.b16 %v1669, %v1661
    %v2590 = vpack.c.b16 %v1670, %v1662
    %v2591 = vpack.c.b16 %v1671, %v1663
    %v2592 = vpack.c.b16 %v1680, %v1672
    %v2593 = vpack.c.b16 %v1681, %v1673
    %v2594 = vpack.c.b16 %v1682, %v1674
    %v2595 = vpack.c.b16 %v1683, %v1675
    %v2596 = vpack.c.b16 %v1684, %v1676
    %v2597 = vpack.c.b16 %v1685, %v1677
    %v2598 = vpack.c.b16 %v1686, %v1678
    %v2599 = vpack.c.b16 %v1687, %v1679
    %v2600 = vpack.c.b16 %v1696, %v1688
    %v2601 = vpack.c.b16 %v1697, %v1689
    %v2602 = vpack.c.b16 %v1698, %v1690
    %v2603 = vpack.c.b16 %v1699, %v1691
    %v2604 = vpack.c.b16 %v1700, %v1692
    %v2605 = vpack.c.b16 %v1701, %v1693
    %v2606 = vpack.c.b16 %v1702, %v1694
    %v2607 = vpack.c.b16 %v1703, %v1695
    %v2608 = vpack.c.b16 %v1712, %v1704
    %v2609 = vpack.c.b16 %v1713, %v1705
    %v2610 = vpack.c.b16 %v1714, %v1706
    %v2611 = vpack.c.b16 %v1715, %v1707
    %v2612 = vpack.c.b16 %v1716, %v1708
    %v2613 = vpack.c.b16 %v1717, %v1709
    %v2614 = vpack.c.b16 %v1718, %v1710
    %v2615 = vpack.c.b16 %v1719, %v1711
    %v2616 = vpack.c.b16 %v1728, %v1720
    %v2617 = vpack.c.b16 %v1729, %v1721
    %v2618 = vpack.c.b16 %v1730, %v1722
    %v2619 = vpack.c.b16 %v1731, %v1723
    %v2620 = vpack.c.b16 %v1732, %v1724
    %v2621 = vpack.c.b16 %v1733, %v1725
    %v2622 = vpack.c.b16 %v1734, %v1726
    %v2623 = vpack.c.b16 %v1735, %v1727
    %v2624 = vpack.c.b16 %v1744, %v1736
    %v2625 = vpack.c.b16 %v1745, %v1737
    %v2626 = vpack.c.b16 %v1746, %v1738
    %v2627 = vpack.c.b16 %v1747, %v1739
    %v2628 = vpack.c.b16 %v1748, %v1740
    %v2629 = vpack.c.b16 %v1749, %v1741
    %v2630 = vpack.c.b16 %v1750, %v1742
    %v2631 = vpack.c.b16 %v1751, %v1743
    %v2632 = vpack.c.b16 %v1760, %v1752
    %v2633 = vpack.c.b16 %v1761, %v1753
    %v2634 = vpack.c.b16 %v1762, %v1754
    %v2635 = vpack.c.b16 %v1763, %v1755
    %v2636 = vpack.c.b16 %v1764, %v1756
    %v2637 = vpack.c.b16 %v1765, %v1757
    %v2638 = vpack.c.b16 %v1766, %v1758
    %v2639 = vpack.c.b16 %v1767, %v1759
    %v2640 = vpack.c.b16 %v1776, %v1768
    %v2641 = vpack.c.b16 %v1777, %v1769
    %v2642 = vpack.c.b16 %v1778, %v1770
    %v2643 = vpack.c.b16 %v1779, %v1771
    %v2644 = vpack.c.b16 %v1780, %v1772
    %v2645 = vpack.c.b16 %v1781, %v1773
    %v2646 = vpack.c.b16 %v1782, %v1774
    %v2647 = vpack.c.b16 %v1783, %v1775
    %v2648 = vpack.c.b16 %v1792, %v1784
    %v2649 = vpack.c.b16 %v1793, %v1785
    %v2650 = vpack.c.b16 %v1794, %v1786
    %v2651 = vpack.c.b16 %v1795, %v1787
    %v2652 = vpack.c.b16 %v1796, %v1788
    %v2653 = vpack.c.b16 %v1797, %v1789
    %v2654 = vpack.c.b16 %v1798, %v1790
    %v2655 = vpack.c.b16 %v1799, %v1791
    %v2656 = vpack.c.b16 %v1808, %v1800
    %v2657 = vpack.c.b16 %v1809, %v1801
    %v2658 = vpack.c.b16 %v1810, %v1802
    %v2659 = vpack.c.b16 %v1811, %v1803
    %v2660 = vpack.c.b16 %v1812, %v1804
    %v2661 = vpack.c.b16 %v1813, %v1805
    %v2662 = vpack.c.b16 %v1814, %v1806
    %v2663 = vpack.c.b16 %v1815, %v1807
    %v2664 = vpack.c.b16 %v1824, %v1816
    %v2665 = vpack.c.b16 %v1825, %v1817
    %v2666 = vpack.c.b16 %v1826, %v1818
    %v2667 = vpack.c.b16 %v1827, %v1819
    %v2668 = vpack.c.b16 %v1828, %v1820
    %v2669 = vpack.c.b16 %v1829, %v1821
    %v2670 = vpack.c.b16 %v1830, %v1822
    %v2671 = vpack.c.b16 %v1831, %v1823
    %v2672 = vpack.c.b16 %v1840, %v1832
    %v2673 = vpack.c.b16 %v1841, %v1833
    %v2674 = vpack.c.b16 %v1842, %v1834
    %v2675 = vpack.c.b16 %v1843, %v1835
    %v2676 = vpack.c.b16 %v1844, %v1836
    %v2677 = vpack.c.b16 %v1845, %v1837
    %v2678 = vpack.c.b16 %v1846, %v1838
    %v2679 = vpack.c.b16 %v1847, %v1839
    %v2680 = vpack.c.b16 %v1856, %v1848
    %v2681 = vpack.c.b16 %v1857, %v1849
    %v2682 = vpack.c.b16 %v1858, %v1850
    %v2683 = vpack.c.b16 %v1859, %v1851
    %v2684 = vpack.c.b16 %v1860, %v1852
    %v2685 = vpack.c.b16 %v1861, %v1853
    %v2686 = vpack.c.b16 %v1862, %v1854
    %v2687 = vpack.c.b16 %v1863, %v1855
    %v2688 = vpack.c.b16 %v1872, %v1864
    %v2689 = vpack.c.b16 %v1873, %v1865
    %v2690 = vpack.c.b16 %v1874, %v1866
    %v2691 = vpack.c.b16 %v1875, %v1867
    %v2692 = vpack.c.b16 %v1876, %v1868
    %v2693 = vpack.c.b16 %v1877, %v1869
    %v2694 = vpack.c.b16 %v1878, %v1870
    %v2695 = vpack.c.b16 %v1879, %v1871
    %v2696 = vpack.c.b16 %v1888, %v1880
    %v2697 = vpack.c.b16 %v1889, %v1881
    %v2698 = vpack.c.b16 %v1890, %v1882
    %v2699 = vpack.c.b16 %v1891, %v1883
    %v2700 = vpack.c.b16 %v1892, %v1884
    %v2701 = vpack.c.b16 %v1893, %v1885
    %v2702 = vpack.c.b16 %v1894, %v1886
    %v2703 = vpack.c.b16 %v1895, %v1887
    %v2704 = vpack.c.b16 %v1904, %v1896
    %v2705 = vpack.c.b16 %v1905, %v1897
    %v2706 = vpack.c.b16 %v1906, %v1898
    %v2707 = vpack.c.b16 %v1907, %v1899
    %v2708 = vpack.c.b16 %v1908, %v1900
    %v2709 = vpack.c.b16 %v1909, %v1901
    %v2710 = vpack.c.b16 %v1910, %v1902
    %v2711 = vpack.c.b16 %v1911, %v1903
    %v2712 = vpack.c.b16 %v1920, %v1912
    %v2713 = vpack.c.b16 %v1921, %v1913
    %v2714 = vpack.c.b16 %v1922, %v1914
    %v2715 = vpack.c.b16 %v1923, %v1915
    %v2716 = vpack.c.b16 %v1924, %v1916
    %v2717 = vpack.c.b16 %v1925, %v1917
    %v2718 = vpack.c.b16 %v1926, %v1918
    %v2719 = vpack.c.b16 %v1927, %v1919
    %v2720 = vpack.c.b16 %v1936, %v1928
    %v2721 = vpack.c.b16 %v1937, %v1929
    %v2722 = vpack.c.b16 %v1938, %v1930
    %v2723 = vpack.c.b16 %v1939, %v1931
    %v2724 = vpack.c.b16 %v1940, %v1932
    %v2725 = vpack.c.b16 %v1941, %v1933
    %v2726 = vpack.c.b16 %v1942, %v1934
    %v2727 = vpack.c.b16 %v1943, %v1935
    %v2728 = vpack.c.b16 %v1952, %v1944
    %v2729 = vpack.c.b16 %v1953, %v1945
    %v2730 = vpack.c.b16 %v1954, %v1946
    %v2731 = vpack.c.b16 %v1955, %v1947
    %v2732 = vpack.c.b16 %v1956, %v1948
    %v2733 = vpack.c.b16 %v1957, %v1949
    %v2734 = vpack.c.b16 %v1958, %v1950
    %v2735 = vpack.c.b16 %v1959, %v1951
    %v2736 = vpack.c.b16 %v1968, %v1960
    %v2737 = vpack.c.b16 %v1969, %v1961
    %v2738 = vpack.c.b16 %v1970, %v1962
    %v2739 = vpack.c.b16 %v1971, %v1963
    %v2740 = vpack.c.b16 %v1972, %v1964
    %v2741 = vpack.c.b16 %v1973, %v1965
    %v2742 = vpack.c.b16 %v1974, %v1966
    %v2743 = vpack.c.b16 %v1975, %v1967
    %v2744 = vpack.c.b16 %v1984, %v1976
    %v2745 = vpack.c.b16 %v1985, %v1977
    %v2746 = vpack.c.b16 %v1986, %v1978
    %v2747 = vpack.c.b16 %v1987, %v1979
    %v2748 = vpack.c.b16 %v1988, %v1980
    %v2749 = vpack.c.b16 %v1989, %v1981
    %v2750 = vpack.c.b16 %v1990, %v1982
    %v2751 = vpack.c.b16 %v1991, %v1983
    %v2752 = vpack.c.b16 %v2000, %v1992
    %v2753 = vpack.c.b16 %v2001, %v1993
    %v2754 = vpack.c.b16 %v2002, %v1994
    %v2755 = vpack.c.b16 %v2003, %v1995
    %v2756 = vpack.c.b16 %v2004, %v1996
    %v2757 = vpack.c.b16 %v2005, %v1997
    %v2758 = vpack.c.b16 %v2006, %v1998
    %v2759 = vpack.c.b16 %v2007, %v1999
    %v2760 = vpack.c.b16 %v2016, %v2008
    %v2761 = vpack.c.b16 %v2017, %v2009
    %v2762 = vpack.c.b16 %v2018, %v2010
    %v2763 = vpack.c.b16 %v2019, %v2011
    %v2764 = vpack.c.b16 %v2020, %v2012
    %v2765 = vpack.c.b16 %v2021, %v2013
    %v2766 = vpack.c.b16 %v2022, %v2014
    %v2767 = vpack.c.b16 %v2023, %v2015
    %v2768 = vpack.c.b16 %v2032, %v2024
    %v2769 = vpack.c.b16 %v2033, %v2025
    %v2770 = vpack.c.b16 %v2034, %v2026
    %v2771 = vpack.c.b16 %v2035, %v2027
    %v2772 = vpack.c.b16 %v2036, %v2028
    %v2773 = vpack.c.b16 %v2037, %v2029
    %v2774 = vpack.c.b16 %v2038, %v2030
    %v2775 = vpack.c.b16 %v2039, %v2031
    %v2776 = vpack.c.b16 %v2048, %v2040
    %v2777 = vpack.c.b16 %v2049, %v2041
    %v2778 = vpack.c.b16 %v2050, %v2042
    %v2779 = vpack.c.b16 %v2051, %v2043
    %v2780 = vpack.c.b16 %v2052, %v2044
    %v2781 = vpack.c.b16 %v2053, %v2045
    %v2782 = vpack.c.b16 %v2054, %v2046
    %v2783 = vpack.c.b16 %v2055, %v2047
    %v2784 = vpack.c.b16 %v2064, %v2056
    %v2785 = vpack.c.b16 %v2065, %v2057
    %v2786 = vpack.c.b16 %v2066, %v2058
    %v2787 = vpack.c.b16 %v2067, %v2059
    %v2788 = vpack.c.b16 %v2068, %v2060
    %v2789 = vpack.c.b16 %v2069, %v2061
    %v2790 = vpack.c.b16 %v2070, %v2062
    %v2791 = vpack.c.b16 %v2071, %v2063
    %v2792 = vpack.c.b16 %v2080, %v2072
    %v2793 = vpack.c.b16 %v2081, %v2073
    %v2794 = vpack.c.b16 %v2082, %v2074
    %v2795 = vpack.c.b16 %v2083, %v2075
    %v2796 = vpack.c.b16 %v2084, %v2076
    %v2797 = vpack.c.b16 %v2085, %v2077
    %v2798 = vpack.c.b16 %v2086, %v2078
    %v2799 = vpack.c.b16 %v2087, %v2079
    %v2800 = vpack.c.b16 %v2096, %v2088
    %v2801 = vpack.c.b16 %v2097, %v2089
    %v2802 = vpack.c.b16 %v2098, %v2090
    %v2803 = vpack.c.b16 %v2099, %v2091
    %v2804 = vpack.c.b16 %v2100, %v2092
    %v2805 = vpack.c.b16 %v2101, %v2093
    %v2806 = vpack.c.b16 %v2102, %v2094
    %v2807 = vpack.c.b16 %v2103, %v2095
    %v2808 = vpack.c.b16 %v2112, %v2104
    %v2809 = vpack.c.b16 %v2113, %v2105
    %v2810 = vpack.c.b16 %v2114, %v2106
    %v2811 = vpack.c.b16 %v2115, %v2107
    %v2812 = vpack.c.b16 %v2116, %v2108
    %v2813 = vpack.c.b16 %v2117, %v2109
    %v2814 = vpack.c.b16 %v2118, %v2110
    %v2815 = vpack.c.b16 %v2119, %v2111
    %v2816 = vpack.c.b16 %v2128, %v2120
    %v2817 = vpack.c.b16 %v2129, %v2121
    %v2818 = vpack.c.b16 %v2130, %v2122
    %v2819 = vpack.c.b16 %v2131, %v2123
    %v2820 = vpack.c.b16 %v2132, %v2124
    %v2821 = vpack.c.b16 %v2133, %v2125
    %v2822 = vpack.c.b16 %v2134, %v2126
    %v2823 = vpack.c.b16 %v2135, %v2127
    %v2824 = vpack.c.b16 %v2144, %v2136
    %v2825 = vpack.c.b16 %v2145, %v2137
    %v2826 = vpack.c.b16 %v2146, %v2138
    %v2827 = vpack.c.b16 %v2147, %v2139
    %v2828 = vpack.c.b16 %v2148, %v2140
    %v2829 = vpack.c.b16 %v2149, %v2141
    %v2830 = vpack.c.b16 %v2150, %v2142
    %v2831 = vpack.c.b16 %v2151, %v2143
    %v2832 = vpack.c.b16 %v2160, %v2152
    %v2833 = vpack.c.b16 %v2161, %v2153
    %v2834 = vpack.c.b16 %v2162, %v2154
    %v2835 = vpack.c.b16 %v2163, %v2155
    %v2836 = vpack.c.b16 %v2164, %v2156
    %v2837 = vpack.c.b16 %v2165, %v2157
    %v2838 = vpack.c.b16 %v2166, %v2158
    %v2839 = vpack.c.b16 %v2167, %v2159
    %v2840 = vpack.c.b16 %v2176, %v2168
    %v2841 = vpack.c.b16 %v2177, %v2169
    %v2842 = vpack.c.b16 %v2178, %v2170
    %v2843 = vpack.c.b16 %v2179, %v2171
    %v2844 = vpack.c.b16 %v2180, %v2172
    %v2845 = vpack.c.b16 %v2181, %v2173
    %v2846 = vpack.c.b16 %v2182, %v2174
    %v2847 = vpack.c.b16 %v2183, %v2175
    %v2848 = vpack.c.b16 %v2192, %v2184
    %v2849 = vpack.c.b16 %v2193, %v2185
    %v2850 = vpack.c.b16 %v2194, %v2186
    %v2851 = vpack.c.b16 %v2195, %v2187
    %v2852 = vpack.c.b16 %v2196, %v2188
    %v2853 = vpack.c.b16 %v2197, %v2189
    %v2854 = vpack.c.b16 %v2198, %v2190
    %v2855 = vpack.c.b16 %v2199, %v2191
    %v2856 = vpack.c.b16 %v2208, %v2200
    %v2857 = vpack.c.b16 %v2209, %v2201
    %v2858 = vpack.c.b16 %v2210, %v2202
    %v2859 = vpack.c.b16 %v2211, %v2203
    %v2860 = vpack.c.b16 %v2212, %v2204
    %v2861 = vpack.c.b16 %v2213, %v2205
    %v2862 = vpack.c.b16 %v2214, %v2206
    %v2863 = vpack.c.b16 %v2215, %v2207
    %v2864 = vpack.c.b16 %v2224, %v2216
    %v2865 = vpack.c.b16 %v2225, %v2217
    %v2866 = vpack.c.b16 %v2226, %v2218
    %v2867 = vpack.c.b16 %v2227, %v2219
    %v2868 = vpack.c.b16 %v2228, %v2220
    %v2869 = vpack.c.b16 %v2229, %v2221
    %v2870 = vpack.c.b16 %v2230, %v2222
    %v2871 = vpack.c.b16 %v2231, %v2223
    %v2872 = vpack.c.b16 %v2240, %v2232
    %v2873 = vpack.c.b16 %v2241, %v2233
    %v2874 = vpack.c.b16 %v2242, %v2234
    %v2875 = vpack.c.b16 %v2243, %v2235
    %v2876 = vpack.c.b16 %v2244, %v2236
    %v2877 = vpack.c.b16 %v2245, %v2237
    %v2878 = vpack.c.b16 %v2246, %v2238
    %v2879 = vpack.c.b16 %v2247, %v2239
    %v2880 = vpack.c.b16 %v2256, %v2248
    %v2881 = vpack.c.b16 %v2257, %v2249
    %v2882 = vpack.c.b16 %v2258, %v2250
    %v2883 = vpack.c.b16 %v2259, %v2251
    %v2884 = vpack.c.b16 %v2260, %v2252
    %v2885 = vpack.c.b16 %v2261, %v2253
    %v2886 = vpack.c.b16 %v2262, %v2254
    %v2887 = vpack.c.b16 %v2263, %v2255
    %v2888 = vpack.c.b16 %v2272, %v2264
    %v2889 = vpack.c.b16 %v2273, %v2265
    %v2890 = vpack.c.b16 %v2274, %v2266
    %v2891 = vpack.c.b16 %v2275, %v2267
    %v2892 = vpack.c.b16 %v2276, %v2268
    %v2893 = vpack.c.b16 %v2277, %v2269
    %v2894 = vpack.c.b16 %v2278, %v2270
    %v2895 = vpack.c.b16 %v2279, %v2271
    %v2896 = vpack.c.b16 %v2288, %v2280
    %v2897 = vpack.c.b16 %v2289, %v2281
    %v2898 = vpack.c.b16 %v2290, %v2282
    %v2899 = vpack.c.b16 %v2291, %v2283
    %v2900 = vpack.c.b16 %v2292, %v2284
    %v2901 = vpack.c.b16 %v2293, %v2285
    %v2902 = vpack.c.b16 %v2294, %v2286
    %v2903 = vpack.c.b16 %v2295, %v2287
    %v2904 = vpack.c.b16 %v2304, %v2296
    %v2905 = vpack.c.b16 %v2305, %v2297
    %v2906 = vpack.c.b16 %v2306, %v2298
    %v2907 = vpack.c.b16 %v2307, %v2299
    %v2908 = vpack.c.b16 %v2308, %v2300
    %v2909 = vpack.c.b16 %v2309, %v2301
    %v2910 = vpack.c.b16 %v2310, %v2302
    %v2911 = vpack.c.b16 %v2311, %v2303
    %v2912 = vpack.c.b16 %v2320, %v2312
    %v2913 = vpack.c.b16 %v2321, %v2313
    %v2914 = vpack.c.b16 %v2322, %v2314
    %v2915 = vpack.c.b16 %v2323, %v2315
    %v2916 = vpack.c.b16 %v2324, %v2316
    %v2917 = vpack.c.b16 %v2325, %v2317
    %v2918 = vpack.c.b16 %v2326, %v2318
    %v2919 = vpack.c.b16 %v2327, %v2319
    %v2920 = vpack.c.b16 %v2336, %v2328
    %v2921 = vpack.c.b16 %v2337, %v2329
    %v2922 = vpack.c.b16 %v2338, %v2330
    %v2923 = vpack.c.b16 %v2339, %v2331
    %v2924 = vpack.c.b16 %v2340, %v2332
    %v2925 = vpack.c.b16 %v2341, %v2333
    %v2926 = vpack.c.b16 %v2342, %v2334
    %v2927 = vpack.c.b16 %v2343, %v2335
    %v2928 = vpack.c.b16 %v2352, %v2344
    %v2929 = vpack.c.b16 %v2353, %v2345
    %v2930 = vpack.c.b16 %v2354, %v2346
    %v2931 = vpack.c.b16 %v2355, %v2347
    %v2932 = vpack.c.b16 %v2356, %v2348
    %v2933 = vpack.c.b16 %v2357, %v2349
    %v2934 = vpack.c.b16 %v2358, %v2350
    %v2935 = vpack.c.b16 %v2359, %v2351
    %v2936 = vpack.c.b16 %v2368, %v2360
    %v2937 = vpack.c.b16 %v2369, %v2361
    %v2938 = vpack.c.b16 %v2370, %v2362
    %v2939 = vpack.c.b16 %v2371, %v2363
    %v2940 = vpack.c.b16 %v2372, %v2364
    %v2941 = vpack.c.b16 %v2373, %v2365
    %v2942 = vpack.c.b16 %v2374, %v2366
    %v2943 = vpack.c.b16 %v2375, %v2367
    %v2944 = vpack.c.b16 %v2384, %v2376
    %v2945 = vpack.c.b16 %v2385, %v2377
    %v2946 = vpack.c.b16 %v2386, %v2378
    %v2947 = vpack.c.b16 %v2387, %v2379
    %v2948 = vpack.c.b16 %v2388, %v2380
    %v2949 = vpack.c.b16 %v2389, %v2381
    %v2950 = vpack.c.b16 %v2390, %v2382
    %v2951 = vpack.c.b16 %v2391, %v2383
    %v2952 = vpack.c.b16 %v2400, %v2392
    %v2953 = vpack.c.b16 %v2401, %v2393
    %v2954 = vpack.c.b16 %v2402, %v2394
    %v2955 = vpack.c.b16 %v2403, %v2395
    %v2956 = vpack.c.b16 %v2404, %v2396
    %v2957 = vpack.c.b16 %v2405, %v2397
    %v2958 = vpack.c.b16 %v2406, %v2398
    %v2959 = vpack.c.b16 %v2407, %v2399
    %v2960 = vpack.c.b16 %v2416, %v2408
    %v2961 = vpack.c.b16 %v2417, %v2409
    %v2962 = vpack.c.b16 %v2418, %v2410
    %v2963 = vpack.c.b16 %v2419, %v2411
    %v2964 = vpack.c.b16 %v2420, %v2412
    %v2965 = vpack.c.b16 %v2421, %v2413
    %v2966 = vpack.c.b16 %v2422, %v2414
    %v2967 = vpack.c.b16 %v2423, %v2415
    %v2968 = vpack.c.b16 %v2432, %v2424
    %v2969 = vpack.c.b16 %v2433, %v2425
    %v2970 = vpack.c.b16 %v2434, %v2426
    %v2971 = vpack.c.b16 %v2435, %v2427
    %v2972 = vpack.c.b16 %v2436, %v2428
    %v2973 = vpack.c.b16 %v2437, %v2429
    %v2974 = vpack.c.b16 %v2438, %v2430
    %v2975 = vpack.c.b16 %v2439, %v2431
    %v2976 = vpack.c.b16 %v2448, %v2440
    %v2977 = vpack.c.b16 %v2449, %v2441
    %v2978 = vpack.c.b16 %v2450, %v2442
    %v2979 = vpack.c.b16 %v2451, %v2443
    %v2980 = vpack.c.b16 %v2452, %v2444
    %v2981 = vpack.c.b16 %v2453, %v2445
    %v2982 = vpack.c.b16 %v2454, %v2446
    %v2983 = vpack.c.b16 %v2455, %v2447
    %v2984 = vpack.c.b16 %v2464, %v2456
    %v2985 = vpack.c.b16 %v2465, %v2457
    %v2986 = vpack.c.b16 %v2466, %v2458
    %v2987 = vpack.c.b16 %v2467, %v2459
    %v2988 = vpack.c.b16 %v2468, %v2460
    %v2989 = vpack.c.b16 %v2469, %v2461
    %v2990 = vpack.c.b16 %v2470, %v2462
    %v2991 = vpack.c.b16 %v2471, %v2463
    %v2992 = vpack.c.b16 %v2480, %v2472
    %v2993 = vpack.c.b16 %v2481, %v2473
    %v2994 = vpack.c.b16 %v2482, %v2474
    %v2995 = vpack.c.b16 %v2483, %v2475
    %v2996 = vpack.c.b16 %v2484, %v2476
    %v2997 = vpack.c.b16 %v2485, %v2477
    %v2998 = vpack.c.b16 %v2486, %v2478
    %v2999 = vpack.c.b16 %v2487, %v2479
    %3512 = vmatprep.subr.bf16.mxu0 %v2489
    %3513 = vmatpush1.bf16.msra.mxu0 %v2488
    %3514 = vmatprep.subr.bf16.mxu0 %v2497
    %3515 = vmatpush1.bf16.msra.mxu0 %v2496
    %3516 = vmatprep.subr.bf16.mxu0 %v2505
    %3517 = vmatpush1.bf16.msra.mxu0 %v2504
    %3518 = vmatprep.subr.bf16.mxu0 %v2513
    %3519 = vmatpush1.bf16.msra.mxu0 %v2512
    %3520 = vmatprep.subr.bf16.mxu0 %v2521
    %3521 = vmatpush1.bf16.msra.mxu0 %v2520
    %3522 = vmatprep.subr.bf16.mxu0 %v2529
    %3523 = vmatpush1.bf16.msra.mxu0 %v2528
    %3524 = vmatprep.subr.bf16.mxu0 %v2537
    %3525 = vmatpush1.bf16.msra.mxu0 %v2536
    %3526 = vmatprep.subr.bf16.mxu0 %v2545
    %3527 = vmatpush1.bf16.msra.mxu0 %v2544
    %3528 = vmatprep.subr.bf16.mxu0 %v2553
    %3529 = vmatpush1.bf16.msra.mxu0 %v2552
    %3530 = vmatprep.subr.bf16.mxu0 %v2561
    %3531 = vmatpush1.bf16.msra.mxu0 %v2560
    %3532 = vmatprep.subr.bf16.mxu0 %v2569
    %3533 = vmatpush1.bf16.msra.mxu0 %v2568
    %3534 = vmatprep.subr.bf16.mxu0 %v2577
    %3535 = vmatpush1.bf16.msra.mxu0 %v2576
    %3536 = vmatprep.subr.bf16.mxu0 %v2585
    %3537 = vmatpush1.bf16.msra.mxu0 %v2584
    %3538 = vmatprep.subr.bf16.mxu0 %v2593
    %3539 = vmatpush1.bf16.msra.mxu0 %v2592
    %3540 = vmatprep.subr.bf16.mxu0 %v2601
    %3541 = vmatpush1.bf16.msra.mxu0 %v2600
    %3542 = vmatprep.subr.bf16.mxu0 %v2609
    %3543 = vmatpush1.bf16.msra.mxu0 %v2608
    %3544 = vmatprep.mubr.bf16.mxu0 %v825
    %3545 = vmatmul.mubr.bf16.gmra.mrb[0].mxu0 %v824
    %v3546 = vpop.f32.mrb[0].mxu0
    %v3547 = vadd.f32 0.0, %v3546
    %v3548 = vpop.f32.mrb[0].mxu0
    %v3549 = vadd.f32 0.0, %v3548
    %v3550 = vpop.f32.mrb[0].mxu0
    %v3551 = vadd.f32 0.0, %v3550
    %v3552 = vpop.f32.mrb[0].mxu0
    %v3553 = vadd.f32 0.0, %v3552
    %3554 = vmatprep.mubr.bf16.mxu0 %v833
    %3555 = vmatmul.mubr.bf16.gmra.mrb[0].mxu0 %v832
    %v3556 = vpop.f32.mrb[0].mxu0
    %v3557 = vadd.f32 0.0, %v3556
    %v3558 = vpop.f32.mrb[0].mxu0
    %v3559 = vadd.f32 0.0, %v3558
    %v3560 = vpop.f32.mrb[0].mxu0
    %v3561 = vadd.f32 0.0, %v3560
    %v3562 = vpop.f32.mrb[0].mxu0
    %v3563 = vadd.f32 0.0, %v3562
    %3564 = vmatprep.mubr.bf16.mxu0 %v841
    %3565 = vmatmul.mubr.bf16.gmra.mrb[0].mxu0 %v840
    %v3566 = vpop.f32.mrb[0].mxu0
    %v3567 = vadd.f32 0.0, %v3566
    %v3568 = vpop.f32.mrb[0].mxu0
    %v3569 = vadd.f32 0.0, %v3568
    %v3570 = vpop.f32.mrb[0].mxu0
    %v3571 = vadd.f32 0.0, %v3570
    %v3572 = vpop.f32.mrb[0].mxu0
    %v3573 = vadd.f32 0.0, %v3572
    %3574 = vmatprep.mubr.bf16.mxu0 %v849
    %3575 = vmatmul.mubr.bf16.gmra.mrb[0].mxu0 %v848
    %v3576 = vpop.f32.mrb[0].mxu0
    %v3577 = vadd.f32 0.0, %v3576
    %v3578 = vpop.f32.mrb[0].mxu0
    %v3579 = vadd.f32 0.0, %v3578
    %v3580 = vpop.f32.mrb[0].mxu0
    %v3581 = vadd.f32 0.0, %v3580
    %v3582 = vpop.f32.mrb[0].mxu0
    %v3583 = vadd.f32 0.0, %v3582
    %3584 = vmatprep.mubr.bf16.mxu0 %v857
    %3585 = vmatmul.mubr.bf16.gmra.mrb[0].mxu0 %v856
    %v3586 = vpop.f32.mrb[0].mxu0
    %v3587 = vadd.f32 0.0, %v3586
    %v3588 = vpop.f32.mrb[0].mxu0
    %v3589 = vadd.f32 0.0, %v3588
    %v3590 = vpop.f32.mrb[0].mxu0
    %v3591 = vadd.f32 0.0, %v3590
    %v3592 = vpop.f32.mrb[0].mxu0
    %v3593 = vadd.f32 0.0, %v3592
    %3594 = vmatprep.mubr.bf16.mxu0 %v865
    %3595 = vmatmul.mubr.bf16.gmra.mrb[0].mxu0 %v864
    %v3596 = vpop.f32.mrb[0].mxu0
    %v3597 = vadd.f32 0.0, %v3596
    %v3598 = vpop.f32.mrb[0].mxu0
    %v3599 = vadd.f32 0.0, %v3598
    %v3600 = vpop.f32.mrb[0].mxu0
    %v3601 = vadd.f32 0.0, %v3600
    %v3602 = vpop.f32.mrb[0].mxu0
    %v3603 = vadd.f32 0.0, %v3602
    %3604 = vmatprep.mubr.bf16.mxu0 %v873
    %3605 = vmatmul.mubr.bf16.gmra.mrb[0].mxu0 %v872
    %v3606 = vpop.f32.mrb[0].mxu0
    %v3607 = vadd.f32 0.0, %v3606
    %v3608 = vpop.f32.mrb[0].mxu0
    %v3609 = vadd.f32 0.0, %v3608
    %v3610 = vpop.f32.mrb[0].mxu0
    %v3611 = vadd.f32 0.0, %v3610
    %v3612 = vpop.f32.mrb[0].mxu0
    %v3613 = vadd.f32 0.0, %v3612
    %3614 = vmatprep.mubr.bf16.mxu0 %v881
    %3615 = vmatmul.mubr.bf16.gmra.mrb[0].mxu0 %v880
    %v3616 = vpop.f32.mrb[0].mxu0
    %v3617 = vadd.f32 0.0, %v3616
    %v3618 = vpop.f32.mrb[0].mxu0
    %v3619 = vadd.f32 0.0, %v3618
    %v3620 = vpop.f32.mrb[0].mxu0
    %v3621 = vadd.f32 0.0, %v3620
    %v3622 = vpop.f32.mrb[0].mxu0
    %v3623 = vadd.f32 0.0, %v3622
    %3624 = vdwg.mxu0
    %3625 = vmatprep.subr.bf16.mxu0 %v2617
    %3626 = vmatpush1.bf16.msra.mxu0 %v2616
    %3627 = vmatprep.subr.bf16.mxu0 %v2625
    %3628 = vmatpush1.bf16.msra.mxu0 %v2624
    %3629 = vmatprep.subr.bf16.mxu0 %v2633
    %3630 = vmatpush1.bf16.msra.mxu0 %v2632
    %3631 = vmatprep.subr.bf16.mxu0 %v2641
    %3632 = vmatpush1.bf16.msra.mxu0 %v2640
    %3633 = vmatprep.subr.bf16.mxu0 %v2649
    %3634 = vmatpush1.bf16.msra.mxu0 %v2648
    %3635 = vmatprep.subr.bf16.mxu0 %v2657
    %3636 = vmatpush1.bf16.msra.mxu0 %v2656
    %3637 = vmatprep.subr.bf16.mxu0 %v2665
    %3638 = vmatpush1.bf16.msra.mxu0 %v2664
    %3639 = vmatprep.subr.bf16.mxu0 %v2673
    %3640 = vmatpush1.bf16.msra.mxu0 %v2672
    %3641 = vmatprep.subr.bf16.mxu0 %v2681
    %3642 = vmatpush1.bf16.msra.mxu0 %v2680
    %3643 = vmatprep.subr.bf16.mxu0 %v2689
    %3644 = vmatpush1.bf16.msra.mxu0 %v2688
    %3645 = vmatprep.subr.bf16.mxu0 %v2697
    %3646 = vmatpush1.bf16.msra.mxu0 %v2696
    %3647 = vmatprep.subr.bf16.mxu0 %v2705
    %3648 = vmatpush1.bf16.msra.mxu0 %v2704
    %3649 = vmatprep.subr.bf16.mxu0 %v2713
    %3650 = vmatpush1.bf16.msra.mxu0 %v2712
    %3651 = vmatprep.subr.bf16.mxu0 %v2721
    %3652 = vmatpush1.bf16.msra.mxu0 %v2720
    %3653 = vmatprep.subr.bf16.mxu0 %v2729
    %3654 = vmatpush1.bf16.msra.mxu0 %v2728
    %3655 = vmatprep.subr.bf16.mxu0 %v2737
    %3656 = vmatpush1.bf16.msra.mxu0 %v2736
    %3657 = vmatprep.mubr.bf16.mxu0 %v827
    %3658 = vmatmul.mubr.bf16.gmra.mrb[0].mxu0 %v826
    %v3659 = vpop.f32.mrb[0].mxu0
    %v3660 = vadd.f32 %v3547, %v3659
    %v3661 = vpop.f32.mrb[0].mxu0
    %v3662 = vadd.f32 %v3549, %v3661
    %v3663 = vpop.f32.mrb[0].mxu0
    %v3664 = vadd.f32 %v3551, %v3663
    %v3665 = vpop.f32.mrb[0].mxu0
    %v3666 = vadd.f32 %v3553, %v3665
    %3667 = vmatprep.mubr.bf16.mxu0 %v835
    %3668 = vmatmul.mubr.bf16.gmra.mrb[0].mxu0 %v834
    %v3669 = vpop.f32.mrb[0].mxu0
    %v3670 = vadd.f32 %v3557, %v3669
    %v3671 = vpop.f32.mrb[0].mxu0
    %v3672 = vadd.f32 %v3559, %v3671
    %v3673 = vpop.f32.mrb[0].mxu0
    %v3674 = vadd.f32 %v3561, %v3673
    %v3675 = vpop.f32.mrb[0].mxu0
    %v3676 = vadd.f32 %v3563, %v3675
    %3677 = vmatprep.mubr.bf16.mxu0 %v843
    %3678 = vmatmul.mubr.bf16.gmra.mrb[0].mxu0 %v842
    %v3679 = vpop.f32.mrb[0].mxu0
    %v3680 = vadd.f32 %v3567, %v3679
    %v3681 = vpop.f32.mrb[0].mxu0
    %v3682 = vadd.f32 %v3569, %v3681
    %v3683 = vpop.f32.mrb[0].mxu0
    %v3684 = vadd.f32 %v3571, %v3683
    %v3685 = vpop.f32.mrb[0].mxu0
    %v3686 = vadd.f32 %v3573, %v3685
    %3687 = vmatprep.mubr.bf16.mxu0 %v851
    %3688 = vmatmul.mubr.bf16.gmra.mrb[0].mxu0 %v850
    %v3689 = vpop.f32.mrb[0].mxu0
    %v3690 = vadd.f32 %v3577, %v3689
    %v3691 = vpop.f32.mrb[0].mxu0
    %v3692 = vadd.f32 %v3579, %v3691
    %v3693 = vpop.f32.mrb[0].mxu0
    %v3694 = vadd.f32 %v3581, %v3693
    %v3695 = vpop.f32.mrb[0].mxu0
    %v3696 = vadd.f32 %v3583, %v3695
    %3697 = vmatprep.mubr.bf16.mxu0 %v859
    %3698 = vmatmul.mubr.bf16.gmra.mrb[0].mxu0 %v858
    %v3699 = vpop.f32.mrb[0].mxu0
    %v3700 = vadd.f32 %v3587, %v3699
    %v3701 = vpop.f32.mrb[0].mxu0
    %v3702 = vadd.f32 %v3589, %v3701
    %v3703 = vpop.f32.mrb[0].mxu0
    %v3704 = vadd.f32 %v3591, %v3703
    %v3705 = vpop.f32.mrb[0].mxu0
    %v3706 = vadd.f32 %v3593, %v3705
    %3707 = vmatprep.mubr.bf16.mxu0 %v867
    %3708 = vmatmul.mubr.bf16.gmra.mrb[0].mxu0 %v866
    %v3709 = vpop.f32.mrb[0].mxu0
    %v3710 = vadd.f32 %v3597, %v3709
    %v3711 = vpop.f32.mrb[0].mxu0
    %v3712 = vadd.f32 %v3599, %v3711
    %v3713 = vpop.f32.mrb[0].mxu0
    %v3714 = vadd.f32 %v3601, %v3713
    %v3715 = vpop.f32.mrb[0].mxu0
    %v3716 = vadd.f32 %v3603, %v3715
    %3717 = vmatprep.mubr.bf16.mxu0 %v875
    %3718 = vmatmul.mubr.bf16.gmra.mrb[0].mxu0 %v874
    %v3719 = vpop.f32.mrb[0].mxu0
    %v3720 = vadd.f32 %v3607, %v3719
    %v3721 = vpop.f32.mrb[0].mxu0
    %v3722 = vadd.f32 %v3609, %v3721
    %v3723 = vpop.f32.mrb[0].mxu0
    %v3724 = vadd.f32 %v3611, %v3723
    %v3725 = vpop.f32.mrb[0].mxu0
    %v3726 = vadd.f32 %v3613, %v3725
    %3727 = vmatprep.mubr.bf16.mxu0 %v883
    %3728 = vmatmul.mubr.bf16.gmra.mrb[0].mxu0 %v882
    %v3729 = vpop.f32.mrb[0].mxu0
    %v3730 = vadd.f32 %v3617, %v3729
    %v3731 = vpop.f32.mrb[0].mxu0
    %v3732 = vadd.f32 %v3619, %v3731
    %v3733 = vpop.f32.mrb[0].mxu0
    %v3734 = vadd.f32 %v3621, %v3733
    %v3735 = vpop.f32.mrb[0].mxu0
    %v3736 = vadd.f32 %v3623, %v3735
    %3737 = vdwg.mxu0
    %3738 = vmatprep.subr.bf16.mxu0 %v2745
    %3739 = vmatpush1.bf16.msra.mxu0 %v2744
    %3740 = vmatprep.subr.bf16.mxu0 %v2753
    %3741 = vmatpush1.bf16.msra.mxu0 %v2752
    %3742 = vmatprep.subr.bf16.mxu0 %v2761
    %3743 = vmatpush1.bf16.msra.mxu0 %v2760
    %3744 = vmatprep.subr.bf16.mxu0 %v2769
    %3745 = vmatpush1.bf16.msra.mxu0 %v2768
    %3746 = vmatprep.subr.bf16.mxu0 %v2777
    %3747 = vmatpush1.bf16.msra.mxu0 %v2776
    %3748 = vmatprep.subr.bf16.mxu0 %v2785
    %3749 = vmatpush1.bf16.msra.mxu0 %v2784
    %3750 = vmatprep.subr.bf16.mxu0 %v2793
    %3751 = vmatpush1.bf16.msra.mxu0 %v2792
    %3752 = vmatprep.subr.bf16.mxu0 %v2801
    %3753 = vmatpush1.bf16.msra.mxu0 %v2800
    %3754 = vmatprep.subr.bf16.mxu0 %v2809
    %3755 = vmatpush1.bf16.msra.mxu0 %v2808
    %3756 = vmatprep.subr.bf16.mxu0 %v2817
    %3757 = vmatpush1.bf16.msra.mxu0 %v2816
    %3758 = vmatprep.subr.bf16.mxu0 %v2825
    %3759 = vmatpush1.bf16.msra.mxu0 %v2824
    %3760 = vmatprep.subr.bf16.mxu0 %v2833
    %3761 = vmatpush1.bf16.msra.mxu0 %v2832
    %3762 = vmatprep.subr.bf16.mxu0 %v2841
    %3763 = vmatpush1.bf16.msra.mxu0 %v2840
    %3764 = vmatprep.subr.bf16.mxu0 %v2849
    %3765 = vmatpush1.bf16.msra.mxu0 %v2848
    %3766 = vmatprep.subr.bf16.mxu0 %v2857
    %3767 = vmatpush1.bf16.msra.mxu0 %v2856
    %3768 = vmatprep.subr.bf16.mxu0 %v2865
    %3769 = vmatpush1.bf16.msra.mxu0 %v2864
    %3770 = vmatprep.mubr.bf16.mxu0 %v829
    %3771 = vmatmul.mubr.bf16.gmra.mrb[0].mxu0 %v828
    %v3772 = vpop.f32.mrb[0].mxu0
    %v3773 = vadd.f32 %v3660, %v3772
    %v3774 = vpop.f32.mrb[0].mxu0
    %v3775 = vadd.f32 %v3662, %v3774
    %v3776 = vpop.f32.mrb[0].mxu0
    %v3777 = vadd.f32 %v3664, %v3776
    %v3778 = vpop.f32.mrb[0].mxu0
    %v3779 = vadd.f32 %v3666, %v3778
    %3780 = vmatprep.mubr.bf16.mxu0 %v837
    %3781 = vmatmul.mubr.bf16.gmra.mrb[0].mxu0 %v836
    %v3782 = vpop.f32.mrb[0].mxu0
    %v3783 = vadd.f32 %v3670, %v3782
    %v3784 = vpop.f32.mrb[0].mxu0
    %v3785 = vadd.f32 %v3672, %v3784
    %v3786 = vpop.f32.mrb[0].mxu0
    %v3787 = vadd.f32 %v3674, %v3786
    %v3788 = vpop.f32.mrb[0].mxu0
    %v3789 = vadd.f32 %v3676, %v3788
    %3790 = vmatprep.mubr.bf16.mxu0 %v845
    %3791 = vmatmul.mubr.bf16.gmra.mrb[0].mxu0 %v844
    %v3792 = vpop.f32.mrb[0].mxu0
    %v3793 = vadd.f32 %v3680, %v3792
    %v3794 = vpop.f32.mrb[0].mxu0
    %v3795 = vadd.f32 %v3682, %v3794
    %v3796 = vpop.f32.mrb[0].mxu0
    %v3797 = vadd.f32 %v3684, %v3796
    %v3798 = vpop.f32.mrb[0].mxu0
    %v3799 = vadd.f32 %v3686, %v3798
    %3800 = vmatprep.mubr.bf16.mxu0 %v853
    %3801 = vmatmul.mubr.bf16.gmra.mrb[0].mxu0 %v852
    %v3802 = vpop.f32.mrb[0].mxu0
    %v3803 = vadd.f32 %v3690, %v3802
    %v3804 = vpop.f32.mrb[0].mxu0
    %v3805 = vadd.f32 %v3692, %v3804
    %v3806 = vpop.f32.mrb[0].mxu0
    %v3807 = vadd.f32 %v3694, %v3806
    %v3808 = vpop.f32.mrb[0].mxu0
    %v3809 = vadd.f32 %v3696, %v3808
    %3810 = vmatprep.mubr.bf16.mxu0 %v861
    %3811 = vmatmul.mubr.bf16.gmra.mrb[0].mxu0 %v860
    %v3812 = vpop.f32.mrb[0].mxu0
    %v3813 = vadd.f32 %v3700, %v3812
    %v3814 = vpop.f32.mrb[0].mxu0
    %v3815 = vadd.f32 %v3702, %v3814
    %v3816 = vpop.f32.mrb[0].mxu0
    %v3817 = vadd.f32 %v3704, %v3816
    %v3818 = vpop.f32.mrb[0].mxu0
    %v3819 = vadd.f32 %v3706, %v3818
    %3820 = vmatprep.mubr.bf16.mxu0 %v869
    %3821 = vmatmul.mubr.bf16.gmra.mrb[0].mxu0 %v868
    %v3822 = vpop.f32.mrb[0].mxu0
    %v3823 = vadd.f32 %v3710, %v3822
    %v3824 = vpop.f32.mrb[0].mxu0
    %v3825 = vadd.f32 %v3712, %v3824
    %v3826 = vpop.f32.mrb[0].mxu0
    %v3827 = vadd.f32 %v3714, %v3826
    %v3828 = vpop.f32.mrb[0].mxu0
    %v3829 = vadd.f32 %v3716, %v3828
    %3830 = vmatprep.mubr.bf16.mxu0 %v877
    %3831 = vmatmul.mubr.bf16.gmra.mrb[0].mxu0 %v876
    %v3832 = vpop.f32.mrb[0].mxu0
    %v3833 = vadd.f32 %v3720, %v3832
    %v3834 = vpop.f32.mrb[0].mxu0
    %v3835 = vadd.f32 %v3722, %v3834
    %v3836 = vpop.f32.mrb[0].mxu0
    %v3837 = vadd.f32 %v3724, %v3836
    %v3838 = vpop.f32.mrb[0].mxu0
    %v3839 = vadd.f32 %v3726, %v3838
    %3840 = vmatprep.mubr.bf16.mxu0 %v885
    %3841 = vmatmul.mubr.bf16.gmra.mrb[0].mxu0 %v884
    %v3842 = vpop.f32.mrb[0].mxu0
    %v3843 = vadd.f32 %v3730, %v3842
    %v3844 = vpop.f32.mrb[0].mxu0
    %v3845 = vadd.f32 %v3732, %v3844
    %v3846 = vpop.f32.mrb[0].mxu0
    %v3847 = vadd.f32 %v3734, %v3846
    %v3848 = vpop.f32.mrb[0].mxu0
    %v3849 = vadd.f32 %v3736, %v3848
    %3850 = vdwg.mxu0
    %3851 = vmatprep.subr.bf16.mxu0 %v2873
    %3852 = vmatpush1.bf16.msra.mxu0 %v2872
    %3853 = vmatprep.subr.bf16.mxu0 %v2881
    %3854 = vmatpush1.bf16.msra.mxu0 %v2880
    %3855 = vmatprep.subr.bf16.mxu0 %v2889
    %3856 = vmatpush1.bf16.msra.mxu0 %v2888
    %3857 = vmatprep.subr.bf16.mxu0 %v2897
    %3858 = vmatpush1.bf16.msra.mxu0 %v2896
    %3859 = vmatprep.subr.bf16.mxu0 %v2905
    %3860 = vmatpush1.bf16.msra.mxu0 %v2904
    %3861 = vmatprep.subr.bf16.mxu0 %v2913
    %3862 = vmatpush1.bf16.msra.mxu0 %v2912
    %3863 = vmatprep.subr.bf16.mxu0 %v2921
    %3864 = vmatpush1.bf16.msra.mxu0 %v2920
    %3865 = vmatprep.subr.bf16.mxu0 %v2929
    %3866 = vmatpush1.bf16.msra.mxu0 %v2928
    %3867 = vmatprep.subr.bf16.mxu0 %v2937
    %3868 = vmatpush1.bf16.msra.mxu0 %v2936
    %3869 = vmatprep.subr.bf16.mxu0 %v2945
    %3870 = vmatpush1.bf16.msra.mxu0 %v2944
    %3871 = vmatprep.subr.bf16.mxu0 %v2953
    %3872 = vmatpush1.bf16.msra.mxu0 %v2952
    %3873 = vmatprep.subr.bf16.mxu0 %v2961
    %3874 = vmatpush1.bf16.msra.mxu0 %v2960
    %3875 = vmatprep.subr.bf16.mxu0 %v2969
    %3876 = vmatpush1.bf16.msra.mxu0 %v2968
    %3877 = vmatprep.subr.bf16.mxu0 %v2977
    %3878 = vmatpush1.bf16.msra.mxu0 %v2976
    %3879 = vmatprep.subr.bf16.mxu0 %v2985
    %3880 = vmatpush1.bf16.msra.mxu0 %v2984
    %3881 = vmatprep.subr.bf16.mxu0 %v2993
    %3882 = vmatpush1.bf16.msra.mxu0 %v2992
    %3883 = vmatprep.mubr.bf16.mxu0 %v831
    %3884 = vmatmul.mubr.bf16.gmra.mrb[0].mxu0 %v830
    %v3885 = vpop.f32.mrb[0].mxu0
    %v3886 = vadd.f32 %v3773, %v3885
    %v3887 = vpop.f32.mrb[0].mxu0
    %v3888 = vadd.f32 %v3775, %v3887
    %v3889 = vpop.f32.mrb[0].mxu0
    %v3890 = vadd.f32 %v3777, %v3889
    %v3891 = vpop.f32.mrb[0].mxu0
    %v3892 = vadd.f32 %v3779, %v3891
    %3893 = vmatprep.mubr.bf16.mxu0 %v839
    %3894 = vmatmul.mubr.bf16.gmra.mrb[0].mxu0 %v838
    %v3895 = vpop.f32.mrb[0].mxu0
    %v3896 = vadd.f32 %v3783, %v3895
    %v3897 = vpop.f32.mrb[0].mxu0
    %v3898 = vadd.f32 %v3785, %v3897
    %v3899 = vpop.f32.mrb[0].mxu0
    %v3900 = vadd.f32 %v3787, %v3899
    %v3901 = vpop.f32.mrb[0].mxu0
    %v3902 = vadd.f32 %v3789, %v3901
    %3903 = vmatprep.mubr.bf16.mxu0 %v847
    %3904 = vmatmul.mubr.bf16.gmra.mrb[0].mxu0 %v846
    %v3905 = vpop.f32.mrb[0].mxu0
    %v3906 = vadd.f32 %v3793, %v3905
    %v3907 = vpop.f32.mrb[0].mxu0
    %v3908 = vadd.f32 %v3795, %v3907
    %v3909 = vpop.f32.mrb[0].mxu0
    %v3910 = vadd.f32 %v3797, %v3909
    %v3911 = vpop.f32.mrb[0].mxu0
    %v3912 = vadd.f32 %v3799, %v3911
    %3913 = vmatprep.mubr.bf16.mxu0 %v855
    %3914 = vmatmul.mubr.bf16.gmra.mrb[0].mxu0 %v854
    %v3915 = vpop.f32.mrb[0].mxu0
    %v3916 = vadd.f32 %v3803, %v3915
    %v3917 = vpop.f32.mrb[0].mxu0
    %v3918 = vadd.f32 %v3805, %v3917
    %v3919 = vpop.f32.mrb[0].mxu0
    %v3920 = vadd.f32 %v3807, %v3919
    %v3921 = vpop.f32.mrb[0].mxu0
    %v3922 = vadd.f32 %v3809, %v3921
    %3923 = vmatprep.mubr.bf16.mxu0 %v863
    %3924 = vmatmul.mubr.bf16.gmra.mrb[0].mxu0 %v862
    %v3925 = vpop.f32.mrb[0].mxu0
    %v3926 = vadd.f32 %v3813, %v3925
    %v3927 = vpop.f32.mrb[0].mxu0
    %v3928 = vadd.f32 %v3815, %v3927
    %v3929 = vpop.f32.mrb[0].mxu0
    %v3930 = vadd.f32 %v3817, %v3929
    %v3931 = vpop.f32.mrb[0].mxu0
    %v3932 = vadd.f32 %v3819, %v3931
    %3933 = vmatprep.mubr.bf16.mxu0 %v871
    %3934 = vmatmul.mubr.bf16.gmra.mrb[0].mxu0 %v870
    %v3935 = vpop.f32.mrb[0].mxu0
    %v3936 = vadd.f32 %v3823, %v3935
    %v3937 = vpop.f32.mrb[0].mxu0
    %v3938 = vadd.f32 %v3825, %v3937
    %v3939 = vpop.f32.mrb[0].mxu0
    %v3940 = vadd.f32 %v3827, %v3939
    %v3941 = vpop.f32.mrb[0].mxu0
    %v3942 = vadd.f32 %v3829, %v3941
    %3943 = vmatprep.mubr.bf16.mxu0 %v879
    %3944 = vmatmul.mubr.bf16.gmra.mrb[0].mxu0 %v878
    %v3945 = vpop.f32.mrb[0].mxu0
    %v3946 = vadd.f32 %v3833, %v3945
    %v3947 = vpop.f32.mrb[0].mxu0
    %v3948 = vadd.f32 %v3835, %v3947
    %v3949 = vpop.f32.mrb[0].mxu0
    %v3950 = vadd.f32 %v3837, %v3949
    %v3951 = vpop.f32.mrb[0].mxu0
    %v3952 = vadd.f32 %v3839, %v3951
    %3953 = vmatprep.mubr.bf16.mxu0 %v887
    %3954 = vmatmul.mubr.bf16.gmra.mrb[0].mxu0 %v886
    %v3955 = vpop.f32.mrb[0].mxu0
    %v3956 = vadd.f32 %v3843, %v3955
    %v3957 = vpop.f32.mrb[0].mxu0
    %v3958 = vadd.f32 %v3845, %v3957
    %v3959 = vpop.f32.mrb[0].mxu0
    %v3960 = vadd.f32 %v3847, %v3959
    %v3961 = vpop.f32.mrb[0].mxu0
    %v3962 = vadd.f32 %v3849, %v3961
    %3963 = vdwg.mxu0
    %3964 = vmatprep.subr.bf16.mxu0 %v2491
    %3965 = vmatpush1.bf16.msra.mxu0 %v2490
    %3966 = vmatprep.subr.bf16.mxu0 %v2499
    %3967 = vmatpush1.bf16.msra.mxu0 %v2498
    %3968 = vmatprep.subr.bf16.mxu0 %v2507
    %3969 = vmatpush1.bf16.msra.mxu0 %v2506
    %3970 = vmatprep.subr.bf16.mxu0 %v2515
    %3971 = vmatpush1.bf16.msra.mxu0 %v2514
    %3972 = vmatprep.subr.bf16.mxu0 %v2523
    %3973 = vmatpush1.bf16.msra.mxu0 %v2522
    %3974 = vmatprep.subr.bf16.mxu0 %v2531
    %3975 = vmatpush1.bf16.msra.mxu0 %v2530
    %3976 = vmatprep.subr.bf16.mxu0 %v2539
    %3977 = vmatpush1.bf16.msra.mxu0 %v2538
    %3978 = vmatprep.subr.bf16.mxu0 %v2547
    %3979 = vmatpush1.bf16.msra.mxu0 %v2546
    %3980 = vmatprep.subr.bf16.mxu0 %v2555
    %3981 = vmatpush1.bf16.msra.mxu0 %v2554
    %3982 = vmatprep.subr.bf16.mxu0 %v2563
    %3983 = vmatpush1.bf16.msra.mxu0 %v2562
    %3984 = vmatprep.subr.bf16.mxu0 %v2571
    %3985 = vmatpush1.bf16.msra.mxu0 %v2570
    %3986 = vmatprep.subr.bf16.mxu0 %v2579
    %3987 = vmatpush1.bf16.msra.mxu0 %v2578
    %3988 = vmatprep.subr.bf16.mxu0 %v2587
    %3989 = vmatpush1.bf16.msra.mxu0 %v2586
    %3990 = vmatprep.subr.bf16.mxu0 %v2595
    %3991 = vmatpush1.bf16.msra.mxu0 %v2594
    %3992 = vmatprep.subr.bf16.mxu0 %v2603
    %3993 = vmatpush1.bf16.msra.mxu0 %v2602
    %3994 = vmatprep.subr.bf16.mxu0 %v2611
    %3995 = vmatpush1.bf16.msra.mxu0 %v2610
    %3996 = vmatprep.mubr.bf16.mxu0 %v825
    %3997 = vmatmul.mubr.bf16.gmra.mrb[0].mxu0 %v824
    %v3998 = vpop.f32.mrb[0].mxu0
    %v3999 = vadd.f32 0.0, %v3998
    %v4000 = vpop.f32.mrb[0].mxu0
    %v4001 = vadd.f32 0.0, %v4000
    %v4002 = vpop.f32.mrb[0].mxu0
    %v4003 = vadd.f32 0.0, %v4002
    %v4004 = vpop.f32.mrb[0].mxu0
    %v4005 = vadd.f32 0.0, %v4004
    %4006 = vmatprep.mubr.bf16.mxu0 %v833
    %4007 = vmatmul.mubr.bf16.gmra.mrb[0].mxu0 %v832
    %v4008 = vpop.f32.mrb[0].mxu0
    %v4009 = vadd.f32 0.0, %v4008
    %v4010 = vpop.f32.mrb[0].mxu0
    %v4011 = vadd.f32 0.0, %v4010
    %v4012 = vpop.f32.mrb[0].mxu0
    %v4013 = vadd.f32 0.0, %v4012
    %v4014 = vpop.f32.mrb[0].mxu0
    %v4015 = vadd.f32 0.0, %v4014
    %4016 = vmatprep.mubr.bf16.mxu0 %v841
    %4017 = vmatmul.mubr.bf16.gmra.mrb[0].mxu0 %v840
    %v4018 = vpop.f32.mrb[0].mxu0
    %v4019 = vadd.f32 0.0, %v4018
    %v4020 = vpop.f32.mrb[0].mxu0
    %v4021 = vadd.f32 0.0, %v4020
    %v4022 = vpop.f32.mrb[0].mxu0
    %v4023 = vadd.f32 0.0, %v4022
    %v4024 = vpop.f32.mrb[0].mxu0
    %v4025 = vadd.f32 0.0, %v4024
    %4026 = vmatprep.mubr.bf16.mxu0 %v849
    %4027 = vmatmul.mubr.bf16.gmra.mrb[0].mxu0 %v848
    %v4028 = vpop.f32.mrb[0].mxu0
    %v4029 = vadd.f32 0.0, %v4028
    %v4030 = vpop.f32.mrb[0].mxu0
    %v4031 = vadd.f32 0.0, %v4030
    %v4032 = vpop.f32.mrb[0].mxu0
    %v4033 = vadd.f32 0.0, %v4032
    %v4034 = vpop.f32.mrb[0].mxu0
    %v4035 = vadd.f32 0.0, %v4034
    %4036 = vmatprep.mubr.bf16.mxu0 %v857
    %4037 = vmatmul.mubr.bf16.gmra.mrb[0].mxu0 %v856
    %v4038 = vpop.f32.mrb[0].mxu0
    %v4039 = vadd.f32 0.0, %v4038
    %v4040 = vpop.f32.mrb[0].mxu0
    %v4041 = vadd.f32 0.0, %v4040
    %v4042 = vpop.f32.mrb[0].mxu0
    %v4043 = vadd.f32 0.0, %v4042
    %v4044 = vpop.f32.mrb[0].mxu0
    %v4045 = vadd.f32 0.0, %v4044
    %4046 = vmatprep.mubr.bf16.mxu0 %v865
    %4047 = vmatmul.mubr.bf16.gmra.mrb[0].mxu0 %v864
    %v4048 = vpop.f32.mrb[0].mxu0
    %v4049 = vadd.f32 0.0, %v4048
    %v4050 = vpop.f32.mrb[0].mxu0
    %v4051 = vadd.f32 0.0, %v4050
    %v4052 = vpop.f32.mrb[0].mxu0
    %v4053 = vadd.f32 0.0, %v4052
    %v4054 = vpop.f32.mrb[0].mxu0
    %v4055 = vadd.f32 0.0, %v4054
    %4056 = vmatprep.mubr.bf16.mxu0 %v873
    %4057 = vmatmul.mubr.bf16.gmra.mrb[0].mxu0 %v872
    %v4058 = vpop.f32.mrb[0].mxu0
    %v4059 = vadd.f32 0.0, %v4058
    %v4060 = vpop.f32.mrb[0].mxu0
    %v4061 = vadd.f32 0.0, %v4060
    %v4062 = vpop.f32.mrb[0].mxu0
    %v4063 = vadd.f32 0.0, %v4062
    %v4064 = vpop.f32.mrb[0].mxu0
    %v4065 = vadd.f32 0.0, %v4064
    %4066 = vmatprep.mubr.bf16.mxu0 %v881
    %4067 = vmatmul.mubr.bf16.gmra.mrb[0].mxu0 %v880
    %v4068 = vpop.f32.mrb[0].mxu0
    %v4069 = vadd.f32 0.0, %v4068
    %v4070 = vpop.f32.mrb[0].mxu0
    %v4071 = vadd.f32 0.0, %v4070
    %v4072 = vpop.f32.mrb[0].mxu0
    %v4073 = vadd.f32 0.0, %v4072
    %v4074 = vpop.f32.mrb[0].mxu0
    %v4075 = vadd.f32 0.0, %v4074
    %4076 = vdwg.mxu0
    %4077 = vmatprep.subr.bf16.mxu0 %v2619
    %4078 = vmatpush1.bf16.msra.mxu0 %v2618
    %4079 = vmatprep.subr.bf16.mxu0 %v2627
    %4080 = vmatpush1.bf16.msra.mxu0 %v2626
    %4081 = vmatprep.subr.bf16.mxu0 %v2635
    %4082 = vmatpush1.bf16.msra.mxu0 %v2634
    %4083 = vmatprep.subr.bf16.mxu0 %v2643
    %4084 = vmatpush1.bf16.msra.mxu0 %v2642
    %4085 = vmatprep.subr.bf16.mxu0 %v2651
    %4086 = vmatpush1.bf16.msra.mxu0 %v2650
    %4087 = vmatprep.subr.bf16.mxu0 %v2659
    %4088 = vmatpush1.bf16.msra.mxu0 %v2658
    %4089 = vmatprep.subr.bf16.mxu0 %v2667
    %4090 = vmatpush1.bf16.msra.mxu0 %v2666
    %4091 = vmatprep.subr.bf16.mxu0 %v2675
    %4092 = vmatpush1.bf16.msra.mxu0 %v2674
    %4093 = vmatprep.subr.bf16.mxu0 %v2683
    %4094 = vmatpush1.bf16.msra.mxu0 %v2682
    %4095 = vmatprep.subr.bf16.mxu0 %v2691
    %4096 = vmatpush1.bf16.msra.mxu0 %v2690
    %4097 = vmatprep.subr.bf16.mxu0 %v2699
    %4098 = vmatpush1.bf16.msra.mxu0 %v2698
    %4099 = vmatprep.subr.bf16.mxu0 %v2707
    %4100 = vmatpush1.bf16.msra.mxu0 %v2706
    %4101 = vmatprep.subr.bf16.mxu0 %v2715
    %4102 = vmatpush1.bf16.msra.mxu0 %v2714
    %4103 = vmatprep.subr.bf16.mxu0 %v2723
    %4104 = vmatpush1.bf16.msra.mxu0 %v2722
    %4105 = vmatprep.subr.bf16.mxu0 %v2731
    %4106 = vmatpush1.bf16.msra.mxu0 %v2730
    %4107 = vmatprep.subr.bf16.mxu0 %v2739
    %4108 = vmatpush1.bf16.msra.mxu0 %v2738
    %4109 = vmatprep.mubr.bf16.mxu0 %v827
    %4110 = vmatmul.mubr.bf16.gmra.mrb[0].mxu0 %v826
    %v4111 = vpop.f32.mrb[0].mxu0
    %v4112 = vadd.f32 %v3999, %v4111
    %v4113 = vpop.f32.mrb[0].mxu0
    %v4114 = vadd.f32 %v4001, %v4113
    %v4115 = vpop.f32.mrb[0].mxu0
    %v4116 = vadd.f32 %v4003, %v4115
    %v4117 = vpop.f32.mrb[0].mxu0
    %v4118 = vadd.f32 %v4005, %v4117
    %4119 = vmatprep.mubr.bf16.mxu0 %v835
    %4120 = vmatmul.mubr.bf16.gmra.mrb[0].mxu0 %v834
    %v4121 = vpop.f32.mrb[0].mxu0
    %v4122 = vadd.f32 %v4009, %v4121
    %v4123 = vpop.f32.mrb[0].mxu0
    %v4124 = vadd.f32 %v4011, %v4123
    %v4125 = vpop.f32.mrb[0].mxu0
    %v4126 = vadd.f32 %v4013, %v4125
    %v4127 = vpop.f32.mrb[0].mxu0
    %v4128 = vadd.f32 %v4015, %v4127
    %4129 = vmatprep.mubr.bf16.mxu0 %v843
    %4130 = vmatmul.mubr.bf16.gmra.mrb[0].mxu0 %v842
    %v4131 = vpop.f32.mrb[0].mxu0
    %v4132 = vadd.f32 %v4019, %v4131
    %v4133 = vpop.f32.mrb[0].mxu0
    %v4134 = vadd.f32 %v4021, %v4133
    %v4135 = vpop.f32.mrb[0].mxu0
    %v4136 = vadd.f32 %v4023, %v4135
    %v4137 = vpop.f32.mrb[0].mxu0
    %v4138 = vadd.f32 %v4025, %v4137
    %4139 = vmatprep.mubr.bf16.mxu0 %v851
    %4140 = vmatmul.mubr.bf16.gmra.mrb[0].mxu0 %v850
    %v4141 = vpop.f32.mrb[0].mxu0
    %v4142 = vadd.f32 %v4029, %v4141
    %v4143 = vpop.f32.mrb[0].mxu0
    %v4144 = vadd.f32 %v4031, %v4143
    %v4145 = vpop.f32.mrb[0].mxu0
    %v4146 = vadd.f32 %v4033, %v4145
    %v4147 = vpop.f32.mrb[0].mxu0
    %v4148 = vadd.f32 %v4035, %v4147
    %4149 = vmatprep.mubr.bf16.mxu0 %v859
    %4150 = vmatmul.mubr.bf16.gmra.mrb[0].mxu0 %v858
    %v4151 = vpop.f32.mrb[0].mxu0
    %v4152 = vadd.f32 %v4039, %v4151
    %v4153 = vpop.f32.mrb[0].mxu0
    %v4154 = vadd.f32 %v4041, %v4153
    %v4155 = vpop.f32.mrb[0].mxu0
    %v4156 = vadd.f32 %v4043, %v4155
    %v4157 = vpop.f32.mrb[0].mxu0
    %v4158 = vadd.f32 %v4045, %v4157
    %4159 = vmatprep.mubr.bf16.mxu0 %v867
    %4160 = vmatmul.mubr.bf16.gmra.mrb[0].mxu0 %v866
    %v4161 = vpop.f32.mrb[0].mxu0
    %v4162 = vadd.f32 %v4049, %v4161
    %v4163 = vpop.f32.mrb[0].mxu0
    %v4164 = vadd.f32 %v4051, %v4163
    %v4165 = vpop.f32.mrb[0].mxu0
    %v4166 = vadd.f32 %v4053, %v4165
    %v4167 = vpop.f32.mrb[0].mxu0
    %v4168 = vadd.f32 %v4055, %v4167
    %4169 = vmatprep.mubr.bf16.mxu0 %v875
    %4170 = vmatmul.mubr.bf16.gmra.mrb[0].mxu0 %v874
    %v4171 = vpop.f32.mrb[0].mxu0
    %v4172 = vadd.f32 %v4059, %v4171
    %v4173 = vpop.f32.mrb[0].mxu0
    %v4174 = vadd.f32 %v4061, %v4173
    %v4175 = vpop.f32.mrb[0].mxu0
    %v4176 = vadd.f32 %v4063, %v4175
    %v4177 = vpop.f32.mrb[0].mxu0
    %v4178 = vadd.f32 %v4065, %v4177
    %4179 = vmatprep.mubr.bf16.mxu0 %v883
    %4180 = vmatmul.mubr.bf16.gmra.mrb[0].mxu0 %v882
    %v4181 = vpop.f32.mrb[0].mxu0
    %v4182 = vadd.f32 %v4069, %v4181
    %v4183 = vpop.f32.mrb[0].mxu0
    %v4184 = vadd.f32 %v4071, %v4183
    %v4185 = vpop.f32.mrb[0].mxu0
    %v4186 = vadd.f32 %v4073, %v4185
    %v4187 = vpop.f32.mrb[0].mxu0
    %v4188 = vadd.f32 %v4075, %v4187
    %4189 = vdwg.mxu0
    %4190 = vmatprep.subr.bf16.mxu0 %v2747
    %4191 = vmatpush1.bf16.msra.mxu0 %v2746
    %4192 = vmatprep.subr.bf16.mxu0 %v2755
    %4193 = vmatpush1.bf16.msra.mxu0 %v2754
    %4194 = vmatprep.subr.bf16.mxu0 %v2763
    %4195 = vmatpush1.bf16.msra.mxu0 %v2762
    %4196 = vmatprep.subr.bf16.mxu0 %v2771
    %4197 = vmatpush1.bf16.msra.mxu0 %v2770
    %4198 = vmatprep.subr.bf16.mxu0 %v2779
    %4199 = vmatpush1.bf16.msra.mxu0 %v2778
    %4200 = vmatprep.subr.bf16.mxu0 %v2787
    %4201 = vmatpush1.bf16.msra.mxu0 %v2786
    %4202 = vmatprep.subr.bf16.mxu0 %v2795
    %4203 = vmatpush1.bf16.msra.mxu0 %v2794
    %4204 = vmatprep.subr.bf16.mxu0 %v2803
    %4205 = vmatpush1.bf16.msra.mxu0 %v2802
    %4206 = vmatprep.subr.bf16.mxu0 %v2811
    %4207 = vmatpush1.bf16.msra.mxu0 %v2810
    %4208 = vmatprep.subr.bf16.mxu0 %v2819
    %4209 = vmatpush1.bf16.msra.mxu0 %v2818
    %4210 = vmatprep.subr.bf16.mxu0 %v2827
    %4211 = vmatpush1.bf16.msra.mxu0 %v2826
    %4212 = vmatprep.subr.bf16.mxu0 %v2835
    %4213 = vmatpush1.bf16.msra.mxu0 %v2834
    %4214 = vmatprep.subr.bf16.mxu0 %v2843
    %4215 = vmatpush1.bf16.msra.mxu0 %v2842
    %4216 = vmatprep.subr.bf16.mxu0 %v2851
    %4217 = vmatpush1.bf16.msra.mxu0 %v2850
    %4218 = vmatprep.subr.bf16.mxu0 %v2859
    %4219 = vmatpush1.bf16.msra.mxu0 %v2858
    %4220 = vmatprep.subr.bf16.mxu0 %v2867
    %4221 = vmatpush1.bf16.msra.mxu0 %v2866
    %4222 = vmatprep.mubr.bf16.mxu0 %v829
    %4223 = vmatmul.mubr.bf16.gmra.mrb[0].mxu0 %v828
    %v4224 = vpop.f32.mrb[0].mxu0
    %v4225 = vadd.f32 %v4112, %v4224
    %v4226 = vpop.f32.mrb[0].mxu0
    %v4227 = vadd.f32 %v4114, %v4226
    %v4228 = vpop.f32.mrb[0].mxu0
    %v4229 = vadd.f32 %v4116, %v4228
    %v4230 = vpop.f32.mrb[0].mxu0
    %v4231 = vadd.f32 %v4118, %v4230
    %4232 = vmatprep.mubr.bf16.mxu0 %v837
    %4233 = vmatmul.mubr.bf16.gmra.mrb[0].mxu0 %v836
    %v4234 = vpop.f32.mrb[0].mxu0
    %v4235 = vadd.f32 %v4122, %v4234
    %v4236 = vpop.f32.mrb[0].mxu0
    %v4237 = vadd.f32 %v4124, %v4236
    %v4238 = vpop.f32.mrb[0].mxu0
    %v4239 = vadd.f32 %v4126, %v4238
    %v4240 = vpop.f32.mrb[0].mxu0
    %v4241 = vadd.f32 %v4128, %v4240
    %4242 = vmatprep.mubr.bf16.mxu0 %v845
    %4243 = vmatmul.mubr.bf16.gmra.mrb[0].mxu0 %v844
    %v4244 = vpop.f32.mrb[0].mxu0
    %v4245 = vadd.f32 %v4132, %v4244
    %v4246 = vpop.f32.mrb[0].mxu0
    %v4247 = vadd.f32 %v4134, %v4246
    %v4248 = vpop.f32.mrb[0].mxu0
    %v4249 = vadd.f32 %v4136, %v4248
    %v4250 = vpop.f32.mrb[0].mxu0
    %v4251 = vadd.f32 %v4138, %v4250
    %4252 = vmatprep.mubr.bf16.mxu0 %v853
    %4253 = vmatmul.mubr.bf16.gmra.mrb[0].mxu0 %v852
    %v4254 = vpop.f32.mrb[0].mxu0
    %v4255 = vadd.f32 %v4142, %v4254
    %v4256 = vpop.f32.mrb[0].mxu0
    %v4257 = vadd.f32 %v4144, %v4256
    %v4258 = vpop.f32.mrb[0].mxu0
    %v4259 = vadd.f32 %v4146, %v4258
    %v4260 = vpop.f32.mrb[0].mxu0
    %v4261 = vadd.f32 %v4148, %v4260
    %4262 = vmatprep.mubr.bf16.mxu0 %v861
    %4263 = vmatmul.mubr.bf16.gmra.mrb[0].mxu0 %v860
    %v4264 = vpop.f32.mrb[0].mxu0
    %v4265 = vadd.f32 %v4152, %v4264
    %v4266 = vpop.f32.mrb[0].mxu0
    %v4267 = vadd.f32 %v4154, %v4266
    %v4268 = vpop.f32.mrb[0].mxu0
    %v4269 = vadd.f32 %v4156, %v4268
    %v4270 = vpop.f32.mrb[0].mxu0
    %v4271 = vadd.f32 %v4158, %v4270
    %4272 = vmatprep.mubr.bf16.mxu0 %v869
    %4273 = vmatmul.mubr.bf16.gmra.mrb[0].mxu0 %v868
    %v4274 = vpop.f32.mrb[0].mxu0
    %v4275 = vadd.f32 %v4162, %v4274
    %v4276 = vpop.f32.mrb[0].mxu0
    %v4277 = vadd.f32 %v4164, %v4276
    %v4278 = vpop.f32.mrb[0].mxu0
    %v4279 = vadd.f32 %v4166, %v4278
    %v4280 = vpop.f32.mrb[0].mxu0
    %v4281 = vadd.f32 %v4168, %v4280
    %4282 = vmatprep.mubr.bf16.mxu0 %v877
    %4283 = vmatmul.mubr.bf16.gmra.mrb[0].mxu0 %v876
    %v4284 = vpop.f32.mrb[0].mxu0
    %v4285 = vadd.f32 %v4172, %v4284
    %v4286 = vpop.f32.mrb[0].mxu0
    %v4287 = vadd.f32 %v4174, %v4286
    %v4288 = vpop.f32.mrb[0].mxu0
    %v4289 = vadd.f32 %v4176, %v4288
    %v4290 = vpop.f32.mrb[0].mxu0
    %v4291 = vadd.f32 %v4178, %v4290
    %4292 = vmatprep.mubr.bf16.mxu0 %v885
    %4293 = vmatmul.mubr.bf16.gmra.mrb[0].mxu0 %v884
    %v4294 = vpop.f32.mrb[0].mxu0
    %v4295 = vadd.f32 %v4182, %v4294
    %v4296 = vpop.f32.mrb[0].mxu0
    %v4297 = vadd.f32 %v4184, %v4296
    %v4298 = vpop.f32.mrb[0].mxu0
    %v4299 = vadd.f32 %v4186, %v4298
    %v4300 = vpop.f32.mrb[0].mxu0
    %v4301 = vadd.f32 %v4188, %v4300
    %4302 = vdwg.mxu0
    %4303 = vmatprep.subr.bf16.mxu0 %v2875
    %4304 = vmatpush1.bf16.msra.mxu0 %v2874
    %4305 = vmatprep.subr.bf16.mxu0 %v2883
    %4306 = vmatpush1.bf16.msra.mxu0 %v2882
    %4307 = vmatprep.subr.bf16.mxu0 %v2891
    %4308 = vmatpush1.bf16.msra.mxu0 %v2890
    %4309 = vmatprep.subr.bf16.mxu0 %v2899
    %4310 = vmatpush1.bf16.msra.mxu0 %v2898
    %4311 = vmatprep.subr.bf16.mxu0 %v2907
    %4312 = vmatpush1.bf16.msra.mxu0 %v2906
    %4313 = vmatprep.subr.bf16.mxu0 %v2915
    %4314 = vmatpush1.bf16.msra.mxu0 %v2914
    %4315 = vmatprep.subr.bf16.mxu0 %v2923
    %4316 = vmatpush1.bf16.msra.mxu0 %v2922
    %4317 = vmatprep.subr.bf16.mxu0 %v2931
    %4318 = vmatpush1.bf16.msra.mxu0 %v2930
    %4319 = vmatprep.subr.bf16.mxu0 %v2939
    %4320 = vmatpush1.bf16.msra.mxu0 %v2938
    %4321 = vmatprep.subr.bf16.mxu0 %v2947
    %4322 = vmatpush1.bf16.msra.mxu0 %v2946
    %4323 = vmatprep.subr.bf16.mxu0 %v2955
    %4324 = vmatpush1.bf16.msra.mxu0 %v2954
    %4325 = vmatprep.subr.bf16.mxu0 %v2963
    %4326 = vmatpush1.bf16.msra.mxu0 %v2962
    %4327 = vmatprep.subr.bf16.mxu0 %v2971
    %4328 = vmatpush1.bf16.msra.mxu0 %v2970
    %4329 = vmatprep.subr.bf16.mxu0 %v2979
    %4330 = vmatpush1.bf16.msra.mxu0 %v2978
    %4331 = vmatprep.subr.bf16.mxu0 %v2987
    %4332 = vmatpush1.bf16.msra.mxu0 %v2986
    %4333 = vmatprep.subr.bf16.mxu0 %v2995
    %4334 = vmatpush1.bf16.msra.mxu0 %v2994
    %4335 = vmatprep.mubr.bf16.mxu0 %v831
    %4336 = vmatmul.mubr.bf16.gmra.mrb[0].mxu0 %v830
    %v4337 = vpop.f32.mrb[0].mxu0
    %v4338 = vadd.f32 %v4225, %v4337
    %v4339 = vpop.f32.mrb[0].mxu0
    %v4340 = vadd.f32 %v4227, %v4339
    %v4341 = vpop.f32.mrb[0].mxu0
    %v4342 = vadd.f32 %v4229, %v4341
    %v4343 = vpop.f32.mrb[0].mxu0
    %v4344 = vadd.f32 %v4231, %v4343
    %4345 = vmatprep.mubr.bf16.mxu0 %v839
    %4346 = vmatmul.mubr.bf16.gmra.mrb[0].mxu0 %v838
    %v4347 = vpop.f32.mrb[0].mxu0
    %v4348 = vadd.f32 %v4235, %v4347
    %v4349 = vpop.f32.mrb[0].mxu0
    %v4350 = vadd.f32 %v4237, %v4349
    %v4351 = vpop.f32.mrb[0].mxu0
    %v4352 = vadd.f32 %v4239, %v4351
    %v4353 = vpop.f32.mrb[0].mxu0
    %v4354 = vadd.f32 %v4241, %v4353
    %4355 = vmatprep.mubr.bf16.mxu0 %v847
    %4356 = vmatmul.mubr.bf16.gmra.mrb[0].mxu0 %v846
    %v4357 = vpop.f32.mrb[0].mxu0
    %v4358 = vadd.f32 %v4245, %v4357
    %v4359 = vpop.f32.mrb[0].mxu0
    %v4360 = vadd.f32 %v4247, %v4359
    %v4361 = vpop.f32.mrb[0].mxu0
    %v4362 = vadd.f32 %v4249, %v4361
    %v4363 = vpop.f32.mrb[0].mxu0
    %v4364 = vadd.f32 %v4251, %v4363
    %4365 = vmatprep.mubr.bf16.mxu0 %v855
    %4366 = vmatmul.mubr.bf16.gmra.mrb[0].mxu0 %v854
    %v4367 = vpop.f32.mrb[0].mxu0
    %v4368 = vadd.f32 %v4255, %v4367
    %v4369 = vpop.f32.mrb[0].mxu0
    %v4370 = vadd.f32 %v4257, %v4369
    %v4371 = vpop.f32.mrb[0].mxu0
    %v4372 = vadd.f32 %v4259, %v4371
    %v4373 = vpop.f32.mrb[0].mxu0
    %v4374 = vadd.f32 %v4261, %v4373
    %4375 = vmatprep.mubr.bf16.mxu0 %v863
    %4376 = vmatmul.mubr.bf16.gmra.mrb[0].mxu0 %v862
    %v4377 = vpop.f32.mrb[0].mxu0
    %v4378 = vadd.f32 %v4265, %v4377
    %v4379 = vpop.f32.mrb[0].mxu0
    %v4380 = vadd.f32 %v4267, %v4379
    %v4381 = vpop.f32.mrb[0].mxu0
    %v4382 = vadd.f32 %v4269, %v4381
    %v4383 = vpop.f32.mrb[0].mxu0
    %v4384 = vadd.f32 %v4271, %v4383
    %4385 = vmatprep.mubr.bf16.mxu0 %v871
    %4386 = vmatmul.mubr.bf16.gmra.mrb[0].mxu0 %v870
    %v4387 = vpop.f32.mrb[0].mxu0
    %v4388 = vadd.f32 %v4275, %v4387
    %v4389 = vpop.f32.mrb[0].mxu0
    %v4390 = vadd.f32 %v4277, %v4389
    %v4391 = vpop.f32.mrb[0].mxu0
    %v4392 = vadd.f32 %v4279, %v4391
    %v4393 = vpop.f32.mrb[0].mxu0
    %v4394 = vadd.f32 %v4281, %v4393
    %4395 = vmatprep.mubr.bf16.mxu0 %v879
    %4396 = vmatmul.mubr.bf16.gmra.mrb[0].mxu0 %v878
    %v4397 = vpop.f32.mrb[0].mxu0
    %v4398 = vadd.f32 %v4285, %v4397
    %v4399 = vpop.f32.mrb[0].mxu0
    %v4400 = vadd.f32 %v4287, %v4399
    %v4401 = vpop.f32.mrb[0].mxu0
    %v4402 = vadd.f32 %v4289, %v4401
    %v4403 = vpop.f32.mrb[0].mxu0
    %v4404 = vadd.f32 %v4291, %v4403
    %4405 = vmatprep.mubr.bf16.mxu0 %v887
    %4406 = vmatmul.mubr.bf16.gmra.mrb[0].mxu0 %v886
    %v4407 = vpop.f32.mrb[0].mxu0
    %v4408 = vadd.f32 %v4295, %v4407
    %v4409 = vpop.f32.mrb[0].mxu0
    %v4410 = vadd.f32 %v4297, %v4409
    %v4411 = vpop.f32.mrb[0].mxu0
    %v4412 = vadd.f32 %v4299, %v4411
    %v4413 = vpop.f32.mrb[0].mxu0
    %v4414 = vadd.f32 %v4301, %v4413
    %4415 = vdwg.mxu0
    %4416 = vmatprep.subr.bf16.mxu0 %v2493
    %4417 = vmatpush1.bf16.msra.mxu0 %v2492
    %4418 = vmatprep.subr.bf16.mxu0 %v2501
    %4419 = vmatpush1.bf16.msra.mxu0 %v2500
    %4420 = vmatprep.subr.bf16.mxu0 %v2509
    %4421 = vmatpush1.bf16.msra.mxu0 %v2508
    %4422 = vmatprep.subr.bf16.mxu0 %v2517
    %4423 = vmatpush1.bf16.msra.mxu0 %v2516
    %4424 = vmatprep.subr.bf16.mxu0 %v2525
    %4425 = vmatpush1.bf16.msra.mxu0 %v2524
    %4426 = vmatprep.subr.bf16.mxu0 %v2533
    %4427 = vmatpush1.bf16.msra.mxu0 %v2532
    %4428 = vmatprep.subr.bf16.mxu0 %v2541
    %4429 = vmatpush1.bf16.msra.mxu0 %v2540
    %4430 = vmatprep.subr.bf16.mxu0 %v2549
    %4431 = vmatpush1.bf16.msra.mxu0 %v2548
    %4432 = vmatprep.subr.bf16.mxu0 %v2557
    %4433 = vmatpush1.bf16.msra.mxu0 %v2556
    %4434 = vmatprep.subr.bf16.mxu0 %v2565
    %4435 = vmatpush1.bf16.msra.mxu0 %v2564
    %4436 = vmatprep.subr.bf16.mxu0 %v2573
    %4437 = vmatpush1.bf16.msra.mxu0 %v2572
    %4438 = vmatprep.subr.bf16.mxu0 %v2581
    %4439 = vmatpush1.bf16.msra.mxu0 %v2580
    %4440 = vmatprep.subr.bf16.mxu0 %v2589
    %4441 = vmatpush1.bf16.msra.mxu0 %v2588
    %4442 = vmatprep.subr.bf16.mxu0 %v2597
    %4443 = vmatpush1.bf16.msra.mxu0 %v2596
    %4444 = vmatprep.subr.bf16.mxu0 %v2605
    %4445 = vmatpush1.bf16.msra.mxu0 %v2604
    %4446 = vmatprep.subr.bf16.mxu0 %v2613
    %4447 = vmatpush1.bf16.msra.mxu0 %v2612
    %4448 = vmatprep.mubr.bf16.mxu0 %v825
    %4449 = vmatmul.mubr.bf16.gmra.mrb[0].mxu0 %v824
    %v4450 = vpop.f32.mrb[0].mxu0
    %v4451 = vadd.f32 0.0, %v4450
    %v4452 = vpop.f32.mrb[0].mxu0
    %v4453 = vadd.f32 0.0, %v4452
    %v4454 = vpop.f32.mrb[0].mxu0
    %v4455 = vadd.f32 0.0, %v4454
    %v4456 = vpop.f32.mrb[0].mxu0
    %v4457 = vadd.f32 0.0, %v4456
    %4458 = vmatprep.mubr.bf16.mxu0 %v833
    %4459 = vmatmul.mubr.bf16.gmra.mrb[0].mxu0 %v832
    %v4460 = vpop.f32.mrb[0].mxu0
    %v4461 = vadd.f32 0.0, %v4460
    %v4462 = vpop.f32.mrb[0].mxu0
    %v4463 = vadd.f32 0.0, %v4462
    %v4464 = vpop.f32.mrb[0].mxu0
    %v4465 = vadd.f32 0.0, %v4464
    %v4466 = vpop.f32.mrb[0].mxu0
    %v4467 = vadd.f32 0.0, %v4466
    %4468 = vmatprep.mubr.bf16.mxu0 %v841
    %4469 = vmatmul.mubr.bf16.gmra.mrb[0].mxu0 %v840
    %v4470 = vpop.f32.mrb[0].mxu0
    %v4471 = vadd.f32 0.0, %v4470
    %v4472 = vpop.f32.mrb[0].mxu0
    %v4473 = vadd.f32 0.0, %v4472
    %v4474 = vpop.f32.mrb[0].mxu0
    %v4475 = vadd.f32 0.0, %v4474
    %v4476 = vpop.f32.mrb[0].mxu0
    %v4477 = vadd.f32 0.0, %v4476
    %4478 = vmatprep.mubr.bf16.mxu0 %v849
    %4479 = vmatmul.mubr.bf16.gmra.mrb[0].mxu0 %v848
    %v4480 = vpop.f32.mrb[0].mxu0
    %v4481 = vadd.f32 0.0, %v4480
    %v4482 = vpop.f32.mrb[0].mxu0
    %v4483 = vadd.f32 0.0, %v4482
    %v4484 = vpop.f32.mrb[0].mxu0
    %v4485 = vadd.f32 0.0, %v4484
    %v4486 = vpop.f32.mrb[0].mxu0
    %v4487 = vadd.f32 0.0, %v4486
    %4488 = vmatprep.mubr.bf16.mxu0 %v857
    %4489 = vmatmul.mubr.bf16.gmra.mrb[0].mxu0 %v856
    %v4490 = vpop.f32.mrb[0].mxu0
    %v4491 = vadd.f32 0.0, %v4490
    %v4492 = vpop.f32.mrb[0].mxu0
    %v4493 = vadd.f32 0.0, %v4492
    %v4494 = vpop.f32.mrb[0].mxu0
    %v4495 = vadd.f32 0.0, %v4494
    %v4496 = vpop.f32.mrb[0].mxu0
    %v4497 = vadd.f32 0.0, %v4496
    %4498 = vmatprep.mubr.bf16.mxu0 %v865
    %4499 = vmatmul.mubr.bf16.gmra.mrb[0].mxu0 %v864
    %v4500 = vpop.f32.mrb[0].mxu0
    %v4501 = vadd.f32 0.0, %v4500
    %v4502 = vpop.f32.mrb[0].mxu0
    %v4503 = vadd.f32 0.0, %v4502
    %v4504 = vpop.f32.mrb[0].mxu0
    %v4505 = vadd.f32 0.0, %v4504
    %v4506 = vpop.f32.mrb[0].mxu0
    %v4507 = vadd.f32 0.0, %v4506
    %4508 = vmatprep.mubr.bf16.mxu0 %v873
    %4509 = vmatmul.mubr.bf16.gmra.mrb[0].mxu0 %v872
    %v4510 = vpop.f32.mrb[0].mxu0
    %v4511 = vadd.f32 0.0, %v4510
    %v4512 = vpop.f32.mrb[0].mxu0
    %v4513 = vadd.f32 0.0, %v4512
    %v4514 = vpop.f32.mrb[0].mxu0
    %v4515 = vadd.f32 0.0, %v4514
    %v4516 = vpop.f32.mrb[0].mxu0
    %v4517 = vadd.f32 0.0, %v4516
    %4518 = vmatprep.mubr.bf16.mxu0 %v881
    %4519 = vmatmul.mubr.bf16.gmra.mrb[0].mxu0 %v880
    %v4520 = vpop.f32.mrb[0].mxu0
    %v4521 = vadd.f32 0.0, %v4520
    %v4522 = vpop.f32.mrb[0].mxu0
    %v4523 = vadd.f32 0.0, %v4522
    %v4524 = vpop.f32.mrb[0].mxu0
    %v4525 = vadd.f32 0.0, %v4524
    %v4526 = vpop.f32.mrb[0].mxu0
    %v4527 = vadd.f32 0.0, %v4526
    %4528 = vdwg.mxu0
    %4529 = vmatprep.subr.bf16.mxu0 %v2621
    %4530 = vmatpush1.bf16.msra.mxu0 %v2620
    %4531 = vmatprep.subr.bf16.mxu0 %v2629
    %4532 = vmatpush1.bf16.msra.mxu0 %v2628
    %4533 = vmatprep.subr.bf16.mxu0 %v2637
    %4534 = vmatpush1.bf16.msra.mxu0 %v2636
    %4535 = vmatprep.subr.bf16.mxu0 %v2645
    %4536 = vmatpush1.bf16.msra.mxu0 %v2644
    %4537 = vmatprep.subr.bf16.mxu0 %v2653
    %4538 = vmatpush1.bf16.msra.mxu0 %v2652
    %4539 = vmatprep.subr.bf16.mxu0 %v2661
    %4540 = vmatpush1.bf16.msra.mxu0 %v2660
    %4541 = vmatprep.subr.bf16.mxu0 %v2669
    %4542 = vmatpush1.bf16.msra.mxu0 %v2668
    %4543 = vmatprep.subr.bf16.mxu0 %v2677
    %4544 = vmatpush1.bf16.msra.mxu0 %v2676
    %4545 = vmatprep.subr.bf16.mxu0 %v2685
    %4546 = vmatpush1.bf16.msra.mxu0 %v2684
    %4547 = vmatprep.subr.bf16.mxu0 %v2693
    %4548 = vmatpush1.bf16.msra.mxu0 %v2692
    %4549 = vmatprep.subr.bf16.mxu0 %v2701
    %4550 = vmatpush1.bf16.msra.mxu0 %v2700
    %4551 = vmatprep.subr.bf16.mxu0 %v2709
    %4552 = vmatpush1.bf16.msra.mxu0 %v2708
    %4553 = vmatprep.subr.bf16.mxu0 %v2717
    %4554 = vmatpush1.bf16.msra.mxu0 %v2716
    %4555 = vmatprep.subr.bf16.mxu0 %v2725
    %4556 = vmatpush1.bf16.msra.mxu0 %v2724
    %4557 = vmatprep.subr.bf16.mxu0 %v2733
    %4558 = vmatpush1.bf16.msra.mxu0 %v2732
    %4559 = vmatprep.subr.bf16.mxu0 %v2741
    %4560 = vmatpush1.bf16.msra.mxu0 %v2740
    %4561 = vmatprep.mubr.bf16.mxu0 %v827
    %4562 = vmatmul.mubr.bf16.gmra.mrb[0].mxu0 %v826
    %v4563 = vpop.f32.mrb[0].mxu0
    %v4564 = vadd.f32 %v4451, %v4563
    %v4565 = vpop.f32.mrb[0].mxu0
    %v4566 = vadd.f32 %v4453, %v4565
    %v4567 = vpop.f32.mrb[0].mxu0
    %v4568 = vadd.f32 %v4455, %v4567
    %v4569 = vpop.f32.mrb[0].mxu0
    %v4570 = vadd.f32 %v4457, %v4569
    %4571 = vmatprep.mubr.bf16.mxu0 %v835
    %4572 = vmatmul.mubr.bf16.gmra.mrb[0].mxu0 %v834
    %v4573 = vpop.f32.mrb[0].mxu0
    %v4574 = vadd.f32 %v4461, %v4573
    %v4575 = vpop.f32.mrb[0].mxu0
    %v4576 = vadd.f32 %v4463, %v4575
    %v4577 = vpop.f32.mrb[0].mxu0
    %v4578 = vadd.f32 %v4465, %v4577
    %v4579 = vpop.f32.mrb[0].mxu0
    %v4580 = vadd.f32 %v4467, %v4579
    %4581 = vmatprep.mubr.bf16.mxu0 %v843
    %4582 = vmatmul.mubr.bf16.gmra.mrb[0].mxu0 %v842
    %v4583 = vpop.f32.mrb[0].mxu0
    %v4584 = vadd.f32 %v4471, %v4583
    %v4585 = vpop.f32.mrb[0].mxu0
    %v4586 = vadd.f32 %v4473, %v4585
    %v4587 = vpop.f32.mrb[0].mxu0
    %v4588 = vadd.f32 %v4475, %v4587
    %v4589 = vpop.f32.mrb[0].mxu0
    %v4590 = vadd.f32 %v4477, %v4589
    %4591 = vmatprep.mubr.bf16.mxu0 %v851
    %4592 = vmatmul.mubr.bf16.gmra.mrb[0].mxu0 %v850
    %v4593 = vpop.f32.mrb[0].mxu0
    %v4594 = vadd.f32 %v4481, %v4593
    %v4595 = vpop.f32.mrb[0].mxu0
    %v4596 = vadd.f32 %v4483, %v4595
    %v4597 = vpop.f32.mrb[0].mxu0
    %v4598 = vadd.f32 %v4485, %v4597
    %v4599 = vpop.f32.mrb[0].mxu0
    %v4600 = vadd.f32 %v4487, %v4599
    %4601 = vmatprep.mubr.bf16.mxu0 %v859
    %4602 = vmatmul.mubr.bf16.gmra.mrb[0].mxu0 %v858
    %v4603 = vpop.f32.mrb[0].mxu0
    %v4604 = vadd.f32 %v4491, %v4603
    %v4605 = vpop.f32.mrb[0].mxu0
    %v4606 = vadd.f32 %v4493, %v4605
    %v4607 = vpop.f32.mrb[0].mxu0
    %v4608 = vadd.f32 %v4495, %v4607
    %v4609 = vpop.f32.mrb[0].mxu0
    %v4610 = vadd.f32 %v4497, %v4609
    %4611 = vmatprep.mubr.bf16.mxu0 %v867
    %4612 = vmatmul.mubr.bf16.gmra.mrb[0].mxu0 %v866
    %v4613 = vpop.f32.mrb[0].mxu0
    %v4614 = vadd.f32 %v4501, %v4613
    %v4615 = vpop.f32.mrb[0].mxu0
    %v4616 = vadd.f32 %v4503, %v4615
    %v4617 = vpop.f32.mrb[0].mxu0
    %v4618 = vadd.f32 %v4505, %v4617
    %v4619 = vpop.f32.mrb[0].mxu0
    %v4620 = vadd.f32 %v4507, %v4619
    %4621 = vmatprep.mubr.bf16.mxu0 %v875
    %4622 = vmatmul.mubr.bf16.gmra.mrb[0].mxu0 %v874
    %v4623 = vpop.f32.mrb[0].mxu0
    %v4624 = vadd.f32 %v4511, %v4623
    %v4625 = vpop.f32.mrb[0].mxu0
    %v4626 = vadd.f32 %v4513, %v4625
    %v4627 = vpop.f32.mrb[0].mxu0
    %v4628 = vadd.f32 %v4515, %v4627
    %v4629 = vpop.f32.mrb[0].mxu0
    %v4630 = vadd.f32 %v4517, %v4629
    %4631 = vmatprep.mubr.bf16.mxu0 %v883
    %4632 = vmatmul.mubr.bf16.gmra.mrb[0].mxu0 %v882
    %v4633 = vpop.f32.mrb[0].mxu0
    %v4634 = vadd.f32 %v4521, %v4633
    %v4635 = vpop.f32.mrb[0].mxu0
    %v4636 = vadd.f32 %v4523, %v4635
    %v4637 = vpop.f32.mrb[0].mxu0
    %v4638 = vadd.f32 %v4525, %v4637
    %v4639 = vpop.f32.mrb[0].mxu0
    %v4640 = vadd.f32 %v4527, %v4639
    %4641 = vdwg.mxu0
    %4642 = vmatprep.subr.bf16.mxu0 %v2749
    %4643 = vmatpush1.bf16.msra.mxu0 %v2748
    %4644 = vmatprep.subr.bf16.mxu0 %v2757
    %4645 = vmatpush1.bf16.msra.mxu0 %v2756
    %4646 = vmatprep.subr.bf16.mxu0 %v2765
    %4647 = vmatpush1.bf16.msra.mxu0 %v2764
    %4648 = vmatprep.subr.bf16.mxu0 %v2773
    %4649 = vmatpush1.bf16.msra.mxu0 %v2772
    %4650 = vmatprep.subr.bf16.mxu0 %v2781
    %4651 = vmatpush1.bf16.msra.mxu0 %v2780
    %4652 = vmatprep.subr.bf16.mxu0 %v2789
    %4653 = vmatpush1.bf16.msra.mxu0 %v2788
    %4654 = vmatprep.subr.bf16.mxu0 %v2797
    %4655 = vmatpush1.bf16.msra.mxu0 %v2796
    %4656 = vmatprep.subr.bf16.mxu0 %v2805
    %4657 = vmatpush1.bf16.msra.mxu0 %v2804
    %4658 = vmatprep.subr.bf16.mxu0 %v2813
    %4659 = vmatpush1.bf16.msra.mxu0 %v2812
    %4660 = vmatprep.subr.bf16.mxu0 %v2821
    %4661 = vmatpush1.bf16.msra.mxu0 %v2820
    %4662 = vmatprep.subr.bf16.mxu0 %v2829
    %4663 = vmatpush1.bf16.msra.mxu0 %v2828
    %4664 = vmatprep.subr.bf16.mxu0 %v2837
    %4665 = vmatpush1.bf16.msra.mxu0 %v2836
    %4666 = vmatprep.subr.bf16.mxu0 %v2845
    %4667 = vmatpush1.bf16.msra.mxu0 %v2844
    %4668 = vmatprep.subr.bf16.mxu0 %v2853
    %4669 = vmatpush1.bf16.msra.mxu0 %v2852
    %4670 = vmatprep.subr.bf16.mxu0 %v2861
    %4671 = vmatpush1.bf16.msra.mxu0 %v2860
    %4672 = vmatprep.subr.bf16.mxu0 %v2869
    %4673 = vmatpush1.bf16.msra.mxu0 %v2868
    %4674 = vmatprep.mubr.bf16.mxu0 %v829
    %4675 = vmatmul.mubr.bf16.gmra.mrb[0].mxu0 %v828
    %v4676 = vpop.f32.mrb[0].mxu0
    %v4677 = vadd.f32 %v4564, %v4676
    %v4678 = vpop.f32.mrb[0].mxu0
    %v4679 = vadd.f32 %v4566, %v4678
    %v4680 = vpop.f32.mrb[0].mxu0
    %v4681 = vadd.f32 %v4568, %v4680
    %v4682 = vpop.f32.mrb[0].mxu0
    %v4683 = vadd.f32 %v4570, %v4682
    %4684 = vmatprep.mubr.bf16.mxu0 %v837
    %4685 = vmatmul.mubr.bf16.gmra.mrb[0].mxu0 %v836
    %v4686 = vpop.f32.mrb[0].mxu0
    %v4687 = vadd.f32 %v4574, %v4686
    %v4688 = vpop.f32.mrb[0].mxu0
    %v4689 = vadd.f32 %v4576, %v4688
    %v4690 = vpop.f32.mrb[0].mxu0
    %v4691 = vadd.f32 %v4578, %v4690
    %v4692 = vpop.f32.mrb[0].mxu0
    %v4693 = vadd.f32 %v4580, %v4692
    %4694 = vmatprep.mubr.bf16.mxu0 %v845
    %4695 = vmatmul.mubr.bf16.gmra.mrb[0].mxu0 %v844
    %v4696 = vpop.f32.mrb[0].mxu0
    %v4697 = vadd.f32 %v4584, %v4696
    %v4698 = vpop.f32.mrb[0].mxu0
    %v4699 = vadd.f32 %v4586, %v4698
    %v4700 = vpop.f32.mrb[0].mxu0
    %v4701 = vadd.f32 %v4588, %v4700
    %v4702 = vpop.f32.mrb[0].mxu0
    %v4703 = vadd.f32 %v4590, %v4702
    %4704 = vmatprep.mubr.bf16.mxu0 %v853
    %4705 = vmatmul.mubr.bf16.gmra.mrb[0].mxu0 %v852
    %v4706 = vpop.f32.mrb[0].mxu0
    %v4707 = vadd.f32 %v4594, %v4706
    %v4708 = vpop.f32.mrb[0].mxu0
    %v4709 = vadd.f32 %v4596, %v4708
    %v4710 = vpop.f32.mrb[0].mxu0
    %v4711 = vadd.f32 %v4598, %v4710
    %v4712 = vpop.f32.mrb[0].mxu0
    %v4713 = vadd.f32 %v4600, %v4712
    %4714 = vmatprep.mubr.bf16.mxu0 %v861
    %4715 = vmatmul.mubr.bf16.gmra.mrb[0].mxu0 %v860
    %v4716 = vpop.f32.mrb[0].mxu0
    %v4717 = vadd.f32 %v4604, %v4716
    %v4718 = vpop.f32.mrb[0].mxu0
    %v4719 = vadd.f32 %v4606, %v4718
    %v4720 = vpop.f32.mrb[0].mxu0
    %v4721 = vadd.f32 %v4608, %v4720
    %v4722 = vpop.f32.mrb[0].mxu0
    %v4723 = vadd.f32 %v4610, %v4722
    %4724 = vmatprep.mubr.bf16.mxu0 %v869
    %4725 = vmatmul.mubr.bf16.gmra.mrb[0].mxu0 %v868
    %v4726 = vpop.f32.mrb[0].mxu0
    %v4727 = vadd.f32 %v4614, %v4726
    %v4728 = vpop.f32.mrb[0].mxu0
    %v4729 = vadd.f32 %v4616, %v4728
    %v4730 = vpop.f32.mrb[0].mxu0
    %v4731 = vadd.f32 %v4618, %v4730
    %v4732 = vpop.f32.mrb[0].mxu0
    %v4733 = vadd.f32 %v4620, %v4732
    %4734 = vmatprep.mubr.bf16.mxu0 %v877
    %4735 = vmatmul.mubr.bf16.gmra.mrb[0].mxu0 %v876
    %v4736 = vpop.f32.mrb[0].mxu0
    %v4737 = vadd.f32 %v4624, %v4736
    %v4738 = vpop.f32.mrb[0].mxu0
    %v4739 = vadd.f32 %v4626, %v4738
    %v4740 = vpop.f32.mrb[0].mxu0
    %v4741 = vadd.f32 %v4628, %v4740
    %v4742 = vpop.f32.mrb[0].mxu0
    %v4743 = vadd.f32 %v4630, %v4742
    %4744 = vmatprep.mubr.bf16.mxu0 %v885
    %4745 = vmatmul.mubr.bf16.gmra.mrb[0].mxu0 %v884
    %v4746 = vpop.f32.mrb[0].mxu0
    %v4747 = vadd.f32 %v4634, %v4746
    %v4748 = vpop.f32.mrb[0].mxu0
    %v4749 = vadd.f32 %v4636, %v4748
    %v4750 = vpop.f32.mrb[0].mxu0
    %v4751 = vadd.f32 %v4638, %v4750
    %v4752 = vpop.f32.mrb[0].mxu0
    %v4753 = vadd.f32 %v4640, %v4752
    %4754 = vdwg.mxu0
    %4755 = vmatprep.subr.bf16.mxu0 %v2877
    %4756 = vmatpush1.bf16.msra.mxu0 %v2876
    %4757 = vmatprep.subr.bf16.mxu0 %v2885
    %4758 = vmatpush1.bf16.msra.mxu0 %v2884
    %4759 = vmatprep.subr.bf16.mxu0 %v2893
    %4760 = vmatpush1.bf16.msra.mxu0 %v2892
    %4761 = vmatprep.subr.bf16.mxu0 %v2901
    %4762 = vmatpush1.bf16.msra.mxu0 %v2900
    %4763 = vmatprep.subr.bf16.mxu0 %v2909
    %4764 = vmatpush1.bf16.msra.mxu0 %v2908
    %4765 = vmatprep.subr.bf16.mxu0 %v2917
    %4766 = vmatpush1.bf16.msra.mxu0 %v2916
    %4767 = vmatprep.subr.bf16.mxu0 %v2925
    %4768 = vmatpush1.bf16.msra.mxu0 %v2924
    %4769 = vmatprep.subr.bf16.mxu0 %v2933
    %4770 = vmatpush1.bf16.msra.mxu0 %v2932
    %4771 = vmatprep.subr.bf16.mxu0 %v2941
    %4772 = vmatpush1.bf16.msra.mxu0 %v2940
    %4773 = vmatprep.subr.bf16.mxu0 %v2949
    %4774 = vmatpush1.bf16.msra.mxu0 %v2948
    %4775 = vmatprep.subr.bf16.mxu0 %v2957
    %4776 = vmatpush1.bf16.msra.mxu0 %v2956
    %4777 = vmatprep.subr.bf16.mxu0 %v2965
    %4778 = vmatpush1.bf16.msra.mxu0 %v2964
    %4779 = vmatprep.subr.bf16.mxu0 %v2973
    %4780 = vmatpush1.bf16.msra.mxu0 %v2972
    %4781 = vmatprep.subr.bf16.mxu0 %v2981
    %4782 = vmatpush1.bf16.msra.mxu0 %v2980
    %4783 = vmatprep.subr.bf16.mxu0 %v2989
    %4784 = vmatpush1.bf16.msra.mxu0 %v2988
    %4785 = vmatprep.subr.bf16.mxu0 %v2997
    %4786 = vmatpush1.bf16.msra.mxu0 %v2996
    %4787 = vmatprep.mubr.bf16.mxu0 %v831
    %4788 = vmatmul.mubr.bf16.gmra.mrb[0].mxu0 %v830
    %v4789 = vpop.f32.mrb[0].mxu0
    %v4790 = vadd.f32 %v4677, %v4789
    %v4791 = vpop.f32.mrb[0].mxu0
    %v4792 = vadd.f32 %v4679, %v4791
    %v4793 = vpop.f32.mrb[0].mxu0
    %v4794 = vadd.f32 %v4681, %v4793
    %v4795 = vpop.f32.mrb[0].mxu0
    %v4796 = vadd.f32 %v4683, %v4795
    %4797 = vmatprep.mubr.bf16.mxu0 %v839
    %4798 = vmatmul.mubr.bf16.gmra.mrb[0].mxu0 %v838
    %v4799 = vpop.f32.mrb[0].mxu0
    %v4800 = vadd.f32 %v4687, %v4799
    %v4801 = vpop.f32.mrb[0].mxu0
    %v4802 = vadd.f32 %v4689, %v4801
    %v4803 = vpop.f32.mrb[0].mxu0
    %v4804 = vadd.f32 %v4691, %v4803
    %v4805 = vpop.f32.mrb[0].mxu0
    %v4806 = vadd.f32 %v4693, %v4805
    %4807 = vmatprep.mubr.bf16.mxu0 %v847
    %4808 = vmatmul.mubr.bf16.gmra.mrb[0].mxu0 %v846
    %v4809 = vpop.f32.mrb[0].mxu0
    %v4810 = vadd.f32 %v4697, %v4809
    %v4811 = vpop.f32.mrb[0].mxu0
    %v4812 = vadd.f32 %v4699, %v4811
    %v4813 = vpop.f32.mrb[0].mxu0
    %v4814 = vadd.f32 %v4701, %v4813
    %v4815 = vpop.f32.mrb[0].mxu0
    %v4816 = vadd.f32 %v4703, %v4815
    %4817 = vmatprep.mubr.bf16.mxu0 %v855
    %4818 = vmatmul.mubr.bf16.gmra.mrb[0].mxu0 %v854
    %v4819 = vpop.f32.mrb[0].mxu0
    %v4820 = vadd.f32 %v4707, %v4819
    %v4821 = vpop.f32.mrb[0].mxu0
    %v4822 = vadd.f32 %v4709, %v4821
    %v4823 = vpop.f32.mrb[0].mxu0
    %v4824 = vadd.f32 %v4711, %v4823
    %v4825 = vpop.f32.mrb[0].mxu0
    %v4826 = vadd.f32 %v4713, %v4825
    %4827 = vmatprep.mubr.bf16.mxu0 %v863
    %4828 = vmatmul.mubr.bf16.gmra.mrb[0].mxu0 %v862
    %v4829 = vpop.f32.mrb[0].mxu0
    %v4830 = vadd.f32 %v4717, %v4829
    %v4831 = vpop.f32.mrb[0].mxu0
    %v4832 = vadd.f32 %v4719, %v4831
    %v4833 = vpop.f32.mrb[0].mxu0
    %v4834 = vadd.f32 %v4721, %v4833
    %v4835 = vpop.f32.mrb[0].mxu0
    %v4836 = vadd.f32 %v4723, %v4835
    %4837 = vmatprep.mubr.bf16.mxu0 %v871
    %4838 = vmatmul.mubr.bf16.gmra.mrb[0].mxu0 %v870
    %v4839 = vpop.f32.mrb[0].mxu0
    %v4840 = vadd.f32 %v4727, %v4839
    %v4841 = vpop.f32.mrb[0].mxu0
    %v4842 = vadd.f32 %v4729, %v4841
    %v4843 = vpop.f32.mrb[0].mxu0
    %v4844 = vadd.f32 %v4731, %v4843
    %v4845 = vpop.f32.mrb[0].mxu0
    %v4846 = vadd.f32 %v4733, %v4845
    %4847 = vmatprep.mubr.bf16.mxu0 %v879
    %4848 = vmatmul.mubr.bf16.gmra.mrb[0].mxu0 %v878
    %v4849 = vpop.f32.mrb[0].mxu0
    %v4850 = vadd.f32 %v4737, %v4849
    %v4851 = vpop.f32.mrb[0].mxu0
    %v4852 = vadd.f32 %v4739, %v4851
    %v4853 = vpop.f32.mrb[0].mxu0
    %v4854 = vadd.f32 %v4741, %v4853
    %v4855 = vpop.f32.mrb[0].mxu0
    %v4856 = vadd.f32 %v4743, %v4855
    %4857 = vmatprep.mubr.bf16.mxu0 %v887
    %4858 = vmatmul.mubr.bf16.gmra.mrb[0].mxu0 %v886
    %v4859 = vpop.f32.mrb[0].mxu0
    %v4860 = vadd.f32 %v4747, %v4859
    %v4861 = vpop.f32.mrb[0].mxu0
    %v4862 = vadd.f32 %v4749, %v4861
    %v4863 = vpop.f32.mrb[0].mxu0
    %v4864 = vadd.f32 %v4751, %v4863
    %v4865 = vpop.f32.mrb[0].mxu0
    %v4866 = vadd.f32 %v4753, %v4865
    %4867 = vdwg.mxu0
    %4868 = vmatprep.subr.bf16.mxu0 %v2495
    %4869 = vmatpush1.bf16.msra.mxu0 %v2494
    %4870 = vmatprep.subr.bf16.mxu0 %v2503
    %4871 = vmatpush1.bf16.msra.mxu0 %v2502
    %4872 = vmatprep.subr.bf16.mxu0 %v2511
    %4873 = vmatpush1.bf16.msra.mxu0 %v2510
    %4874 = vmatprep.subr.bf16.mxu0 %v2519
    %4875 = vmatpush1.bf16.msra.mxu0 %v2518
    %4876 = vmatprep.subr.bf16.mxu0 %v2527
    %4877 = vmatpush1.bf16.msra.mxu0 %v2526
    %4878 = vmatprep.subr.bf16.mxu0 %v2535
    %4879 = vmatpush1.bf16.msra.mxu0 %v2534
    %4880 = vmatprep.subr.bf16.mxu0 %v2543
    %4881 = vmatpush1.bf16.msra.mxu0 %v2542
    %4882 = vmatprep.subr.bf16.mxu0 %v2551
    %4883 = vmatpush1.bf16.msra.mxu0 %v2550
    %4884 = vmatprep.subr.bf16.mxu0 %v2559
    %4885 = vmatpush1.bf16.msra.mxu0 %v2558
    %4886 = vmatprep.subr.bf16.mxu0 %v2567
    %4887 = vmatpush1.bf16.msra.mxu0 %v2566
    %4888 = vmatprep.subr.bf16.mxu0 %v2575
    %4889 = vmatpush1.bf16.msra.mxu0 %v2574
    %4890 = vmatprep.subr.bf16.mxu0 %v2583
    %4891 = vmatpush1.bf16.msra.mxu0 %v2582
    %4892 = vmatprep.subr.bf16.mxu0 %v2591
    %4893 = vmatpush1.bf16.msra.mxu0 %v2590
    %4894 = vmatprep.subr.bf16.mxu0 %v2599
    %4895 = vmatpush1.bf16.msra.mxu0 %v2598
    %4896 = vmatprep.subr.bf16.mxu0 %v2607
    %4897 = vmatpush1.bf16.msra.mxu0 %v2606
    %4898 = vmatprep.subr.bf16.mxu0 %v2615
    %4899 = vmatpush1.bf16.msra.mxu0 %v2614
    %4900 = vmatprep.mubr.bf16.mxu0 %v825
    %4901 = vmatmul.mubr.bf16.gmra.mrb[0].mxu0 %v824
    %v4902 = vpop.f32.mrb[0].mxu0
    %v4903 = vadd.f32 0.0, %v4902
    %v4904 = vpop.f32.mrb[0].mxu0
    %v4905 = vadd.f32 0.0, %v4904
    %v4906 = vpop.f32.mrb[0].mxu0
    %v4907 = vadd.f32 0.0, %v4906
    %v4908 = vpop.f32.mrb[0].mxu0
    %v4909 = vadd.f32 0.0, %v4908
    %4910 = vmatprep.mubr.bf16.mxu0 %v833
    %4911 = vmatmul.mubr.bf16.gmra.mrb[0].mxu0 %v832
    %v4912 = vpop.f32.mrb[0].mxu0
    %v4913 = vadd.f32 0.0, %v4912
    %v4914 = vpop.f32.mrb[0].mxu0
    %v4915 = vadd.f32 0.0, %v4914
    %v4916 = vpop.f32.mrb[0].mxu0
    %v4917 = vadd.f32 0.0, %v4916
    %v4918 = vpop.f32.mrb[0].mxu0
    %v4919 = vadd.f32 0.0, %v4918
    %4920 = vmatprep.mubr.bf16.mxu0 %v841
    %4921 = vmatmul.mubr.bf16.gmra.mrb[0].mxu0 %v840
    %v4922 = vpop.f32.mrb[0].mxu0
    %v4923 = vadd.f32 0.0, %v4922
    %v4924 = vpop.f32.mrb[0].mxu0
    %v4925 = vadd.f32 0.0, %v4924
    %v4926 = vpop.f32.mrb[0].mxu0
    %v4927 = vadd.f32 0.0, %v4926
    %v4928 = vpop.f32.mrb[0].mxu0
    %v4929 = vadd.f32 0.0, %v4928
    %4930 = vmatprep.mubr.bf16.mxu0 %v849
    %4931 = vmatmul.mubr.bf16.gmra.mrb[0].mxu0 %v848
    %v4932 = vpop.f32.mrb[0].mxu0
    %v4933 = vadd.f32 0.0, %v4932
    %v4934 = vpop.f32.mrb[0].mxu0
    %v4935 = vadd.f32 0.0, %v4934
    %v4936 = vpop.f32.mrb[0].mxu0
    %v4937 = vadd.f32 0.0, %v4936
    %v4938 = vpop.f32.mrb[0].mxu0
    %v4939 = vadd.f32 0.0, %v4938
    %4940 = vmatprep.mubr.bf16.mxu0 %v857
    %4941 = vmatmul.mubr.bf16.gmra.mrb[0].mxu0 %v856
    %v4942 = vpop.f32.mrb[0].mxu0
    %v4943 = vadd.f32 0.0, %v4942
    %v4944 = vpop.f32.mrb[0].mxu0
    %v4945 = vadd.f32 0.0, %v4944
    %v4946 = vpop.f32.mrb[0].mxu0
    %v4947 = vadd.f32 0.0, %v4946
    %v4948 = vpop.f32.mrb[0].mxu0
    %v4949 = vadd.f32 0.0, %v4948
    %4950 = vmatprep.mubr.bf16.mxu0 %v865
    %4951 = vmatmul.mubr.bf16.gmra.mrb[0].mxu0 %v864
    %v4952 = vpop.f32.mrb[0].mxu0
    %v4953 = vadd.f32 0.0, %v4952
    %v4954 = vpop.f32.mrb[0].mxu0
    %v4955 = vadd.f32 0.0, %v4954
    %v4956 = vpop.f32.mrb[0].mxu0
    %v4957 = vadd.f32 0.0, %v4956
    %v4958 = vpop.f32.mrb[0].mxu0
    %v4959 = vadd.f32 0.0, %v4958
    %4960 = vmatprep.mubr.bf16.mxu0 %v873
    %4961 = vmatmul.mubr.bf16.gmra.mrb[0].mxu0 %v872
    %v4962 = vpop.f32.mrb[0].mxu0
    %v4963 = vadd.f32 0.0, %v4962
    %v4964 = vpop.f32.mrb[0].mxu0
    %v4965 = vadd.f32 0.0, %v4964
    %v4966 = vpop.f32.mrb[0].mxu0
    %v4967 = vadd.f32 0.0, %v4966
    %v4968 = vpop.f32.mrb[0].mxu0
    %v4969 = vadd.f32 0.0, %v4968
    %4970 = vmatprep.mubr.bf16.mxu0 %v881
    %4971 = vmatmul.mubr.bf16.gmra.mrb[0].mxu0 %v880
    %v4972 = vpop.f32.mrb[0].mxu0
    %v4973 = vadd.f32 0.0, %v4972
    %v4974 = vpop.f32.mrb[0].mxu0
    %v4975 = vadd.f32 0.0, %v4974
    %v4976 = vpop.f32.mrb[0].mxu0
    %v4977 = vadd.f32 0.0, %v4976
    %v4978 = vpop.f32.mrb[0].mxu0
    %v4979 = vadd.f32 0.0, %v4978
    %4980 = vdwg.mxu0
    %4981 = vmatprep.subr.bf16.mxu0 %v2623
    %4982 = vmatpush1.bf16.msra.mxu0 %v2622
    %4983 = vmatprep.subr.bf16.mxu0 %v2631
    %4984 = vmatpush1.bf16.msra.mxu0 %v2630
    %4985 = vmatprep.subr.bf16.mxu0 %v2639
    %4986 = vmatpush1.bf16.msra.mxu0 %v2638
    %4987 = vmatprep.subr.bf16.mxu0 %v2647
    %4988 = vmatpush1.bf16.msra.mxu0 %v2646
    %4989 = vmatprep.subr.bf16.mxu0 %v2655
    %4990 = vmatpush1.bf16.msra.mxu0 %v2654
    %4991 = vmatprep.subr.bf16.mxu0 %v2663
    %4992 = vmatpush1.bf16.msra.mxu0 %v2662
    %4993 = vmatprep.subr.bf16.mxu0 %v2671
    %4994 = vmatpush1.bf16.msra.mxu0 %v2670
    %4995 = vmatprep.subr.bf16.mxu0 %v2679
    %4996 = vmatpush1.bf16.msra.mxu0 %v2678
    %4997 = vmatprep.subr.bf16.mxu0 %v2687
    %4998 = vmatpush1.bf16.msra.mxu0 %v2686
    %4999 = vmatprep.subr.bf16.mxu0 %v2695
    %5000 = vmatpush1.bf16.msra.mxu0 %v2694
    %5001 = vmatprep.subr.bf16.mxu0 %v2703
    %5002 = vmatpush1.bf16.msra.mxu0 %v2702
    %5003 = vmatprep.subr.bf16.mxu0 %v2711
    %5004 = vmatpush1.bf16.msra.mxu0 %v2710
    %5005 = vmatprep.subr.bf16.mxu0 %v2719
    %5006 = vmatpush1.bf16.msra.mxu0 %v2718
    %5007 = vmatprep.subr.bf16.mxu0 %v2727
    %5008 = vmatpush1.bf16.msra.mxu0 %v2726
    %5009 = vmatprep.subr.bf16.mxu0 %v2735
    %5010 = vmatpush1.bf16.msra.mxu0 %v2734
    %5011 = vmatprep.subr.bf16.mxu0 %v2743
    %5012 = vmatpush1.bf16.msra.mxu0 %v2742
    %5013 = vmatprep.mubr.bf16.mxu0 %v827
    %5014 = vmatmul.mubr.bf16.gmra.mrb[0].mxu0 %v826
    %v5015 = vpop.f32.mrb[0].mxu0
    %v5016 = vadd.f32 %v4903, %v5015
    %v5017 = vpop.f32.mrb[0].mxu0
    %v5018 = vadd.f32 %v4905, %v5017
    %v5019 = vpop.f32.mrb[0].mxu0
    %v5020 = vadd.f32 %v4907, %v5019
    %v5021 = vpop.f32.mrb[0].mxu0
    %v5022 = vadd.f32 %v4909, %v5021
    %5023 = vmatprep.mubr.bf16.mxu0 %v835
    %5024 = vmatmul.mubr.bf16.gmra.mrb[0].mxu0 %v834
    %v5025 = vpop.f32.mrb[0].mxu0
    %v5026 = vadd.f32 %v4913, %v5025
    %v5027 = vpop.f32.mrb[0].mxu0
    %v5028 = vadd.f32 %v4915, %v5027
    %v5029 = vpop.f32.mrb[0].mxu0
    %v5030 = vadd.f32 %v4917, %v5029
    %v5031 = vpop.f32.mrb[0].mxu0
    %v5032 = vadd.f32 %v4919, %v5031
    %5033 = vmatprep.mubr.bf16.mxu0 %v843
    %5034 = vmatmul.mubr.bf16.gmra.mrb[0].mxu0 %v842
    %v5035 = vpop.f32.mrb[0].mxu0
    %v5036 = vadd.f32 %v4923, %v5035
    %v5037 = vpop.f32.mrb[0].mxu0
    %v5038 = vadd.f32 %v4925, %v5037
    %v5039 = vpop.f32.mrb[0].mxu0
    %v5040 = vadd.f32 %v4927, %v5039
    %v5041 = vpop.f32.mrb[0].mxu0
    %v5042 = vadd.f32 %v4929, %v5041
    %5043 = vmatprep.mubr.bf16.mxu0 %v851
    %5044 = vmatmul.mubr.bf16.gmra.mrb[0].mxu0 %v850
    %v5045 = vpop.f32.mrb[0].mxu0
    %v5046 = vadd.f32 %v4933, %v5045
    %v5047 = vpop.f32.mrb[0].mxu0
    %v5048 = vadd.f32 %v4935, %v5047
    %v5049 = vpop.f32.mrb[0].mxu0
    %v5050 = vadd.f32 %v4937, %v5049
    %v5051 = vpop.f32.mrb[0].mxu0
    %v5052 = vadd.f32 %v4939, %v5051
    %5053 = vmatprep.mubr.bf16.mxu0 %v859
    %5054 = vmatmul.mubr.bf16.gmra.mrb[0].mxu0 %v858
    %v5055 = vpop.f32.mrb[0].mxu0
    %v5056 = vadd.f32 %v4943, %v5055
    %v5057 = vpop.f32.mrb[0].mxu0
    %v5058 = vadd.f32 %v4945, %v5057
    %v5059 = vpop.f32.mrb[0].mxu0
    %v5060 = vadd.f32 %v4947, %v5059
    %v5061 = vpop.f32.mrb[0].mxu0
    %v5062 = vadd.f32 %v4949, %v5061
    %5063 = vmatprep.mubr.bf16.mxu0 %v867
    %5064 = vmatmul.mubr.bf16.gmra.mrb[0].mxu0 %v866
    %v5065 = vpop.f32.mrb[0].mxu0
    %v5066 = vadd.f32 %v4953, %v5065
    %v5067 = vpop.f32.mrb[0].mxu0
    %v5068 = vadd.f32 %v4955, %v5067
    %v5069 = vpop.f32.mrb[0].mxu0
    %v5070 = vadd.f32 %v4957, %v5069
    %v5071 = vpop.f32.mrb[0].mxu0
    %v5072 = vadd.f32 %v4959, %v5071
    %5073 = vmatprep.mubr.bf16.mxu0 %v875
    %5074 = vmatmul.mubr.bf16.gmra.mrb[0].mxu0 %v874
    %v5075 = vpop.f32.mrb[0].mxu0
    %v5076 = vadd.f32 %v4963, %v5075
    %v5077 = vpop.f32.mrb[0].mxu0
    %v5078 = vadd.f32 %v4965, %v5077
    %v5079 = vpop.f32.mrb[0].mxu0
    %v5080 = vadd.f32 %v4967, %v5079
    %v5081 = vpop.f32.mrb[0].mxu0
    %v5082 = vadd.f32 %v4969, %v5081
    %5083 = vmatprep.mubr.bf16.mxu0 %v883
    %5084 = vmatmul.mubr.bf16.gmra.mrb[0].mxu0 %v882
    %v5085 = vpop.f32.mrb[0].mxu0
    %v5086 = vadd.f32 %v4973, %v5085
    %v5087 = vpop.f32.mrb[0].mxu0
    %v5088 = vadd.f32 %v4975, %v5087
    %v5089 = vpop.f32.mrb[0].mxu0
    %v5090 = vadd.f32 %v4977, %v5089
    %v5091 = vpop.f32.mrb[0].mxu0
    %v5092 = vadd.f32 %v4979, %v5091
    %5093 = vdwg.mxu0
    %5094 = vmatprep.subr.bf16.mxu0 %v2751
    %5095 = vmatpush1.bf16.msra.mxu0 %v2750
    %5096 = vmatprep.subr.bf16.mxu0 %v2759
    %5097 = vmatpush1.bf16.msra.mxu0 %v2758
    %5098 = vmatprep.subr.bf16.mxu0 %v2767
    %5099 = vmatpush1.bf16.msra.mxu0 %v2766
    %5100 = vmatprep.subr.bf16.mxu0 %v2775
    %5101 = vmatpush1.bf16.msra.mxu0 %v2774
    %5102 = vmatprep.subr.bf16.mxu0 %v2783
    %5103 = vmatpush1.bf16.msra.mxu0 %v2782
    %5104 = vmatprep.subr.bf16.mxu0 %v2791
    %5105 = vmatpush1.bf16.msra.mxu0 %v2790
    %5106 = vmatprep.subr.bf16.mxu0 %v2799
    %5107 = vmatpush1.bf16.msra.mxu0 %v2798
    %5108 = vmatprep.subr.bf16.mxu0 %v2807
    %5109 = vmatpush1.bf16.msra.mxu0 %v2806
    %5110 = vmatprep.subr.bf16.mxu0 %v2815
    %5111 = vmatpush1.bf16.msra.mxu0 %v2814
    %5112 = vmatprep.subr.bf16.mxu0 %v2823
    %5113 = vmatpush1.bf16.msra.mxu0 %v2822
    %5114 = vmatprep.subr.bf16.mxu0 %v2831
    %5115 = vmatpush1.bf16.msra.mxu0 %v2830
    %5116 = vmatprep.subr.bf16.mxu0 %v2839
    %5117 = vmatpush1.bf16.msra.mxu0 %v2838
    %5118 = vmatprep.subr.bf16.mxu0 %v2847
    %5119 = vmatpush1.bf16.msra.mxu0 %v2846
    %5120 = vmatprep.subr.bf16.mxu0 %v2855
    %5121 = vmatpush1.bf16.msra.mxu0 %v2854
    %5122 = vmatprep.subr.bf16.mxu0 %v2863
    %5123 = vmatpush1.bf16.msra.mxu0 %v2862
    %5124 = vmatprep.subr.bf16.mxu0 %v2871
    %5125 = vmatpush1.bf16.msra.mxu0 %v2870
    %5126 = vmatprep.mubr.bf16.mxu0 %v829
    %5127 = vmatmul.mubr.bf16.gmra.mrb[0].mxu0 %v828
    %v5128 = vpop.f32.mrb[0].mxu0
    %v5129 = vadd.f32 %v5016, %v5128
    %v5130 = vpop.f32.mrb[0].mxu0
    %v5131 = vadd.f32 %v5018, %v5130
    %v5132 = vpop.f32.mrb[0].mxu0
    %v5133 = vadd.f32 %v5020, %v5132
    %v5134 = vpop.f32.mrb[0].mxu0
    %v5135 = vadd.f32 %v5022, %v5134
    %5136 = vmatprep.mubr.bf16.mxu0 %v837
    %5137 = vmatmul.mubr.bf16.gmra.mrb[0].mxu0 %v836
    %v5138 = vpop.f32.mrb[0].mxu0
    %v5139 = vadd.f32 %v5026, %v5138
    %v5140 = vpop.f32.mrb[0].mxu0
    %v5141 = vadd.f32 %v5028, %v5140
    %v5142 = vpop.f32.mrb[0].mxu0
    %v5143 = vadd.f32 %v5030, %v5142
    %v5144 = vpop.f32.mrb[0].mxu0
    %v5145 = vadd.f32 %v5032, %v5144
    %5146 = vmatprep.mubr.bf16.mxu0 %v845
    %5147 = vmatmul.mubr.bf16.gmra.mrb[0].mxu0 %v844
    %v5148 = vpop.f32.mrb[0].mxu0
    %v5149 = vadd.f32 %v5036, %v5148
    %v5150 = vpop.f32.mrb[0].mxu0
    %v5151 = vadd.f32 %v5038, %v5150
    %v5152 = vpop.f32.mrb[0].mxu0
    %v5153 = vadd.f32 %v5040, %v5152
    %v5154 = vpop.f32.mrb[0].mxu0
    %v5155 = vadd.f32 %v5042, %v5154
    %5156 = vmatprep.mubr.bf16.mxu0 %v853
    %5157 = vmatmul.mubr.bf16.gmra.mrb[0].mxu0 %v852
    %v5158 = vpop.f32.mrb[0].mxu0
    %v5159 = vadd.f32 %v5046, %v5158
    %v5160 = vpop.f32.mrb[0].mxu0
    %v5161 = vadd.f32 %v5048, %v5160
    %v5162 = vpop.f32.mrb[0].mxu0
    %v5163 = vadd.f32 %v5050, %v5162
    %v5164 = vpop.f32.mrb[0].mxu0
    %v5165 = vadd.f32 %v5052, %v5164
    %5166 = vmatprep.mubr.bf16.mxu0 %v861
    %5167 = vmatmul.mubr.bf16.gmra.mrb[0].mxu0 %v860
    %v5168 = vpop.f32.mrb[0].mxu0
    %v5169 = vadd.f32 %v5056, %v5168
    %v5170 = vpop.f32.mrb[0].mxu0
    %v5171 = vadd.f32 %v5058, %v5170
    %v5172 = vpop.f32.mrb[0].mxu0
    %v5173 = vadd.f32 %v5060, %v5172
    %v5174 = vpop.f32.mrb[0].mxu0
    %v5175 = vadd.f32 %v5062, %v5174
    %5176 = vmatprep.mubr.bf16.mxu0 %v869
    %5177 = vmatmul.mubr.bf16.gmra.mrb[0].mxu0 %v868
    %v5178 = vpop.f32.mrb[0].mxu0
    %v5179 = vadd.f32 %v5066, %v5178
    %v5180 = vpop.f32.mrb[0].mxu0
    %v5181 = vadd.f32 %v5068, %v5180
    %v5182 = vpop.f32.mrb[0].mxu0
    %v5183 = vadd.f32 %v5070, %v5182
    %v5184 = vpop.f32.mrb[0].mxu0
    %v5185 = vadd.f32 %v5072, %v5184
    %5186 = vmatprep.mubr.bf16.mxu0 %v877
    %5187 = vmatmul.mubr.bf16.gmra.mrb[0].mxu0 %v876
    %v5188 = vpop.f32.mrb[0].mxu0
    %v5189 = vadd.f32 %v5076, %v5188
    %v5190 = vpop.f32.mrb[0].mxu0
    %v5191 = vadd.f32 %v5078, %v5190
    %v5192 = vpop.f32.mrb[0].mxu0
    %v5193 = vadd.f32 %v5080, %v5192
    %v5194 = vpop.f32.mrb[0].mxu0
    %v5195 = vadd.f32 %v5082, %v5194
    %5196 = vmatprep.mubr.bf16.mxu0 %v885
    %5197 = vmatmul.mubr.bf16.gmra.mrb[0].mxu0 %v884
    %v5198 = vpop.f32.mrb[0].mxu0
    %v5199 = vadd.f32 %v5086, %v5198
    %v5200 = vpop.f32.mrb[0].mxu0
    %v5201 = vadd.f32 %v5088, %v5200
    %v5202 = vpop.f32.mrb[0].mxu0
    %v5203 = vadd.f32 %v5090, %v5202
    %v5204 = vpop.f32.mrb[0].mxu0
    %v5205 = vadd.f32 %v5092, %v5204
    %5206 = vdwg.mxu0
    %5207 = vmatprep.subr.bf16.mxu0 %v2879
    %5208 = vmatpush1.bf16.msra.mxu0 %v2878
    %5209 = vmatprep.subr.bf16.mxu0 %v2887
    %5210 = vmatpush1.bf16.msra.mxu0 %v2886
    %5211 = vmatprep.subr.bf16.mxu0 %v2895
    %5212 = vmatpush1.bf16.msra.mxu0 %v2894
    %5213 = vmatprep.subr.bf16.mxu0 %v2903
    %5214 = vmatpush1.bf16.msra.mxu0 %v2902
    %5215 = vmatprep.subr.bf16.mxu0 %v2911
    %5216 = vmatpush1.bf16.msra.mxu0 %v2910
    %5217 = vmatprep.subr.bf16.mxu0 %v2919
    %5218 = vmatpush1.bf16.msra.mxu0 %v2918
    %5219 = vmatprep.subr.bf16.mxu0 %v2927
    %5220 = vmatpush1.bf16.msra.mxu0 %v2926
    %5221 = vmatprep.subr.bf16.mxu0 %v2935
    %5222 = vmatpush1.bf16.msra.mxu0 %v2934
    %5223 = vmatprep.subr.bf16.mxu0 %v2943
    %5224 = vmatpush1.bf16.msra.mxu0 %v2942
    %5225 = vmatprep.subr.bf16.mxu0 %v2951
    %5226 = vmatpush1.bf16.msra.mxu0 %v2950
    %5227 = vmatprep.subr.bf16.mxu0 %v2959
    %5228 = vmatpush1.bf16.msra.mxu0 %v2958
    %5229 = vmatprep.subr.bf16.mxu0 %v2967
    %5230 = vmatpush1.bf16.msra.mxu0 %v2966
    %5231 = vmatprep.subr.bf16.mxu0 %v2975
    %5232 = vmatpush1.bf16.msra.mxu0 %v2974
    %5233 = vmatprep.subr.bf16.mxu0 %v2983
    %5234 = vmatpush1.bf16.msra.mxu0 %v2982
    %5235 = vmatprep.subr.bf16.mxu0 %v2991
    %5236 = vmatpush1.bf16.msra.mxu0 %v2990
    %5237 = vmatprep.subr.bf16.mxu0 %v2999
    %5238 = vmatpush1.bf16.msra.mxu0 %v2998
    %5239 = vmatprep.mubr.bf16.mxu0 %v831
    %5240 = vmatmul.mubr.bf16.gmra.mrb[0].mxu0 %v830
    %v5241 = vpop.f32.mrb[0].mxu0
    %v5242 = vadd.f32 %v5129, %v5241
    %v5243 = vpop.f32.mrb[0].mxu0
    %v5244 = vadd.f32 %v5131, %v5243
    %v5245 = vpop.f32.mrb[0].mxu0
    %v5246 = vadd.f32 %v5133, %v5245
    %v5247 = vpop.f32.mrb[0].mxu0
    %v5248 = vadd.f32 %v5135, %v5247
    %5249 = vmatprep.mubr.bf16.mxu0 %v839
    %5250 = vmatmul.mubr.bf16.gmra.mrb[0].mxu0 %v838
    %v5251 = vpop.f32.mrb[0].mxu0
    %v5252 = vadd.f32 %v5139, %v5251
    %v5253 = vpop.f32.mrb[0].mxu0
    %v5254 = vadd.f32 %v5141, %v5253
    %v5255 = vpop.f32.mrb[0].mxu0
    %v5256 = vadd.f32 %v5143, %v5255
    %v5257 = vpop.f32.mrb[0].mxu0
    %v5258 = vadd.f32 %v5145, %v5257
    %5259 = vmatprep.mubr.bf16.mxu0 %v847
    %5260 = vmatmul.mubr.bf16.gmra.mrb[0].mxu0 %v846
    %v5261 = vpop.f32.mrb[0].mxu0
    %v5262 = vadd.f32 %v5149, %v5261
    %v5263 = vpop.f32.mrb[0].mxu0
    %v5264 = vadd.f32 %v5151, %v5263
    %v5265 = vpop.f32.mrb[0].mxu0
    %v5266 = vadd.f32 %v5153, %v5265
    %v5267 = vpop.f32.mrb[0].mxu0
    %v5268 = vadd.f32 %v5155, %v5267
    %5269 = vmatprep.mubr.bf16.mxu0 %v855
    %5270 = vmatmul.mubr.bf16.gmra.mrb[0].mxu0 %v854
    %v5271 = vpop.f32.mrb[0].mxu0
    %v5272 = vadd.f32 %v5159, %v5271
    %v5273 = vpop.f32.mrb[0].mxu0
    %v5274 = vadd.f32 %v5161, %v5273
    %v5275 = vpop.f32.mrb[0].mxu0
    %v5276 = vadd.f32 %v5163, %v5275
    %v5277 = vpop.f32.mrb[0].mxu0
    %v5278 = vadd.f32 %v5165, %v5277
    %5279 = vmatprep.mubr.bf16.mxu0 %v863
    %5280 = vmatmul.mubr.bf16.gmra.mrb[0].mxu0 %v862
    %v5281 = vpop.f32.mrb[0].mxu0
    %v5282 = vadd.f32 %v5169, %v5281
    %v5283 = vpop.f32.mrb[0].mxu0
    %v5284 = vadd.f32 %v5171, %v5283
    %v5285 = vpop.f32.mrb[0].mxu0
    %v5286 = vadd.f32 %v5173, %v5285
    %v5287 = vpop.f32.mrb[0].mxu0
    %v5288 = vadd.f32 %v5175, %v5287
    %5289 = vmatprep.mubr.bf16.mxu0 %v871
    %5290 = vmatmul.mubr.bf16.gmra.mrb[0].mxu0 %v870
    %v5291 = vpop.f32.mrb[0].mxu0
    %v5292 = vadd.f32 %v5179, %v5291
    %v5293 = vpop.f32.mrb[0].mxu0
    %v5294 = vadd.f32 %v5181, %v5293
    %v5295 = vpop.f32.mrb[0].mxu0
    %v5296 = vadd.f32 %v5183, %v5295
    %v5297 = vpop.f32.mrb[0].mxu0
    %v5298 = vadd.f32 %v5185, %v5297
    %5299 = vmatprep.mubr.bf16.mxu0 %v879
    %5300 = vmatmul.mubr.bf16.gmra.mrb[0].mxu0 %v878
    %v5301 = vpop.f32.mrb[0].mxu0
    %v5302 = vadd.f32 %v5189, %v5301
    %v5303 = vpop.f32.mrb[0].mxu0
    %v5304 = vadd.f32 %v5191, %v5303
    %v5305 = vpop.f32.mrb[0].mxu0
    %v5306 = vadd.f32 %v5193, %v5305
    %v5307 = vpop.f32.mrb[0].mxu0
    %v5308 = vadd.f32 %v5195, %v5307
    %5309 = vmatprep.mubr.bf16.mxu0 %v887
    %5310 = vmatmul.mubr.bf16.gmra.mrb[0].mxu0 %v886
    %v5311 = vpop.f32.mrb[0].mxu0
    %v5312 = vadd.f32 %v5199, %v5311
    %v5313 = vpop.f32.mrb[0].mxu0
    %v5314 = vadd.f32 %v5201, %v5313
    %v5315 = vpop.f32.mrb[0].mxu0
    %v5316 = vadd.f32 %v5203, %v5315
    %v5317 = vpop.f32.mrb[0].mxu0
    %v5318 = vadd.f32 %v5205, %v5317
    %5319 = vdwg.mxu0
    %v5320 = vmul.f32 %v3886, %v3886
    %v5321 = vmul.f32 %v3888, %v3888
    %v5322 = vmul.f32 %v4338, %v4338
    %v5323 = vmul.f32 %v4340, %v4340
    %v5324 = vmul.f32 %v3890, %v3890
    %v5325 = vmul.f32 %v3892, %v3892
    %v5326 = vmul.f32 %v4342, %v4342
    %v5327 = vmul.f32 %v4344, %v4344
    %v5328 = vmul.f32 %v3896, %v3896
    %v5329 = vmul.f32 %v3898, %v3898
    %v5330 = vmul.f32 %v4348, %v4348
    %v5331 = vmul.f32 %v4350, %v4350
    %v5332 = vmul.f32 %v3900, %v3900
    %v5333 = vmul.f32 %v3902, %v3902
    %v5334 = vmul.f32 %v4352, %v4352
    %v5335 = vmul.f32 %v4354, %v4354
    %v5336 = vmul.f32 %v3906, %v3906
    %v5337 = vmul.f32 %v3908, %v3908
    %v5338 = vmul.f32 %v4358, %v4358
    %v5339 = vmul.f32 %v4360, %v4360
    %v5340 = vmul.f32 %v3910, %v3910
    %v5341 = vmul.f32 %v3912, %v3912
    %v5342 = vmul.f32 %v4362, %v4362
    %v5343 = vmul.f32 %v4364, %v4364
    %v5344 = vmul.f32 %v3916, %v3916
    %v5345 = vmul.f32 %v3918, %v3918
    %v5346 = vmul.f32 %v4368, %v4368
    %v5347 = vmul.f32 %v4370, %v4370
    %v5348 = vmul.f32 %v3920, %v3920
    %v5349 = vmul.f32 %v3922, %v3922
    %v5350 = vmul.f32 %v4372, %v4372
    %v5351 = vmul.f32 %v4374, %v4374
    %v5352 = vmul.f32 %v3926, %v3926
    %v5353 = vmul.f32 %v3928, %v3928
    %v5354 = vmul.f32 %v4378, %v4378
    %v5355 = vmul.f32 %v4380, %v4380
    %v5356 = vmul.f32 %v3930, %v3930
    %v5357 = vmul.f32 %v3932, %v3932
    %v5358 = vmul.f32 %v4382, %v4382
    %v5359 = vmul.f32 %v4384, %v4384
    %v5360 = vmul.f32 %v3936, %v3936
    %v5361 = vmul.f32 %v3938, %v3938
    %v5362 = vmul.f32 %v4388, %v4388
    %v5363 = vmul.f32 %v4390, %v4390
    %v5364 = vmul.f32 %v3940, %v3940
    %v5365 = vmul.f32 %v3942, %v3942
    %v5366 = vmul.f32 %v4392, %v4392
    %v5367 = vmul.f32 %v4394, %v4394
    %v5368 = vmul.f32 %v3946, %v3946
    %v5369 = vmul.f32 %v3948, %v3948
    %v5370 = vmul.f32 %v4398, %v4398
    %v5371 = vmul.f32 %v4400, %v4400
    %v5372 = vmul.f32 %v3950, %v3950
    %v5373 = vmul.f32 %v3952, %v3952
    %v5374 = vmul.f32 %v4402, %v4402
    %v5375 = vmul.f32 %v4404, %v4404
    %v5376 = vmul.f32 %v3956, %v3956
    %v5377 = vmul.f32 %v3958, %v3958
    %v5378 = vmul.f32 %v4408, %v4408
    %v5379 = vmul.f32 %v4410, %v4410
    %v5380 = vmul.f32 %v3960, %v3960
    %v5381 = vmul.f32 %v3962, %v3962
    %v5382 = vmul.f32 %v4412, %v4412
    %v5383 = vmul.f32 %v4414, %v4414
    %v5384 = vmul.f32 %v4790, %v4790
    %v5385 = vmul.f32 %v4792, %v4792
    %v5386 = vmul.f32 %v5242, %v5242
    %v5387 = vmul.f32 %v5244, %v5244
    %v5388 = vmul.f32 %v4794, %v4794
    %v5389 = vmul.f32 %v4796, %v4796
    %v5390 = vmul.f32 %v5246, %v5246
    %v5391 = vmul.f32 %v5248, %v5248
    %v5392 = vmul.f32 %v4800, %v4800
    %v5393 = vmul.f32 %v4802, %v4802
    %v5394 = vmul.f32 %v5252, %v5252
    %v5395 = vmul.f32 %v5254, %v5254
    %v5396 = vmul.f32 %v4804, %v4804
    %v5397 = vmul.f32 %v4806, %v4806
    %v5398 = vmul.f32 %v5256, %v5256
    %v5399 = vmul.f32 %v5258, %v5258
    %v5400 = vmul.f32 %v4810, %v4810
    %v5401 = vmul.f32 %v4812, %v4812
    %v5402 = vmul.f32 %v5262, %v5262
    %v5403 = vmul.f32 %v5264, %v5264
    %v5404 = vmul.f32 %v4814, %v4814
    %v5405 = vmul.f32 %v4816, %v4816
    %v5406 = vmul.f32 %v5266, %v5266
    %v5407 = vmul.f32 %v5268, %v5268
    %v5408 = vmul.f32 %v4820, %v4820
    %v5409 = vmul.f32 %v4822, %v4822
    %v5410 = vmul.f32 %v5272, %v5272
    %v5411 = vmul.f32 %v5274, %v5274
    %v5412 = vmul.f32 %v4824, %v4824
    %v5413 = vmul.f32 %v4826, %v4826
    %v5414 = vmul.f32 %v5276, %v5276
    %v5415 = vmul.f32 %v5278, %v5278
    %v5416 = vmul.f32 %v4830, %v4830
    %v5417 = vmul.f32 %v4832, %v4832
    %v5418 = vmul.f32 %v5282, %v5282
    %v5419 = vmul.f32 %v5284, %v5284
    %v5420 = vmul.f32 %v4834, %v4834
    %v5421 = vmul.f32 %v4836, %v4836
    %v5422 = vmul.f32 %v5286, %v5286
    %v5423 = vmul.f32 %v5288, %v5288
    %v5424 = vmul.f32 %v4840, %v4840
    %v5425 = vmul.f32 %v4842, %v4842
    %v5426 = vmul.f32 %v5292, %v5292
    %v5427 = vmul.f32 %v5294, %v5294
    %v5428 = vmul.f32 %v4844, %v4844
    %v5429 = vmul.f32 %v4846, %v4846
    %v5430 = vmul.f32 %v5296, %v5296
    %v5431 = vmul.f32 %v5298, %v5298
    %v5432 = vmul.f32 %v4850, %v4850
    %v5433 = vmul.f32 %v4852, %v4852
    %v5434 = vmul.f32 %v5302, %v5302
    %v5435 = vmul.f32 %v5304, %v5304
    %v5436 = vmul.f32 %v4854, %v4854
    %v5437 = vmul.f32 %v4856, %v4856
    %v5438 = vmul.f32 %v5306, %v5306
    %v5439 = vmul.f32 %v5308, %v5308
    %v5440 = vmul.f32 %v4860, %v4860
    %v5441 = vmul.f32 %v4862, %v4862
    %v5442 = vmul.f32 %v5312, %v5312
    %v5443 = vmul.f32 %v5314, %v5314
    %v5444 = vmul.f32 %v4864, %v4864
    %v5445 = vmul.f32 %v4866, %v4866
    %v5446 = vmul.f32 %v5316, %v5316
    %v5447 = vmul.f32 %v5318, %v5318
    %v5448 = vadd.f32 %v5320, %v5384
    %v5449 = vadd.f32 %v5321, %v5385
    %v5450 = vadd.f32 %v5322, %v5386
    %v5451 = vadd.f32 %v5323, %v5387
    %v5452 = vadd.f32 %v5324, %v5388
    %v5453 = vadd.f32 %v5325, %v5389
    %v5454 = vadd.f32 %v5326, %v5390
    %v5455 = vadd.f32 %v5327, %v5391
    %v5456 = vadd.f32 %v5328, %v5392
    %v5457 = vadd.f32 %v5329, %v5393
    %v5458 = vadd.f32 %v5330, %v5394
    %v5459 = vadd.f32 %v5331, %v5395
    %v5460 = vadd.f32 %v5332, %v5396
    %v5461 = vadd.f32 %v5333, %v5397
    %v5462 = vadd.f32 %v5334, %v5398
    %v5463 = vadd.f32 %v5335, %v5399
    %v5464 = vadd.f32 %v5336, %v5400
    %v5465 = vadd.f32 %v5337, %v5401
    %v5466 = vadd.f32 %v5338, %v5402
    %v5467 = vadd.f32 %v5339, %v5403
    %v5468 = vadd.f32 %v5340, %v5404
    %v5469 = vadd.f32 %v5341, %v5405
    %v5470 = vadd.f32 %v5342, %v5406
    %v5471 = vadd.f32 %v5343, %v5407
    %v5472 = vadd.f32 %v5344, %v5408
    %v5473 = vadd.f32 %v5345, %v5409
    %v5474 = vadd.f32 %v5346, %v5410
    %v5475 = vadd.f32 %v5347, %v5411
    %v5476 = vadd.f32 %v5348, %v5412
    %v5477 = vadd.f32 %v5349, %v5413
    %v5478 = vadd.f32 %v5350, %v5414
    %v5479 = vadd.f32 %v5351, %v5415
    %v5480 = vadd.f32 %v5352, %v5416
    %v5481 = vadd.f32 %v5353, %v5417
    %v5482 = vadd.f32 %v5354, %v5418
    %v5483 = vadd.f32 %v5355, %v5419
    %v5484 = vadd.f32 %v5356, %v5420
    %v5485 = vadd.f32 %v5357, %v5421
    %v5486 = vadd.f32 %v5358, %v5422
    %v5487 = vadd.f32 %v5359, %v5423
    %v5488 = vadd.f32 %v5360, %v5424
    %v5489 = vadd.f32 %v5361, %v5425
    %v5490 = vadd.f32 %v5362, %v5426
    %v5491 = vadd.f32 %v5363, %v5427
    %v5492 = vadd.f32 %v5364, %v5428
    %v5493 = vadd.f32 %v5365, %v5429
    %v5494 = vadd.f32 %v5366, %v5430
    %v5495 = vadd.f32 %v5367, %v5431
    %v5496 = vadd.f32 %v5368, %v5432
    %v5497 = vadd.f32 %v5369, %v5433
    %v5498 = vadd.f32 %v5370, %v5434
    %v5499 = vadd.f32 %v5371, %v5435
    %v5500 = vadd.f32 %v5372, %v5436
    %v5501 = vadd.f32 %v5373, %v5437
    %v5502 = vadd.f32 %v5374, %v5438
    %v5503 = vadd.f32 %v5375, %v5439
    %v5504 = vadd.f32 %v5376, %v5440
    %v5505 = vadd.f32 %v5377, %v5441
    %v5506 = vadd.f32 %v5378, %v5442
    %v5507 = vadd.f32 %v5379, %v5443
    %v5508 = vadd.f32 %v5380, %v5444
    %v5509 = vadd.f32 %v5381, %v5445
    %v5510 = vadd.f32 %v5382, %v5446
    %v5511 = vadd.f32 %v5383, %v5447
    %v5512 = vld [vmem:[#allocation7] sm:$0xff]
    %v5513 = vld [vmem:[#allocation7 + $0x8] sm:$0xff]
    %v5514 = vld [vmem:[#allocation7 + $0x10] sm:$0xff]
    %v5515 = vld [vmem:[#allocation7 + $0x18] sm:$0xff]
    %v5516 = vld [vmem:[#allocation7 + $0x20] sm:$0xff]
    %v5517 = vld [vmem:[#allocation7 + $0x28] sm:$0xff]
    %v5518 = vld [vmem:[#allocation7 + $0x30] sm:$0xff]
    %v5519 = vld [vmem:[#allocation7 + $0x38] sm:$0xff]
    %v5520 = vld [vmem:[#allocation7 + $0x40] sm:$0xff]
    %v5521 = vld [vmem:[#allocation7 + $0x48] sm:$0xff]
    %v5522 = vld [vmem:[#allocation7 + $0x50] sm:$0xff]
    %v5523 = vld [vmem:[#allocation7 + $0x58] sm:$0xff]
    %v5524 = vld [vmem:[#allocation7 + $0x60] sm:$0xff]
    %v5525 = vld [vmem:[#allocation7 + $0x68] sm:$0xff]
    %v5526 = vld [vmem:[#allocation7 + $0x70] sm:$0xff]
    %v5527 = vld [vmem:[#allocation7 + $0x78] sm:$0xff]
    %v5528 = vld [vmem:[#allocation7 + $0x80] sm:$0xff]
    %v5529 = vld [vmem:[#allocation7 + $0x88] sm:$0xff]
    %v5530 = vld [vmem:[#allocation7 + $0x90] sm:$0xff]
    %v5531 = vld [vmem:[#allocation7 + $0x98] sm:$0xff]
    %v5532 = vld [vmem:[#allocation7 + $0xa0] sm:$0xff]
    %v5533 = vld [vmem:[#allocation7 + $0xa8] sm:$0xff]
    %v5534 = vld [vmem:[#allocation7 + $0xb0] sm:$0xff]
    %v5535 = vld [vmem:[#allocation7 + $0xb8] sm:$0xff]
    %v5536 = vld [vmem:[#allocation7 + $0xc0] sm:$0xff]
    %v5537 = vld [vmem:[#allocation7 + $0xc8] sm:$0xff]
    %v5538 = vld [vmem:[#allocation7 + $0xd0] sm:$0xff]
    %v5539 = vld [vmem:[#allocation7 + $0xd8] sm:$0xff]
    %v5540 = vld [vmem:[#allocation7 + $0xe0] sm:$0xff]
    %v5541 = vld [vmem:[#allocation7 + $0xe8] sm:$0xff]
    %v5542 = vld [vmem:[#allocation7 + $0xf0] sm:$0xff]
    %v5543 = vld [vmem:[#allocation7 + $0xf8] sm:$0xff]
    %v5544 = vld [vmem:[#allocation7 + $0x100] sm:$0xff]
    %v5545 = vld [vmem:[#allocation7 + $0x108] sm:$0xff]
    %v5546 = vld [vmem:[#allocation7 + $0x110] sm:$0xff]
    %v5547 = vld [vmem:[#allocation7 + $0x118] sm:$0xff]
    %v5548 = vld [vmem:[#allocation7 + $0x120] sm:$0xff]
    %v5549 = vld [vmem:[#allocation7 + $0x128] sm:$0xff]
    %v5550 = vld [vmem:[#allocation7 + $0x130] sm:$0xff]
    %v5551 = vld [vmem:[#allocation7 + $0x138] sm:$0xff]
    %v5552 = vld [vmem:[#allocation7 + $0x140] sm:$0xff]
    %v5553 = vld [vmem:[#allocation7 + $0x148] sm:$0xff]
    %v5554 = vld [vmem:[#allocation7 + $0x150] sm:$0xff]
    %v5555 = vld [vmem:[#allocation7 + $0x158] sm:$0xff]
    %v5556 = vld [vmem:[#allocation7 + $0x160] sm:$0xff]
    %v5557 = vld [vmem:[#allocation7 + $0x168] sm:$0xff]
    %v5558 = vld [vmem:[#allocation7 + $0x170] sm:$0xff]
    %v5559 = vld [vmem:[#allocation7 + $0x178] sm:$0xff]
    %v5560 = vld [vmem:[#allocation7 + $0x180] sm:$0xff]
    %v5561 = vld [vmem:[#allocation7 + $0x188] sm:$0xff]
    %v5562 = vld [vmem:[#allocation7 + $0x190] sm:$0xff]
    %v5563 = vld [vmem:[#allocation7 + $0x198] sm:$0xff]
    %v5564 = vld [vmem:[#allocation7 + $0x1a0] sm:$0xff]
    %v5565 = vld [vmem:[#allocation7 + $0x1a8] sm:$0xff]
    %v5566 = vld [vmem:[#allocation7 + $0x1b0] sm:$0xff]
    %v5567 = vld [vmem:[#allocation7 + $0x1b8] sm:$0xff]
    %v5568 = vld [vmem:[#allocation7 + $0x1c0] sm:$0xff]
    %v5569 = vld [vmem:[#allocation7 + $0x1c8] sm:$0xff]
    %v5570 = vld [vmem:[#allocation7 + $0x1d0] sm:$0xff]
    %v5571 = vld [vmem:[#allocation7 + $0x1d8] sm:$0xff]
    %v5572 = vld [vmem:[#allocation7 + $0x1e0] sm:$0xff]
    %v5573 = vld [vmem:[#allocation7 + $0x1e8] sm:$0xff]
    %v5574 = vld [vmem:[#allocation7 + $0x1f0] sm:$0xff]
    %v5575 = vld [vmem:[#allocation7 + $0x1f8] sm:$0xff]
    %5576 = vmatprep.subr.mxu0 0.0
    %5577 = vmatpush1.msra.mxu0 %v5512
    %5578 = vmatprep.subr.mxu0 0.0
    %5579 = vmatpush1.msra.mxu0 %v5513
    %5580 = vmatprep.subr.mxu0 0.0
    %5581 = vmatpush1.msra.mxu0 %v5514
    %5582 = vmatprep.subr.mxu0 0.0
    %5583 = vmatpush1.msra.mxu0 %v5515
    %5584 = vmatprep.subr.mxu0 0.0
    %5585 = vmatpush1.msra.mxu0 %v5516
    %5586 = vmatprep.subr.mxu0 0.0
    %5587 = vmatpush1.msra.mxu0 %v5517
    %5588 = vmatprep.subr.mxu0 0.0
    %5589 = vmatpush1.msra.mxu0 %v5518
    %5590 = vmatprep.subr.mxu0 0.0
    %5591 = vmatpush1.msra.mxu0 %v5519
    %5592 = vmatprep.subr.mxu0 0.0
    %5593 = vmatpush1.msra.mxu0 %v5520
    %5594 = vmatprep.subr.mxu0 0.0
    %5595 = vmatpush1.msra.mxu0 %v5521
    %5596 = vmatprep.subr.mxu0 0.0
    %5597 = vmatpush1.msra.mxu0 %v5522
    %5598 = vmatprep.subr.mxu0 0.0
    %5599 = vmatpush1.msra.mxu0 %v5523
    %5600 = vmatprep.subr.mxu0 0.0
    %5601 = vmatpush1.msra.mxu0 %v5524
    %5602 = vmatprep.subr.mxu0 0.0
    %5603 = vmatpush1.msra.mxu0 %v5525
    %5604 = vmatprep.subr.mxu0 0.0
    %5605 = vmatpush1.msra.mxu0 %v5526
    %5606 = vmatprep.subr.mxu0 0.0
    %5607 = vmatpush1.msra.mxu0 %v5527
    %5608 = vmatprep.subr.mxu0 0.0
    %5609 = vmatpush1.msra.mxu0 %v5528
    %5610 = vmatprep.subr.mxu0 0.0
    %5611 = vmatpush1.msra.mxu0 %v5529
    %5612 = vmatprep.subr.mxu0 0.0
    %5613 = vmatpush1.msra.mxu0 %v5530
    %5614 = vmatprep.subr.mxu0 0.0
    %5615 = vmatpush1.msra.mxu0 %v5531
    %5616 = vmatprep.subr.mxu0 0.0
    %5617 = vmatpush1.msra.mxu0 %v5532
    %5618 = vmatprep.subr.mxu0 0.0
    %5619 = vmatpush1.msra.mxu0 %v5533
    %5620 = vmatprep.subr.mxu0 0.0
    %5621 = vmatpush1.msra.mxu0 %v5534
    %5622 = vmatprep.subr.mxu0 0.0
    %5623 = vmatpush1.msra.mxu0 %v5535
    %5624 = vmatprep.subr.mxu0 0.0
    %5625 = vmatpush1.msra.mxu0 %v5536
    %5626 = vmatprep.subr.mxu0 0.0
    %5627 = vmatpush1.msra.mxu0 %v5537
    %5628 = vmatprep.subr.mxu0 0.0
    %5629 = vmatpush1.msra.mxu0 %v5538
    %5630 = vmatprep.subr.mxu0 0.0
    %5631 = vmatpush1.msra.mxu0 %v5539
    %5632 = vmatprep.subr.mxu0 0.0
    %5633 = vmatpush1.msra.mxu0 %v5540
    %5634 = vmatprep.subr.mxu0 0.0
    %5635 = vmatpush1.msra.mxu0 %v5541
    %5636 = vmatprep.subr.mxu0 0.0
    %5637 = vmatpush1.msra.mxu0 %v5542
    %5638 = vmatprep.subr.mxu0 0.0
    %5639 = vmatpush1.msra.mxu0 %v5543
    %5640 = vmatprep.mubr.f32.mxu0 %v5449
    %5641 = vmatmul.mubr.f32.gmra.mrb[0].mxu0 %v5448
    %v5642 = vpop.f32.mrb[0].mxu0
    %v5643 = vadd.f32 1e-08, %v5642
    %v5644 = vpop.f32.mrb[0].mxu0
    %5645 = vmatprep.mubr.f32.mxu0 %v5453
    %5646 = vmatmul.mubr.f32.gmra.mrb[0].mxu0 %v5452
    %v5647 = vpop.f32.mrb[0].mxu0
    %v5648 = vadd.f32 1e-08, %v5647
    %v5649 = vpop.f32.mrb[0].mxu0
    %5650 = vmatprep.mubr.f32.mxu0 %v5457
    %5651 = vmatmul.mubr.f32.gmra.mrb[0].mxu0 %v5456
    %v5652 = vpop.f32.mrb[0].mxu0
    %v5653 = vadd.f32 1e-08, %v5652
    %v5654 = vpop.f32.mrb[0].mxu0
    %5655 = vmatprep.mubr.f32.mxu0 %v5461
    %5656 = vmatmul.mubr.f32.gmra.mrb[0].mxu0 %v5460
    %v5657 = vpop.f32.mrb[0].mxu0
    %v5658 = vadd.f32 1e-08, %v5657
    %v5659 = vpop.f32.mrb[0].mxu0
    %5660 = vmatprep.mubr.f32.mxu0 %v5465
    %5661 = vmatmul.mubr.f32.gmra.mrb[0].mxu0 %v5464
    %v5662 = vpop.f32.mrb[0].mxu0
    %v5663 = vadd.f32 1e-08, %v5662
    %v5664 = vpop.f32.mrb[0].mxu0
    %5665 = vmatprep.mubr.f32.mxu0 %v5469
    %5666 = vmatmul.mubr.f32.gmra.mrb[0].mxu0 %v5468
    %v5667 = vpop.f32.mrb[0].mxu0
    %v5668 = vadd.f32 1e-08, %v5667
    %v5669 = vpop.f32.mrb[0].mxu0
    %5670 = vmatprep.mubr.f32.mxu0 %v5473
    %5671 = vmatmul.mubr.f32.gmra.mrb[0].mxu0 %v5472
    %v5672 = vpop.f32.mrb[0].mxu0
    %v5673 = vadd.f32 1e-08, %v5672
    %v5674 = vpop.f32.mrb[0].mxu0
    %5675 = vmatprep.mubr.f32.mxu0 %v5477
    %5676 = vmatmul.mubr.f32.gmra.mrb[0].mxu0 %v5476
    %v5677 = vpop.f32.mrb[0].mxu0
    %v5678 = vadd.f32 1e-08, %v5677
    %v5679 = vpop.f32.mrb[0].mxu0
    %5680 = vmatprep.mubr.f32.mxu0 %v5481
    %5681 = vmatmul.mubr.f32.gmra.mrb[0].mxu0 %v5480
    %v5682 = vpop.f32.mrb[0].mxu0
    %v5683 = vadd.f32 1e-08, %v5682
    %v5684 = vpop.f32.mrb[0].mxu0
    %5685 = vmatprep.mubr.f32.mxu0 %v5485
    %5686 = vmatmul.mubr.f32.gmra.mrb[0].mxu0 %v5484
    %v5687 = vpop.f32.mrb[0].mxu0
    %v5688 = vadd.f32 1e-08, %v5687
    %v5689 = vpop.f32.mrb[0].mxu0
    %5690 = vmatprep.mubr.f32.mxu0 %v5489
    %5691 = vmatmul.mubr.f32.gmra.mrb[0].mxu0 %v5488
    %v5692 = vpop.f32.mrb[0].mxu0
    %v5693 = vadd.f32 1e-08, %v5692
    %v5694 = vpop.f32.mrb[0].mxu0
    %5695 = vmatprep.mubr.f32.mxu0 %v5493
    %5696 = vmatmul.mubr.f32.gmra.mrb[0].mxu0 %v5492
    %v5697 = vpop.f32.mrb[0].mxu0
    %v5698 = vadd.f32 1e-08, %v5697
    %v5699 = vpop.f32.mrb[0].mxu0
    %5700 = vmatprep.mubr.f32.mxu0 %v5497
    %5701 = vmatmul.mubr.f32.gmra.mrb[0].mxu0 %v5496
    %v5702 = vpop.f32.mrb[0].mxu0
    %v5703 = vadd.f32 1e-08, %v5702
    %v5704 = vpop.f32.mrb[0].mxu0
    %5705 = vmatprep.mubr.f32.mxu0 %v5501
    %5706 = vmatmul.mubr.f32.gmra.mrb[0].mxu0 %v5500
    %v5707 = vpop.f32.mrb[0].mxu0
    %v5708 = vadd.f32 1e-08, %v5707
    %v5709 = vpop.f32.mrb[0].mxu0
    %5710 = vmatprep.mubr.f32.mxu0 %v5505
    %5711 = vmatmul.mubr.f32.gmra.mrb[0].mxu0 %v5504
    %v5712 = vpop.f32.mrb[0].mxu0
    %v5713 = vadd.f32 1e-08, %v5712
    %v5714 = vpop.f32.mrb[0].mxu0
    %5715 = vmatprep.mubr.f32.mxu0 %v5509
    %5716 = vmatmul.mubr.f32.gmra.mrb[0].mxu0 %v5508
    %v5717 = vpop.f32.mrb[0].mxu0
    %v5718 = vadd.f32 1e-08, %v5717
    %v5719 = vpop.f32.mrb[0].mxu0
    %5720 = vdwg.mxu0
    %5721 = vmatprep.subr.mxu0 0.0
    %5722 = vmatpush1.msra.mxu0 %v5544
    %5723 = vmatprep.subr.mxu0 0.0
    %5724 = vmatpush1.msra.mxu0 %v5545
    %5725 = vmatprep.subr.mxu0 0.0
    %5726 = vmatpush1.msra.mxu0 %v5546
    %5727 = vmatprep.subr.mxu0 0.0
    %5728 = vmatpush1.msra.mxu0 %v5547
    %5729 = vmatprep.subr.mxu0 0.0
    %5730 = vmatpush1.msra.mxu0 %v5548
    %5731 = vmatprep.subr.mxu0 0.0
    %5732 = vmatpush1.msra.mxu0 %v5549
    %5733 = vmatprep.subr.mxu0 0.0
    %5734 = vmatpush1.msra.mxu0 %v5550
    %5735 = vmatprep.subr.mxu0 0.0
    %5736 = vmatpush1.msra.mxu0 %v5551
    %5737 = vmatprep.subr.mxu0 0.0
    %5738 = vmatpush1.msra.mxu0 %v5552
    %5739 = vmatprep.subr.mxu0 0.0
    %5740 = vmatpush1.msra.mxu0 %v5553
    %5741 = vmatprep.subr.mxu0 0.0
    %5742 = vmatpush1.msra.mxu0 %v5554
    %5743 = vmatprep.subr.mxu0 0.0
    %5744 = vmatpush1.msra.mxu0 %v5555
    %5745 = vmatprep.subr.mxu0 0.0
    %5746 = vmatpush1.msra.mxu0 %v5556
    %5747 = vmatprep.subr.mxu0 0.0
    %5748 = vmatpush1.msra.mxu0 %v5557
    %5749 = vmatprep.subr.mxu0 0.0
    %5750 = vmatpush1.msra.mxu0 %v5558
    %5751 = vmatprep.subr.mxu0 0.0
    %5752 = vmatpush1.msra.mxu0 %v5559
    %5753 = vmatprep.subr.mxu0 0.0
    %5754 = vmatpush1.msra.mxu0 %v5560
    %5755 = vmatprep.subr.mxu0 0.0
    %5756 = vmatpush1.msra.mxu0 %v5561
    %5757 = vmatprep.subr.mxu0 0.0
    %5758 = vmatpush1.msra.mxu0 %v5562
    %5759 = vmatprep.subr.mxu0 0.0
    %5760 = vmatpush1.msra.mxu0 %v5563
    %5761 = vmatprep.subr.mxu0 0.0
    %5762 = vmatpush1.msra.mxu0 %v5564
    %5763 = vmatprep.subr.mxu0 0.0
    %5764 = vmatpush1.msra.mxu0 %v5565
    %5765 = vmatprep.subr.mxu0 0.0
    %5766 = vmatpush1.msra.mxu0 %v5566
    %5767 = vmatprep.subr.mxu0 0.0
    %5768 = vmatpush1.msra.mxu0 %v5567
    %5769 = vmatprep.subr.mxu0 0.0
    %5770 = vmatpush1.msra.mxu0 %v5568
    %5771 = vmatprep.subr.mxu0 0.0
    %5772 = vmatpush1.msra.mxu0 %v5569
    %5773 = vmatprep.subr.mxu0 0.0
    %5774 = vmatpush1.msra.mxu0 %v5570
    %5775 = vmatprep.subr.mxu0 0.0
    %5776 = vmatpush1.msra.mxu0 %v5571
    %5777 = vmatprep.subr.mxu0 0.0
    %5778 = vmatpush1.msra.mxu0 %v5572
    %5779 = vmatprep.subr.mxu0 0.0
    %5780 = vmatpush1.msra.mxu0 %v5573
    %5781 = vmatprep.subr.mxu0 0.0
    %5782 = vmatpush1.msra.mxu0 %v5574
    %5783 = vmatprep.subr.mxu0 0.0
    %5784 = vmatpush1.msra.mxu0 %v5575
    %5785 = vmatprep.mubr.f32.mxu0 %v5451
    %5786 = vmatmul.mubr.f32.gmra.mrb[0].mxu0 %v5450
    %v5787 = vpop.f32.mrb[0].mxu0
    %v5788 = vadd.f32 %v5643, %v5787
    %v5789 = vpop.f32.mrb[0].mxu0
    %5790 = vmatprep.mubr.f32.mxu0 %v5455
    %5791 = vmatmul.mubr.f32.gmra.mrb[0].mxu0 %v5454
    %v5792 = vpop.f32.mrb[0].mxu0
    %v5793 = vadd.f32 %v5648, %v5792
    %v5794 = vpop.f32.mrb[0].mxu0
    %5795 = vmatprep.mubr.f32.mxu0 %v5459
    %5796 = vmatmul.mubr.f32.gmra.mrb[0].mxu0 %v5458
    %v5797 = vpop.f32.mrb[0].mxu0
    %v5798 = vadd.f32 %v5653, %v5797
    %v5799 = vpop.f32.mrb[0].mxu0
    %5800 = vmatprep.mubr.f32.mxu0 %v5463
    %5801 = vmatmul.mubr.f32.gmra.mrb[0].mxu0 %v5462
    %v5802 = vpop.f32.mrb[0].mxu0
    %v5803 = vadd.f32 %v5658, %v5802
    %v5804 = vpop.f32.mrb[0].mxu0
    %5805 = vmatprep.mubr.f32.mxu0 %v5467
    %5806 = vmatmul.mubr.f32.gmra.mrb[0].mxu0 %v5466
    %v5807 = vpop.f32.mrb[0].mxu0
    %v5808 = vadd.f32 %v5663, %v5807
    %v5809 = vpop.f32.mrb[0].mxu0
    %5810 = vmatprep.mubr.f32.mxu0 %v5471
    %5811 = vmatmul.mubr.f32.gmra.mrb[0].mxu0 %v5470
    %v5812 = vpop.f32.mrb[0].mxu0
    %v5813 = vadd.f32 %v5668, %v5812
    %v5814 = vpop.f32.mrb[0].mxu0
    %5815 = vmatprep.mubr.f32.mxu0 %v5475
    %5816 = vmatmul.mubr.f32.gmra.mrb[0].mxu0 %v5474
    %v5817 = vpop.f32.mrb[0].mxu0
    %v5818 = vadd.f32 %v5673, %v5817
    %v5819 = vpop.f32.mrb[0].mxu0
    %5820 = vmatprep.mubr.f32.mxu0 %v5479
    %5821 = vmatmul.mubr.f32.gmra.mrb[0].mxu0 %v5478
    %v5822 = vpop.f32.mrb[0].mxu0
    %v5823 = vadd.f32 %v5678, %v5822
    %v5824 = vpop.f32.mrb[0].mxu0
    %5825 = vmatprep.mubr.f32.mxu0 %v5483
    %5826 = vmatmul.mubr.f32.gmra.mrb[0].mxu0 %v5482
    %v5827 = vpop.f32.mrb[0].mxu0
    %v5828 = vadd.f32 %v5683, %v5827
    %v5829 = vpop.f32.mrb[0].mxu0
    %5830 = vmatprep.mubr.f32.mxu0 %v5487
    %5831 = vmatmul.mubr.f32.gmra.mrb[0].mxu0 %v5486
    %v5832 = vpop.f32.mrb[0].mxu0
    %v5833 = vadd.f32 %v5688, %v5832
    %v5834 = vpop.f32.mrb[0].mxu0
    %5835 = vmatprep.mubr.f32.mxu0 %v5491
    %5836 = vmatmul.mubr.f32.gmra.mrb[0].mxu0 %v5490
    %v5837 = vpop.f32.mrb[0].mxu0
    %v5838 = vadd.f32 %v5693, %v5837
    %v5839 = vpop.f32.mrb[0].mxu0
    %5840 = vmatprep.mubr.f32.mxu0 %v5495
    %5841 = vmatmul.mubr.f32.gmra.mrb[0].mxu0 %v5494
    %v5842 = vpop.f32.mrb[0].mxu0
    %v5843 = vadd.f32 %v5698, %v5842
    %v5844 = vpop.f32.mrb[0].mxu0
    %5845 = vmatprep.mubr.f32.mxu0 %v5499
    %5846 = vmatmul.mubr.f32.gmra.mrb[0].mxu0 %v5498
    %v5847 = vpop.f32.mrb[0].mxu0
    %v5848 = vadd.f32 %v5703, %v5847
    %v5849 = vpop.f32.mrb[0].mxu0
    %5850 = vmatprep.mubr.f32.mxu0 %v5503
    %5851 = vmatmul.mubr.f32.gmra.mrb[0].mxu0 %v5502
    %v5852 = vpop.f32.mrb[0].mxu0
    %v5853 = vadd.f32 %v5708, %v5852
    %v5854 = vpop.f32.mrb[0].mxu0
    %5855 = vmatprep.mubr.f32.mxu0 %v5507
    %5856 = vmatmul.mubr.f32.gmra.mrb[0].mxu0 %v5506
    %v5857 = vpop.f32.mrb[0].mxu0
    %v5858 = vadd.f32 %v5713, %v5857
    %v5859 = vpop.f32.mrb[0].mxu0
    %5860 = vmatprep.mubr.f32.mxu0 %v5511
    %5861 = vmatmul.mubr.f32.gmra.mrb[0].mxu0 %v5510
    %v5862 = vpop.f32.mrb[0].mxu0
    %v5863 = vadd.f32 %v5718, %v5862
    %v5864 = vpop.f32.mrb[0].mxu0
    %5865 = vdwg.mxu0
    %v5866 = vlog2.pop %v5788
    %v5867 = vmul.f32 %v5866, 0.6931472
    %v5868 = vlog2.pop %v5793
    %v5869 = vmul.f32 %v5868, 0.6931472
    %v5870 = vlog2.pop %v5798
    %v5871 = vmul.f32 %v5870, 0.6931472
    %v5872 = vlog2.pop %v5803
    %v5873 = vmul.f32 %v5872, 0.6931472
    %v5874 = vlog2.pop %v5808
    %v5875 = vmul.f32 %v5874, 0.6931472
    %v5876 = vlog2.pop %v5813
    %v5877 = vmul.f32 %v5876, 0.6931472
    %v5878 = vlog2.pop %v5818
    %v5879 = vmul.f32 %v5878, 0.6931472
    %v5880 = vlog2.pop %v5823
    %v5881 = vmul.f32 %v5880, 0.6931472
    %v5882 = vlog2.pop %v5828
    %v5883 = vmul.f32 %v5882, 0.6931472
    %v5884 = vlog2.pop %v5833
    %v5885 = vmul.f32 %v5884, 0.6931472
    %v5886 = vlog2.pop %v5838
    %v5887 = vmul.f32 %v5886, 0.6931472
    %v5888 = vlog2.pop %v5843
    %v5889 = vmul.f32 %v5888, 0.6931472
    %v5890 = vlog2.pop %v5848
    %v5891 = vmul.f32 %v5890, 0.6931472
    %v5892 = vlog2.pop %v5853
    %v5893 = vmul.f32 %v5892, 0.6931472
    %v5894 = vlog2.pop %v5858
    %v5895 = vmul.f32 %v5894, 0.6931472
    %v5896 = vlog2.pop %v5863
    %v5897 = vmul.f32 %v5896, 0.6931472
    %5898 = vst [vmem:[#allocation8] sm:$0xff] %v5867
    %5899 = vst [vmem:[#allocation8 + $0x8] sm:$0xff] %v5869
    %5900 = vst [vmem:[#allocation8 + $0x10] sm:$0xff] %v5871
    %5901 = vst [vmem:[#allocation8 + $0x18] sm:$0xff] %v5873
    %5902 = vst [vmem:[#allocation8 + $0x20] sm:$0xff] %v5875
    %5903 = vst [vmem:[#allocation8 + $0x28] sm:$0xff] %v5877
    %5904 = vst [vmem:[#allocation8 + $0x30] sm:$0xff] %v5879
    %5905 = vst [vmem:[#allocation8 + $0x38] sm:$0xff] %v5881
    %5906 = vst [vmem:[#allocation8 + $0x40] sm:$0xff] %v5883
    %5907 = vst [vmem:[#allocation8 + $0x48] sm:$0xff] %v5885
    %5908 = vst [vmem:[#allocation8 + $0x50] sm:$0xff] %v5887
    %5909 = vst [vmem:[#allocation8 + $0x58] sm:$0xff] %v5889
    %5910 = vst [vmem:[#allocation8 + $0x60] sm:$0xff] %v5891
    %5911 = vst [vmem:[#allocation8 + $0x68] sm:$0xff] %v5893
    %5912 = vst [vmem:[#allocation8 + $0x70] sm:$0xff] %v5895
    %5913 = vst [vmem:[#allocation8 + $0x78] sm:$0xff] %v5897
    // Predicated region
    $region26: #{tpu_custom_call.1} parent=1 // pred_check
      _
    $region27: #{tpu_custom_call.1} parent=1 // pred_check_branch
      %5915 = sbr.rel (0) target = $region29
    $region28: #{tpu_custom_call.1} parent=1 // pred_region
      %s5917 = ssub.s32 2048, 2048
      %5918 = vsyncadd [#allocation4], %s5917
      %s5919 = sshll.u32 [#allocation8], 4
      %s5920 = int_to_ptr.vmem [resolvable:$true] %s5919
      %5925 = dma.vmem_to_hbm [thread:$0]  %s5920, 2048, %s3, [#allocation4], 128, 128, 8
    $region29: #{tpu_custom_call.1} parent=1 // pred_fallthru
      _
    // Predicated region
    $region30: #{tpu_custom_call.1} parent=1 // pred_check
      _
    $region31: #{tpu_custom_call.1} parent=1 // pred_check_branch
      %5927 = sbr.rel (0) target = $region33
    $region32: #{tpu_custom_call.1} parent=1 // pred_region
      %5928 = dma.done [#allocation4], 2048
    $region33: #{tpu_custom_call.1} parent=1 // pred_fallthru
      _
    %5929 = vsyncpa [#allocation3], 1
    %5930 = vsyncpa [#allocation6], 1
    %5931 = vsyncpa [#allocation4], 1

</llo_original>
